<compile_context>
chip_gen: v6e
topology: v6e:2x2x1
jax: 0.10.0
libtpu: 0.0.40
codegen_flags: <defaults>
</compile_context>

<pallas_src>
import functools

import jax
import jax.numpy as jnp
from jax.experimental import pallas as pl
from jax.experimental.pallas import tpu as pltpu


OMEGA_0 = 30.0
MATMUL_PRECISION = jax.lax.Precision.HIGHEST


def _round_up(x: int, m: int) -> int:
    return ((x + m - 1) // m) * m


def _pick_tile(total: int, cap: int) -> int:
    """Largest multiple of 128 that divides `total` (a 128-multiple) and is <= cap."""
    t = min(cap, total)
    t -= t % 128
    while t > 128:
        if total % t == 0:
            return t
        t -= 128
    return 128


# ----------------------------------------------------------------------------
# Pallas kernel: one (batch-group, pixel-tile) slab per grid step.
# Layout is (channels, pixels): pixels fill the 128-wide lane dim, the tiny
# channel dims (32 / 4) sit on sublanes -> dense sin/VPU work and lane-dense
# stores.  Coordinates are generated in-kernel from the linear pixel index;
# affine transform, pose contribution and omega are all pre-folded.
# ----------------------------------------------------------------------------
def _make_siren_kernel(num_packed, bg, out_ch, w_img, tile, precision):
    wf = float(w_img)

    def kernel(bias0_ref, w0coef_ref, wpack_ref, bpack_ref, o_ref):
        t = pl.program_id(1)
        lane = jax.lax.broadcasted_iota(jnp.int32, (1, tile), 1)
        q = (t * tile + lane).astype(jnp.float32)          # linear pixel index (exact, < 2^22)
        # Exact floor(q / W): the correctly-rounded f32 divide has error < 0.25/W
        # while the distance to the next integer is >= 0.5/W (guarded by the
        # H*W <= 2^22 assert in the wrapper).  One divide per (1, tile) row per
        # grid step -> negligible next to the per-layer sin work.
        rowf = jnp.floor((q + 0.5) / wf)
        colf = q - rowf * wf                               # exact integer-valued f32

        # Layer 0: affine position transform + omega folded into the (hidden, 2)
        # coefficients; pose @ W0_pose + b0 + affine constants folded into the
        # per-image bias.  Position contribution is shared across the batch group.
        a_col = w0coef_ref[:, 0:1]                         # (hidden, 1)
        a_row = w0coef_ref[:, 1:2]                         # (hidden, 1)
        pos_acc = a_col * colf + a_row * rowf              # (hidden, tile)

        # Hoisted weight loads (tiny: (hidden, hidden) each).
        w_hid = [wpack_ref[li] for li in range(num_packed - 1)]
        b_hid = [bpack_ref[li] for li in range(num_packed - 1)]
        w_out = wpack_ref[num_packed - 1, 0:out_ch, :]     # (out_ch, hidden) valid rows
        b_out = bpack_ref[num_packed - 1, 0:out_ch, :]     # (out_ch, 1)

        for g in range(bg):                                # static unroll over batch group
            h = jnp.sin(pos_acc + bias0_ref[g])            # (hidden, tile)
            for li in range(num_packed - 1):               # hidden sine layers (omega folded)
                h = jnp.sin(jnp.dot(w_hid[li], h,
                                    preferred_element_type=jnp.float32,
                                    precision=precision) + b_hid[li])
            h = jnp.dot(w_out, h, preferred_element_type=jnp.float32,
                        precision=precision) + b_out       # final linear, no omega
            o_ref[g] = h.astype(o_ref.dtype)               # (out_ch, tile) lane-dense store

    return kernel


# ----------------------------------------------------------------------------
# SirenFaceMorpher00 forward
#   weights[i]: (c_in, c_out), biases[i]: (1, c_out)  -- PyTorch channel order:
#   input channels 0,1 = position (x, y), channels 2..p+1 = pose.
# ----------------------------------------------------------------------------
def siren_face_morpher_forward(pose, weights, biases, *, image_size, image_channels,
                               tile_pix=8192, omega=OMEGA_0,
                               matmul_precision=MATMUL_PRECISION):
    n, p = pose.shape
    h_img = w_img = image_size
    hw = h_img * w_img

    num_layers = len(weights)
    assert num_layers >= 2, "Siren needs at least one sine layer + the final linear layer"
    hidden = weights[0].shape[1]
    out_ch = weights[-1].shape[1]
    assert out_ch == image_channels
    assert out_ch <= hidden
    assert weights[0].shape[0] == p + 2
    for w in weights[1:]:
        assert w.shape[0] == hidden

    hw_pad = _round_up(hw, 128)
    assert hw_pad <= (1 << 22), "f32 pixel-index coordinate trick requires H*W <= 2^22"

    # ---- fold omega + identity affine_grid + pose into layer-0 parameters ----
    w0 = weights[0].astype(jnp.float32)                    # (p+2, hidden)
    b0 = biases[0].astype(jnp.float32).reshape(-1)         # (hidden,)
    w0x, w0y = w0[0], w0[1]                                # (hidden,)
    a_col = omega * (2.0 / w_img) * w0x
    a_row = omega * (2.0 / h_img) * w0y
    const0 = (1.0 / w_img - 1.0) * w0x + (1.0 / h_img - 1.0) * w0y + b0
    pose_bias = omega * (jnp.dot(pose.astype(jnp.float32), w0[2:],
                                 precision=matmul_precision) + const0[None, :])
    pose_bias = pose_bias[:, :, None]                      # (n, hidden, 1)
    w0coef = jnp.stack([a_col, a_row], axis=1)             # (hidden, 2)

    # ---- pack layers 1..L-1 (transposed; omega folded except into the final) ----
    num_packed = num_layers - 1
    wpack = jnp.zeros((num_packed, hidden, hidden), jnp.float32)
    bpack = jnp.zeros((num_packed, hidden, 1), jnp.float32)
    for li in range(num_packed):
        scale = omega if li < num_packed - 1 else 1.0
        w_t = scale * jnp.transpose(weights[li + 1].astype(jnp.float32))  # (c_out, hidden)
        b_t = scale * jnp.transpose(biases[li + 1].astype(jnp.float32))   # (c_out, 1)
        c = w_t.shape[0]
        wpack = wpack.at[li, :c, :].set(w_t)
        bpack = bpack.at[li, :c, :].set(b_t)

    # ---- batching / pixel tiling ----
    fold_batch = (n * hw_pad <= int(tile_pix)) and (n <= 8)   # tiny configs: fewer grid steps
    bg = n if fold_batch else 1
    n_groups = n // bg

    tile = _pick_tile(hw_pad, min(int(tile_pix), hw_pad))
    if n_groups * (hw_pad // tile) < 2 and hw_pad >= 256:
        tile = _pick_tile(hw_pad, hw_pad // 2)             # keep both v7x TensorCores fed
    num_tiles = hw_pad // tile

    kernel = _make_siren_kernel(num_packed, bg, out_ch, w_img, tile, matmul_precision)

    grid_spec = pltpu.PrefetchScalarGridSpec(
        num_scalar_prefetch=0,
        grid=(n_groups, num_tiles),
        in_specs=[
            pl.BlockSpec((bg, hidden, 1), lambda g, t: (g, 0, 0)),            # folded layer-0 bias
            pl.BlockSpec((hidden, 2), lambda g, t: (0, 0)),                   # folded layer-0 coeffs
            pl.BlockSpec((num_packed, hidden, hidden), lambda g, t: (0, 0, 0)),  # packed weights
            pl.BlockSpec((num_packed, hidden, 1), lambda g, t: (0, 0, 0)),       # packed biases
        ],
        out_specs=pl.BlockSpec((bg, out_ch, tile), lambda g, t: (g, 0, t)),
    )

    out = pl.pallas_call(
        kernel,
        out_shape=jax.ShapeDtypeStruct((n, out_ch, hw_pad), jnp.float32),
        grid_spec=grid_spec,
        compiler_params=pltpu.CompilerParams(
            dimension_semantics=("parallel", "parallel"),
            vmem_limit_bytes=32 * 1024 * 1024,
        ),
    )(pose_bias, w0coef, wpack, bpack)

    if hw_pad != hw:                                      # only if H*W not a multiple of 128
        out = out[:, :, :hw]
    return out.reshape(n, out_ch, h_img, w_img)           # already NCHW -> reshape is free


# ----------------------------------------------------------------------------
# Deterministic SIREN-style parameter init (1x1 convs == dense per-pixel)
# ----------------------------------------------------------------------------
def init_siren_params(key, in_channels, intermediate_channels, out_channels,
                      num_sine_layers, omega=OMEGA_0):
    dims = ([in_channels]
            + [intermediate_channels] * num_sine_layers
            + [out_channels])
    weights, biases = [], []
    for li in range(len(dims) - 1):
        c_in, c_out = dims[li], dims[li + 1]
        key, wk, bk = jax.random.split(key, 3)
        bound = (1.0 / c_in) if li == 0 else ((6.0 / c_in) ** 0.5 / omega)
        weights.append(jax.random.uniform(wk, (c_in, c_out), jnp.float32, -bound, bound))
        biases.append(jax.random.uniform(bk, (1, c_out), jnp.float32, -bound, bound))
    return weights, biases


# ----------------------------------------------------------------------------
# Pure-JAX reference mirroring the original PyTorch module (builds the
# broadcast pose image + affine_grid position + concat + per-pixel MLP).
# ----------------------------------------------------------------------------
def ref_forward(pose, weights, biases, image_size, image_channels, omega=OMEGA_0,
                precision=MATMUL_PRECISION):
    n, p = pose.shape
    h = w = image_size
    xs = (2.0 * jnp.arange(w, dtype=jnp.float32) + 1.0) / w - 1.0
    ys = (2.0 * jnp.arange(h, dtype=jnp.float32) + 1.0) / h - 1.0
    pos = jnp.stack([jnp.broadcast_to(xs[None, :], (h, w)),
                     jnp.broadcast_to(ys[:, None], (h, w))], axis=0)
    pos = jnp.broadcast_to(pos[None], (n, 2, h, w))
    pimg = jnp.broadcast_to(pose[:, :, None, None], (n, p, h, w))
    xin = jnp.concatenate([pos, pimg], axis=1)
    hcur = jnp.transpose(xin, (0, 2, 3, 1)).reshape(n * h * w, p + 2)
    for li, (wmat, bvec) in enumerate(zip(weights, biases)):
        hcur = jnp.dot(hcur, wmat, precision=precision) + bvec
        if li < len(weights) - 1:
            hcur = jnp.sin(omega * hcur)
    return jnp.transpose(hcur.reshape(n, h, w, image_channels), (0, 3, 1, 2))


if __name__ == "__main__":
    # Module-consistent small shapes:
    #   image_size=16, image_channels=4, pose_size=6
    #   siren: in_channels = pose_size + 2 = 8, intermediate = 32,
    #          num_sine_layers = 3, out_channels = 4, use_tanh = False
    image_size = 16
    image_channels = 4
    pose_size = 6
    intermediate_channels = 32
    num_sine_layers = 3
    batch = 2

    key = jax.random.PRNGKey(0)
    key, pose_key, param_key = jax.random.split(key, 3)

    pose = jax.random.uniform(pose_key, (batch, pose_size), jnp.float32)
    weights, biases = init_siren_params(
        param_key,
        in_channels=pose_size + 2,
        intermediate_channels=intermediate_channels,
        out_channels=image_channels,
        num_sine_layers=num_sine_layers,
    )

    fwd = functools.partial(
        siren_face_morpher_forward,
        image_size=image_size,
        image_channels=image_channels,
        tile_pix=8192,
    )

    out = fwd(pose, weights, biases)
    jax.block_until_ready(out)

    assert out.shape == (batch, image_channels, image_size, image_size), out.shape
    assert out.dtype == jnp.float32

    ref = ref_forward(pose, weights, biases, image_size, image_channels)
    err = float(jnp.max(jnp.abs(out - ref)))
    assert jnp.allclose(out, ref, atol=2e-4, rtol=2e-4), f"max abs err {err}"

    print("KERNEL_OK")
</pallas_src>

<mosaic_0001>
module attributes {stable_mosaic.version = 11 : i64} {
  func.func @kernel(%arg0: i32, %arg1: i32, %arg2: memref<2x32x1xf32, #tpu.memory_space<vmem>>, %arg3: memref<32x2xf32, #tpu.memory_space<vmem>>, %arg4: memref<3x32x32xf32, #tpu.memory_space<vmem>>, %arg5: memref<3x32x1xf32, #tpu.memory_space<vmem>>, %arg6: memref<2x4x128xf32, #tpu.memory_space<vmem>>) attributes {dimension_semantics = [#tpu.dimension_semantics<parallel>, #tpu.dimension_semantics<parallel>], iteration_bounds = array<i64: 1, 2>, scalar_prefetch = 0 : i64, scratch_operands = 0 : i64, tpu.core_type = #tpu.core_type<tc>, window_params = [{transform_indices = @transform_0, window_bounds = array<i64: 2, 32, 1>}, {pipeline_mode = #tpu.pipeline_mode<synchronous>, transform_indices = @transform_1, window_bounds = array<i64: 32, 2>}, {pipeline_mode = #tpu.pipeline_mode<synchronous>, transform_indices = @transform_2, window_bounds = array<i64: 3, 32, 32>}, {pipeline_mode = #tpu.pipeline_mode<synchronous>, transform_indices = @transform_3, window_bounds = array<i64: 3, 32, 1>}, {transform_indices = @transform_4, window_bounds = array<i64: 2, 4, 128>}]} {
    %0 = tpu.iota {dimensions = array<i32: 1>} : vector<1x128xi32>
    %c128_i32 = arith.constant 128 : i32
    %1 = arith.muli %arg1, %c128_i32 : i32
    %2 = vector.broadcast %1 : i32 to vector<1x128xi32>
    %3 = arith.addi %2, %0 : vector<1x128xi32>
    %4 = arith.sitofp %3 : vector<1x128xi32> to vector<1x128xf32>
    %cst = arith.constant 5.000000e-01 : f32
    %5 = vector.broadcast %cst : f32 to vector<1x128xf32>
    %6 = arith.addf %4, %5 : vector<1x128xf32>
    %cst_0 = arith.constant 1.600000e+01 : f32
    %7 = vector.broadcast %cst_0 : f32 to vector<1x128xf32>
    %8 = arith.divf %6, %7 : vector<1x128xf32>
    %9 = math.floor %8 : vector<1x128xf32>
    %cst_1 = arith.constant 1.600000e+01 : f32
    %10 = vector.broadcast %cst_1 : f32 to vector<1x128xf32>
    %11 = arith.mulf %9, %10 : vector<1x128xf32>
    %12 = arith.subf %4, %11 : vector<1x128xf32>
    %c0 = arith.constant 0 : index
    %c0_2 = arith.constant 0 : index
    %13 = vector.load %arg3[%c0, %c0_2] : memref<32x2xf32, #tpu.memory_space<vmem>>, vector<32x1xf32>
    %c0_3 = arith.constant 0 : index
    %c1 = arith.constant 1 : index
    %14 = vector.load %arg3[%c0_3, %c1] : memref<32x2xf32, #tpu.memory_space<vmem>>, vector<32x1xf32>
    %15 = vector.broadcast %13 : vector<32x1xf32> to vector<32x128xf32>
    %16 = vector.broadcast %12 : vector<1x128xf32> to vector<32x128xf32>
    %17 = arith.mulf %15, %16 : vector<32x128xf32>
    %18 = vector.broadcast %14 : vector<32x1xf32> to vector<32x128xf32>
    %19 = vector.broadcast %9 : vector<1x128xf32> to vector<32x128xf32>
    %20 = arith.mulf %18, %19 : vector<32x128xf32>
    %21 = arith.addf %17, %20 : vector<32x128xf32>
    %c0_4 = arith.constant 0 : index
    %c0_5 = arith.constant 0 : index
    %c0_6 = arith.constant 0 : index
    %22 = vector.load %arg4[%c0_4, %c0_5, %c0_6] : memref<3x32x32xf32, #tpu.memory_space<vmem>>, vector<1x32x32xf32>
    %23 = vector.shape_cast %22 : vector<1x32x32xf32> to vector<32x32xf32>
    %c1_7 = arith.constant 1 : index
    %c0_8 = arith.constant 0 : index
    %c0_9 = arith.constant 0 : index
    %24 = vector.load %arg4[%c1_7, %c0_8, %c0_9] : memref<3x32x32xf32, #tpu.memory_space<vmem>>, vector<1x32x32xf32>
    %25 = vector.shape_cast %24 : vector<1x32x32xf32> to vector<32x32xf32>
    %c0_10 = arith.constant 0 : index
    %c0_11 = arith.constant 0 : index
    %c0_12 = arith.constant 0 : index
    %26 = vector.load %arg5[%c0_10, %c0_11, %c0_12] : memref<3x32x1xf32, #tpu.memory_space<vmem>>, vector<1x32x1xf32>
    %27 = vector.shape_cast %26 : vector<1x32x1xf32> to vector<32x1xf32>
    %c1_13 = arith.constant 1 : index
    %c0_14 = arith.constant 0 : index
    %c0_15 = arith.constant 0 : index
    %28 = vector.load %arg5[%c1_13, %c0_14, %c0_15] : memref<3x32x1xf32, #tpu.memory_space<vmem>>, vector<1x32x1xf32>
    %29 = vector.shape_cast %28 : vector<1x32x1xf32> to vector<32x1xf32>
    %c2 = arith.constant 2 : index
    %c0_16 = arith.constant 0 : index
    %c0_17 = arith.constant 0 : index
    %30 = vector.load %arg4[%c2, %c0_16, %c0_17] : memref<3x32x32xf32, #tpu.memory_space<vmem>>, vector<1x4x32xf32>
    %31 = vector.shape_cast %30 : vector<1x4x32xf32> to vector<4x32xf32>
    %c2_18 = arith.constant 2 : index
    %c0_19 = arith.constant 0 : index
    %c0_20 = arith.constant 0 : index
    %32 = vector.load %arg5[%c2_18, %c0_19, %c0_20] : memref<3x32x1xf32, #tpu.memory_space<vmem>>, vector<1x4x1xf32>
    %33 = vector.shape_cast %32 : vector<1x4x1xf32> to vector<4x1xf32>
    %c0_21 = arith.constant 0 : index
    %c0_22 = arith.constant 0 : index
    %c0_23 = arith.constant 0 : index
    %34 = vector.load %arg2[%c0_21, %c0_22, %c0_23] : memref<2x32x1xf32, #tpu.memory_space<vmem>>, vector<1x32x1xf32>
    %35 = vector.shape_cast %34 : vector<1x32x1xf32> to vector<32x1xf32>
    %36 = vector.broadcast %35 : vector<32x1xf32> to vector<32x128xf32>
    %37 = arith.addf %21, %36 : vector<32x128xf32>
    %38 = math.sin %37 : vector<32x128xf32>
    %cst_24 = arith.constant dense<0.000000e+00> : vector<32x128xf32>
    %39 = tpu.matmul %23, %38, %cst_24 {dimension_numbers = #tpu.dot_dimension_numbers<[1], [0], [0], [1], [0, 0, 1, 1], [], []>, precision = #tpu.contract_precision<fp32>} : vector<32x32xf32>, vector<32x128xf32>, vector<32x128xf32> -> vector<32x128xf32>
    %40 = vector.broadcast %27 : vector<32x1xf32> to vector<32x128xf32>
    %41 = arith.addf %39, %40 : vector<32x128xf32>
    %42 = math.sin %41 : vector<32x128xf32>
    %cst_25 = arith.constant dense<0.000000e+00> : vector<32x128xf32>
    %43 = tpu.matmul %25, %42, %cst_25 {dimension_numbers = #tpu.dot_dimension_numbers<[1], [0], [0], [1], [0, 0, 1, 1], [], []>, precision = #tpu.contract_precision<fp32>} : vector<32x32xf32>, vector<32x128xf32>, vector<32x128xf32> -> vector<32x128xf32>
    %44 = vector.broadcast %29 : vector<32x1xf32> to vector<32x128xf32>
    %45 = arith.addf %43, %44 : vector<32x128xf32>
    %46 = math.sin %45 : vector<32x128xf32>
    %cst_26 = arith.constant dense<0.000000e+00> : vector<4x128xf32>
    %47 = tpu.matmul %31, %46, %cst_26 {dimension_numbers = #tpu.dot_dimension_numbers<[1], [0], [0], [1], [0, 0, 1, 1], [], []>, precision = #tpu.contract_precision<fp32>} : vector<4x32xf32>, vector<32x128xf32>, vector<4x128xf32> -> vector<4x128xf32>
    %48 = vector.broadcast %33 : vector<4x1xf32> to vector<4x128xf32>
    %49 = arith.addf %47, %48 : vector<4x128xf32>
    %c0_27 = arith.constant 0 : index
    %c0_28 = arith.constant 0 : index
    %c0_29 = arith.constant 0 : index
    %50 = vector.load %arg6[%c0_27, %c0_28, %c0_29] : memref<2x4x128xf32, #tpu.memory_space<vmem>>, vector<1x4x128xf32>
    %51 = vector.shape_cast %50 : vector<1x4x128xf32> to vector<4x128xf32>
    %52 = vector.shape_cast %49 : vector<4x128xf32> to vector<1x4x128xf32>
    tpu.vector_store %arg6[%c0_27, %c0_28, %c0_29], %52 {strides = array<i32>} : memref<2x4x128xf32, #tpu.memory_space<vmem>>, vector<1x4x128xf32>,
    %c1_30 = arith.constant 1 : index
    %c0_31 = arith.constant 0 : index
    %c0_32 = arith.constant 0 : index
    %53 = vector.load %arg2[%c1_30, %c0_31, %c0_32] : memref<2x32x1xf32, #tpu.memory_space<vmem>>, vector<1x32x1xf32>
    %54 = vector.shape_cast %53 : vector<1x32x1xf32> to vector<32x1xf32>
    %55 = vector.broadcast %54 : vector<32x1xf32> to vector<32x128xf32>
    %56 = arith.addf %21, %55 : vector<32x128xf32>
    %57 = math.sin %56 : vector<32x128xf32>
    %cst_33 = arith.constant dense<0.000000e+00> : vector<32x128xf32>
    %58 = tpu.matmul %23, %57, %cst_33 {dimension_numbers = #tpu.dot_dimension_numbers<[1], [0], [0], [1], [0, 0, 1, 1], [], []>, precision = #tpu.contract_precision<fp32>} : vector<32x32xf32>, vector<32x128xf32>, vector<32x128xf32> -> vector<32x128xf32>
    %59 = vector.broadcast %27 : vector<32x1xf32> to vector<32x128xf32>
    %60 = arith.addf %58, %59 : vector<32x128xf32>
    %61 = math.sin %60 : vector<32x128xf32>
    %cst_34 = arith.constant dense<0.000000e+00> : vector<32x128xf32>
    %62 = tpu.matmul %25, %61, %cst_34 {dimension_numbers = #tpu.dot_dimension_numbers<[1], [0], [0], [1], [0, 0, 1, 1], [], []>, precision = #tpu.contract_precision<fp32>} : vector<32x32xf32>, vector<32x128xf32>, vector<32x128xf32> -> vector<32x128xf32>
    %63 = vector.broadcast %29 : vector<32x1xf32> to vector<32x128xf32>
    %64 = arith.addf %62, %63 : vector<32x128xf32>
    %65 = math.sin %64 : vector<32x128xf32>
    %cst_35 = arith.constant dense<0.000000e+00> : vector<4x128xf32>
    %66 = tpu.matmul %31, %65, %cst_35 {dimension_numbers = #tpu.dot_dimension_numbers<[1], [0], [0], [1], [0, 0, 1, 1], [], []>, precision = #tpu.contract_precision<fp32>} : vector<4x32xf32>, vector<32x128xf32>, vector<4x128xf32> -> vector<4x128xf32>
    %67 = vector.broadcast %33 : vector<4x1xf32> to vector<4x128xf32>
    %68 = arith.addf %66, %67 : vector<4x128xf32>
    %c1_36 = arith.constant 1 : index
    %c0_37 = arith.constant 0 : index
    %c0_38 = arith.constant 0 : index
    %69 = vector.load %arg6[%c1_36, %c0_37, %c0_38] : memref<2x4x128xf32, #tpu.memory_space<vmem>>, vector<1x4x128xf32>
    %70 = vector.shape_cast %69 : vector<1x4x128xf32> to vector<4x128xf32>
    %71 = vector.shape_cast %68 : vector<4x128xf32> to vector<1x4x128xf32>
    tpu.vector_store %arg6[%c1_36, %c0_37, %c0_38], %71 {strides = array<i32>} : memref<2x4x128xf32, #tpu.memory_space<vmem>>, vector<1x4x128xf32>,
    return
  }
  func.func @transform_0(%arg0: i32, %arg1: i32) -> (i32, i32, i32) {
    %c0_i32 = arith.constant 0 : i32
    %c0_i32_0 = arith.constant 0 : i32
    %c0_i32_1 = arith.constant 0 : i32
    return %arg0, %c0_i32, %c0_i32_0 : i32, i32, i32
  }
  func.func @transform_1(%arg0: i32, %arg1: i32) -> (i32, i32) {
    %c0_i32 = arith.constant 0 : i32
    %c0_i32_0 = arith.constant 0 : i32
    %c0_i32_1 = arith.constant 0 : i32
    return %c0_i32, %c0_i32_0 : i32, i32
  }
  func.func @transform_2(%arg0: i32, %arg1: i32) -> (i32, i32, i32) {
    %c0_i32 = arith.constant 0 : i32
    %c0_i32_0 = arith.constant 0 : i32
    %c0_i32_1 = arith.constant 0 : i32
    %c0_i32_2 = arith.constant 0 : i32
    return %c0_i32, %c0_i32_0, %c0_i32_1 : i32, i32, i32
  }
  func.func @transform_3(%arg0: i32, %arg1: i32) -> (i32, i32, i32) {
    %c0_i32 = arith.constant 0 : i32
    %c0_i32_0 = arith.constant 0 : i32
    %c0_i32_1 = arith.constant 0 : i32
    %c0_i32_2 = arith.constant 0 : i32
    return %c0_i32, %c0_i32_0, %c0_i32_1 : i32, i32, i32
  }
  func.func @transform_4(%arg0: i32, %arg1: i32) -> (i32, i32, i32) {
    %c0_i32 = arith.constant 0 : i32
    %c0_i32_0 = arith.constant 0 : i32
    return %arg0, %c0_i32, %arg1 : i32, i32, i32
  }
}

</mosaic_0001>

<llo_original>
// kernel: tpu_custom_call.1
$region0: #{tpu_custom_call.1}
  #allocation0 [shape = 'u32[]', space=smem, size = 0x4, offset = 0x4, fixed_abs, tag = 'smem constant byte address 0x4 - core index']
  #allocation1 [shape = 'u32[144,128]{1,0:T(1,128)}', space=vmem, size = 0x12000, scoped, tag = 'internal scratch']
  %s0 = inlined_call_operand.vmem [shape: f32[2,32,1], index: 0, kind: input, shape index: {}]
  %s1 = inlined_call_operand.vmem [shape: f32[32,2], index: 1, kind: input, shape index: {}]
  %s2 = inlined_call_operand.vmem [shape: f32[3,32,32], index: 2, kind: input, shape index: {}]
  %s3 = inlined_call_operand.vmem [shape: f32[3,32,1], index: 3, kind: input, shape index: {}]
  %s4 = inlined_call_operand.hbm [shape: f32[2,4,256], index: 4, kind: output, shape index: {}]
  %s5 = sld [smem:[#allocation0]]
  $region49: #{tpu_custom_call.1} parent=0
    _
  %s7 = ssub.s32 1, %s5
  %s8 = scalar_select 0, %s7, %s5
  $region1: #{tpu_custom_call.1} parent=0
    #allocation2 [shape = 'u8[8192]{0}', space=vmem, size = 0x2000, scoped, tag = 'output window, operand 0']
    #allocation3 [shape = 's32[2]{0}', space=sflag, size = 0x8, scoped, tag = 'scoped memory for tpu_custom_call.1']
    %9 = vsyncpa [#allocation3], 0
    %s10 = scalar_lea.sflag [#allocation3], 1
    %11 = vsyncpa %s10, 0
    loop: start=0, step=1, limit=4
    $region2: #{tpu_custom_call.1} parent=1 // loop_pre_header
      _
    $region3: #{tpu_custom_call.1} parent=1 // loop_header
      %s13 = sphi 0, %s17
      %p14 = scmp.ge.s32.totalorder %s13, 4
      %s20 = sphi 0, %s32
      %s21 = sphi 0, %s28
      %s22 = sphi 0, %s20
      %s23 = sphi 0, %s21
      %s24 = sphi 0, %s22
      %s25 = sphi 0, %s23
      %s35 = sphi 0, %s37
      %s38 = sphi 0, %s35
      %s39 = sphi 0, %s38
      %s55 = sphi 0, %s39
      %s59 = sphi 0, %s59
      %s61 = sphi 0, %s59
      %s62 = sphi 0, %s61
      %s76 = sphi 0, %s62
      %s80 = sphi 0, %s80
      %s82 = sphi 0, %s80
      %s83 = sphi 0, %s82
      %s97 = sphi 0, %s83
      %s101 = sphi 0, %s101
      %s103 = sphi 0, %s101
      %s104 = sphi 0, %s103
      %s118 = sphi 0, %s104
      %s126 = sphi 0, %s128
      %s129 = sphi 0, %s126
      %s130 = sphi 0, %s129
      %s146 = sphi 0, %s130
    $region4: #{tpu_custom_call.1} parent=1 // loop_header_branch
      %16 = sbr.rel (%p14) target = $region8
    $region5: #{tpu_custom_call.1} parent=1 // loop_body
      %s18 = ssub.s32 %s13, 1
      %s19 = ssub.s32 %s13, 2
      %s26 = sadd.s32 1, %s21
      %p27 = scmp.ge.s32.totalorder %s26, 2
      %s28 = scalar_select %p27, 0, %s26
      %s29 = sadd.s32 1, %s20
      %s30 = scalar_select %p27, %s29, %s20
      %p31 = scmp.ge.s32.totalorder %s30, 1
      %s32 = scalar_select %p31, 0, %s30
      %s33 = ssub.s32 %s20, %s32
      %p34 = scmp.eq.s32.totalorder %s33, 0
      %s36 = sadd.s32 %s35, 1
      %s37 = scalar_select %p34, %s35, %s36
      %p40 = pneg %p34
      %p41 = scmp.eq.s32.totalorder %s13, 1
      %p42 = por %p40, %p41
      %p43 = scmp.ne.s32.totalorder %s35, %s38
      %p44 = scmp.eq.s32.totalorder %s13, 0
      %p45 = por %p43, %p44
      %p46 = scmp.ne.s32.totalorder %s35, %s38
      %p47 = scmp.eq.s32.totalorder %s18, 1
      %p48 = por %p46, %p47
      %p49 = scmp.ne.s32.totalorder %s38, %s39
      %p50 = scmp.eq.s32.totalorder %s18, 0
      %p51 = por %p49, %p50
      %p52 = scmp.ne.s32.totalorder %s38, %s39
      %p53 = scmp.eq.s32.totalorder %s19, 1
      %p54 = por %p52, %p53
      %p56 = scmp.ne.s32.totalorder %s39, %s55
      %p57 = scmp.eq.s32.totalorder %s19, 0
      %p58 = por %p56, %p57
      %s60 = sadd.s32 %s59, 1
      %p63 = scmp.eq.s32.totalorder %s13, 1
      %p64 = scmp.ne.s32.totalorder %s59, %s61
      %p65 = scmp.eq.s32.totalorder %s13, 0
      %p66 = por %p64, %p65
      %p67 = scmp.ne.s32.totalorder %s59, %s61
      %p68 = scmp.eq.s32.totalorder %s18, 1
      %p69 = por %p67, %p68
      %p70 = scmp.ne.s32.totalorder %s61, %s62
      %p71 = scmp.eq.s32.totalorder %s18, 0
      %p72 = por %p70, %p71
      %p73 = scmp.ne.s32.totalorder %s61, %s62
      %p74 = scmp.eq.s32.totalorder %s19, 1
      %p75 = por %p73, %p74
      %p77 = scmp.ne.s32.totalorder %s62, %s76
      %p78 = scmp.eq.s32.totalorder %s19, 0
      %p79 = por %p77, %p78
      %s81 = sadd.s32 %s80, 1
      %p84 = scmp.eq.s32.totalorder %s13, 1
      %p85 = scmp.ne.s32.totalorder %s80, %s82
      %p86 = scmp.eq.s32.totalorder %s13, 0
      %p87 = por %p85, %p86
      %p88 = scmp.ne.s32.totalorder %s80, %s82
      %p89 = scmp.eq.s32.totalorder %s18, 1
      %p90 = por %p88, %p89
      %p91 = scmp.ne.s32.totalorder %s82, %s83
      %p92 = scmp.eq.s32.totalorder %s18, 0
      %p93 = por %p91, %p92
      %p94 = scmp.ne.s32.totalorder %s82, %s83
      %p95 = scmp.eq.s32.totalorder %s19, 1
      %p96 = por %p94, %p95
      %p98 = scmp.ne.s32.totalorder %s83, %s97
      %p99 = scmp.eq.s32.totalorder %s19, 0
      %p100 = por %p98, %p99
      %s102 = sadd.s32 %s101, 1
      %p105 = scmp.eq.s32.totalorder %s13, 1
      %p106 = scmp.ne.s32.totalorder %s101, %s103
      %p107 = scmp.eq.s32.totalorder %s13, 0
      %p108 = por %p106, %p107
      %p109 = scmp.ne.s32.totalorder %s101, %s103
      %p110 = scmp.eq.s32.totalorder %s18, 1
      %p111 = por %p109, %p110
      %p112 = scmp.ne.s32.totalorder %s103, %s104
      %p113 = scmp.eq.s32.totalorder %s18, 0
      %p114 = por %p112, %p113
      %p115 = scmp.ne.s32.totalorder %s103, %s104
      %p116 = scmp.eq.s32.totalorder %s19, 1
      %p117 = por %p115, %p116
      %p119 = scmp.ne.s32.totalorder %s104, %s118
      %p120 = scmp.eq.s32.totalorder %s19, 0
      %p121 = por %p119, %p120
      %s122 = ssub.s32 %s20, %s32
      %s123 = ssub.s32 %s21, %s28
      %s124 = sor.u32 %s122, %s123
      %p125 = scmp.eq.s32.totalorder %s124, 0
      %s127 = sadd.s32 %s126, 1
      %s128 = scalar_select %p125, %s126, %s127
      %p131 = pneg %p125
      %p132 = scmp.eq.s32.totalorder %s13, 1
      %p133 = por %p131, %p132
      %p134 = scmp.ne.s32.totalorder %s126, %s129
      %p135 = scmp.eq.s32.totalorder %s13, 0
      %p136 = por %p134, %p135
      %p137 = scmp.ne.s32.totalorder %s126, %s129
      %p138 = scmp.eq.s32.totalorder %s18, 1
      %p139 = por %p137, %p138
      %p140 = scmp.ne.s32.totalorder %s129, %s130
      %p141 = scmp.eq.s32.totalorder %s18, 0
      %p142 = por %p140, %p141
      %p143 = scmp.ne.s32.totalorder %s129, %s130
      %p144 = scmp.eq.s32.totalorder %s19, 1
      %p145 = por %p143, %p144
      %p147 = scmp.ne.s32.totalorder %s130, %s146
      %p148 = scmp.eq.s32.totalorder %s19, 0
      %p149 = por %p147, %p148
      %p150 = scmp.le.s32.totalorder 1, %s13
      %p151 = scmp.lt.s32.totalorder %s13, 3
      %p152 = pnand %p150, %p151
      %p153 = pneg %p152
      // Predicated region
      $region9: #{tpu_custom_call.1} parent=5 // pred_check
        _
      $region10: #{tpu_custom_call.1} parent=5 // pred_check_branch
        %155 = sbr.rel (%p152) target = $region12
      $region11: #{tpu_custom_call.1} parent=5 // pred_region
        %s156 = ssub.s32 %s13, 1
        // Predicated region
        $region13: #{tpu_custom_call.1} parent=11 // pred_check
          %p157 = pneg %p51
        $region14: #{tpu_custom_call.1} parent=11 // pred_check_branch
          %159 = sbr.rel (%p157) target = $region16
        $region15: #{tpu_custom_call.1} parent=11 // pred_region
          %s160 = smul.u32 2, %s22
          %p161 = scmp.lt.s32.totalorder %s160, 1
          %s162 = scalar_select %p161, %s160, 1
          %s163 = smul.addr %s162, 4
          %s164 = smul.addr %s163, 8
          %s165 = scalar_lea.vmem %s0, %s164
          %s166 = smul.u32 2, %s22
        $region16: #{tpu_custom_call.1} parent=11 // pred_fallthru
          _
        // Predicated region
        $region17: #{tpu_custom_call.1} parent=11 // pred_check
          %p167 = pneg %p72
        $region18: #{tpu_custom_call.1} parent=11 // pred_check_branch
          %169 = sbr.rel (%p167) target = $region20
        $region19: #{tpu_custom_call.1} parent=11 // pred_region
          _
        $region20: #{tpu_custom_call.1} parent=11 // pred_fallthru
          _
        // Predicated region
        $region21: #{tpu_custom_call.1} parent=11 // pred_check
          %p170 = pneg %p93
        $region22: #{tpu_custom_call.1} parent=11 // pred_check_branch
          %172 = sbr.rel (%p170) target = $region24
        $region23: #{tpu_custom_call.1} parent=11 // pred_region
          _
        $region24: #{tpu_custom_call.1} parent=11 // pred_fallthru
          _
        // Predicated region
        $region25: #{tpu_custom_call.1} parent=11 // pred_check
          %p173 = pneg %p114
        $region26: #{tpu_custom_call.1} parent=11 // pred_check_branch
          %175 = sbr.rel (%p173) target = $region28
        $region27: #{tpu_custom_call.1} parent=11 // pred_region
          _
        $region28: #{tpu_custom_call.1} parent=11 // pred_fallthru
          _
      $region12: #{tpu_custom_call.1} parent=5 // pred_fallthru
        _
      %p176 = scmp.lt.s32.totalorder %s13, 2
      // Predicated region
      $region29: #{tpu_custom_call.1} parent=5 // pred_check
        %p177 = pneg %p176
      $region30: #{tpu_custom_call.1} parent=5 // pred_check_branch
        %179 = sbr.rel (%p177) target = $region32
      $region31: #{tpu_custom_call.1} parent=5 // pred_region
        _
      $region32: #{tpu_custom_call.1} parent=5 // pred_fallthru
        _
      %p180 = scmp.le.s32.totalorder 1, %s13
      %p181 = scmp.lt.s32.totalorder %s13, 3
      %p182 = pnand %p180, %p181
      %p183 = pneg %p182
      // Predicated region
      $region33: #{tpu_custom_call.1} parent=5 // pred_check
        _
      $region34: #{tpu_custom_call.1} parent=5 // pred_check_branch
        %185 = sbr.rel (%p182) target = $region36
      $region35: #{tpu_custom_call.1} parent=5 // pred_region
        %s186 = ssub.s32 %s13, 1
        %s187 = smul.u32 2, %s22
        %p188 = scmp.lt.s32.totalorder %s187, 1
        %s189 = scalar_select %p188, %s187, 1
        %s190 = smul.addr %s189, 4
        %s191 = smul.addr %s190, 8
        %s192 = scalar_lea.vmem %s0, %s191
        %p193 = pneg %p51
        %p194 = pneg %p48
        %p195 = pneg %p72
        %p196 = pneg %p69
        %p197 = pneg %p93
        %p198 = pneg %p90
        %p199 = pneg %p114
        %p200 = pneg %p111
        %p201 = pneg %p142
        %p202 = pneg %p139
        %s203 = sand.u32 %s129, 1
        %s204 = scalar_lea.sflag [#allocation3], %s203
        %s205 = sand.u32 %s129, 1
        %s206 = smul.addr %s205, 8
        %s207 = scalar_lea.vmem [#allocation2], %s206
        %s208 = smul.u32 2, %s22
        %p209 = scmp.lt.s32.totalorder %s208, 1
        %s210 = scalar_select %p209, %s208, 1
        %s211 = smul.addr %s210, 4
        %s212 = smul.addr %s211, 8
        %s213 = scalar_lea.vmem %s0, %s212
        %s214 = smul.u32 2, %s22
        %s215 = smul.u32 2, %s22
        %v216 = vlaneseq
        %v217 = vand.u32 %v216, 127
        %s218 = smul.u32 %s23, 128
        %v219 = vstv %s218
        %v220 = vadd.s32 %v219, %v217
        %v221 = vcvt.s32.f32 %v220
        %v222 = vadd.f32 %v221, 0.5
        %v223 = vrcp.pop 16.0
        %v224 = vmul.f32 %v222, %v223
        %v225 = vfloor.f32 %v224
        %v226 = vmul.f32 %v225, 16.0
        %v227 = vsub.f32 %v221, %v226
        %v228 = vld [vmem:[%s1] sm:$0xff]
        %v229 = vld [vmem:[%s1 + $0x8] sm:$0xff]
        %v230 = vld [vmem:[%s1 + $0x10] sm:$0xff]
        %v231 = vld [vmem:[%s1 + $0x18] sm:$0xff]
        %233 = vset.pattern.permute.xlu0 0
        %234 = vperm.xlu0 %233, %v228
        %v235 = vpop.permute.xlu0 %234
        %238 = vset.pattern.permute.xlu0 0
        %239 = vperm.xlu0 %238, %v229
        %v240 = vpop.permute.xlu0 %239
        %243 = vset.pattern.permute.xlu0 0
        %244 = vperm.xlu0 %243, %v230
        %v245 = vpop.permute.xlu0 %244
        %248 = vset.pattern.permute.xlu0 0
        %249 = vperm.xlu0 %248, %v231
        %v250 = vpop.permute.xlu0 %249
        %v252 = vmul.f32 %v235, %v227
        %v253 = vmul.f32 %v240, %v227
        %v254 = vmul.f32 %v245, %v227
        %v255 = vmul.f32 %v250, %v227
        %256 = vset.pattern.permute.xlu0 1
        %257 = vperm.xlu0 %256, %v228
        %v258 = vpop.permute.xlu0 %257
        %260 = vset.pattern.permute.xlu0 1
        %261 = vperm.xlu0 %260, %v229
        %v262 = vpop.permute.xlu0 %261
        %264 = vset.pattern.permute.xlu0 1
        %265 = vperm.xlu0 %264, %v230
        %v266 = vpop.permute.xlu0 %265
        %268 = vset.pattern.permute.xlu0 1
        %269 = vperm.xlu0 %268, %v231
        %v270 = vpop.permute.xlu0 %269
        %v272 = vmul.f32 %v258, %v225
        %v273 = vmul.f32 %v262, %v225
        %v274 = vmul.f32 %v266, %v225
        %v275 = vmul.f32 %v270, %v225
        %v276 = vadd.f32 %v252, %v272
        %v277 = vadd.f32 %v253, %v273
        %v278 = vadd.f32 %v254, %v274
        %v279 = vadd.f32 %v255, %v275
        %v280 = vld [vmem:[%s2] sm:$0xff]
        %v281 = vld [vmem:[%s2 + $0x8] sm:$0xff]
        %v282 = vld [vmem:[%s2 + $0x10] sm:$0xff]
        %v283 = vld [vmem:[%s2 + $0x18] sm:$0xff]
        %s284 = scalar_lea.vmem %s2, 32
        %v285 = vld [vmem:[%s284] sm:$0xff]
        %v286 = vld [vmem:[%s284 + $0x8] sm:$0xff]
        %v287 = vld [vmem:[%s284 + $0x10] sm:$0xff]
        %v288 = vld [vmem:[%s284 + $0x18] sm:$0xff]
        %v289 = vld [vmem:[%s3] sm:$0xff]
        %v290 = vld [vmem:[%s3 + $0x8] sm:$0xff]
        %v291 = vld [vmem:[%s3 + $0x10] sm:$0xff]
        %v292 = vld [vmem:[%s3 + $0x18] sm:$0xff]
        %s293 = scalar_lea.vmem %s3, 32
        %v294 = vld [vmem:[%s293] sm:$0xff]
        %v295 = vld [vmem:[%s293 + $0x8] sm:$0xff]
        %v296 = vld [vmem:[%s293 + $0x10] sm:$0xff]
        %v297 = vld [vmem:[%s293 + $0x18] sm:$0xff]
        %s298 = scalar_lea.vmem %s2, 64
        %v299 = vld [vmem:[%s298] sm:$0xf]
        %s300 = scalar_lea.vmem %s3, 64
        %v301 = vld [vmem:[%s300] sm:$0xf]
        %v302 = vld [vmem:[%s213] sm:$0xff]
        %v303 = vld [vmem:[%s213 + $0x8] sm:$0xff]
        %v304 = vld [vmem:[%s213 + $0x10] sm:$0xff]
        %v305 = vld [vmem:[%s213 + $0x18] sm:$0xff]
        %307 = vset.pattern.permute.xlu0 0
        %308 = vperm.xlu0 %307, %v302
        %v309 = vpop.permute.xlu0 %308
        %312 = vset.pattern.permute.xlu0 0
        %313 = vperm.xlu0 %312, %v303
        %v314 = vpop.permute.xlu0 %313
        %317 = vset.pattern.permute.xlu0 0
        %318 = vperm.xlu0 %317, %v304
        %v319 = vpop.permute.xlu0 %318
        %322 = vset.pattern.permute.xlu0 0
        %323 = vperm.xlu0 %322, %v305
        %v324 = vpop.permute.xlu0 %323
        %v326 = vadd.f32 %v276, %v309
        %v327 = vadd.f32 %v277, %v314
        %v328 = vadd.f32 %v278, %v319
        %v329 = vadd.f32 %v279, %v324
        %v330 = vand.u32 2147483647, %v326
        %vm331 = vcmp.le.f32.partialorder %v330, 0.7853982
        %vm332 = vcmp.lt.s32.totalorder %v326, 0
        %v333 = vand.u32 %v326, 2139095040
        %v334 = vshrl.u32 %v333, 23
        %v335 = vsub.s32 %v334, 127
        %v336 = vand.u32 2147483647, %v326
        %v337 = vand.u32 %v336, 8388607
        %v338 = vor.u32 %v337, 8388608
        %v339 = vsub.s32 0, %v338
        %v340 = vadd.s32 %v335, 1
        %vm341 = vcmp.gt.s32.totalorder %v340, 0
        %v342 = vsel %vm341, %v340, 0
        %v343 = vshrl.u32 %v342, 5
        %v344 = vand.u32 %v342, 31
        %v345 = vsub.s32 32, %v344
        %v346 = vshrl.u32 683565275, %v345
        %v347 = vshll.u32 683565275, %v344
        %v348 = vshrl.u32 2475754826, %v345
        %v349 = vor.u32 %v347, %v348
        %v350 = vshll.u32 2475754826, %v344
        %v351 = vshrl.u32 2131351028, %v345
        %v352 = vor.u32 %v350, %v351
        %v353 = vshll.u32 2131351028, %v344
        %v354 = vshrl.u32 2102212464, %v345
        %v355 = vor.u32 %v353, %v354
        %v356 = vshll.u32 2102212464, %v344
        %v357 = vshrl.u32 920167782, %v345
        %v358 = vor.u32 %v356, %v357
        %v359 = vshll.u32 920167782, %v344
        %v360 = vshrl.u32 1326507024, %v345
        %v361 = vor.u32 %v359, %v360
        %vm362 = vcmp.lt.s32.totalorder %v343, 1
        %vm363 = vcmp.lt.s32.totalorder %v343, 2
        %vm364 = vcmp.lt.s32.totalorder %v343, 3
        %vm365 = vcmp.lt.s32.totalorder %v343, 4
        %v366 = vsel %vm362, %v346, %v349
        %v367 = vsel %vm365, %v355, 2102212464
        %v368 = vsel %vm364, %v352, %v367
        %v369 = vsel %vm363, %v366, %v368
        %v370 = vsel %vm362, %v349, %v352
        %v371 = vsel %vm365, %v358, 920167782
        %v372 = vsel %vm364, %v355, %v371
        %v373 = vsel %vm363, %v370, %v372
        %v374 = vsel %vm362, %v352, %v355
        %v375 = vsel %vm365, %v361, 1326507024
        %v376 = vsel %vm364, %v358, %v375
        %v377 = vsel %vm363, %v374, %v376
        %v378 = vshll.u32 %v338, 8
        %v379 = vmul.u32.u64.compose %v378, %v377
        %v380 = vextract.low.u32 %v379
        %v381 = vextract.high.u32 %v379
        %v382 = vmul.u32.u64.compose %v378, %v373
        %v383 = vextract.low.u32 %v382
        %v384 = vextract.high.u32 %v382
        %v385 = vmul.u32 %v378, %v369
        %v386 = vadd.s32 %v381, %v383
        %vm387 = vc.u32 %v381, %v383
        %v388 = vadd.s32 %v384, 1
        %v389 = vsel %vm387, %v388, %v384
        %v390 = vadd.s32 %v385, %v389
        %v391 = vadd.s32 %v390, 536870912
        %v392 = vshrl.u32 %v391, 30
        %v393 = vshll.u32 %v392, 30
        %v394 = vsub.s32 %v390, %v393
        %vm395 = vcmp.lt.s32.totalorder %v394, 0
        %v396 = vsub.s32 0, %v394
        %v397 = vsel %vm395, %v396, %v394
        %v398 = vclz %v397
        %v399 = vsub.s32 %v398, 2
        %vm400 = vcmp.gt.s32.totalorder 0, %v399
        %v401 = vsel %vm400, 0, %v399
        %v402 = vsub.s32 32, %v401
        %v403 = vshll.u32 %v394, %v401
        %v404 = vshrl.u32 %v386, %v402
        %v405 = vor.u32 %v403, %v404
        %v406 = vsub.s32 4294967266, %v401
        %v407 = vadd.s32 %v406, 127
        %v408 = vshll.u32 %v407, 23
        %v409 = vor.u32 4788187, %v408
        %v410 = vand.u32 2147483647, %v409
        %v412 = vcvt.s32.f32 %v405
        %v413 = vmul.f32 %v412, %v410
        %v414 = vxor.u32 %v413, 2147483648
        %v415 = vsel %vm332, %v414, %v413
        %v416 = vsub.s32 4, %v392
        %v417 = vsel %vm332, %v416, %v392
        %v418 = vsel %vm331, %v326, %v415
        %v419 = vsel %vm331, 0, %v417
        %v420 = vcosq.f32.pop %v418
        %v421 = vsinq.f32.pop %v418
        %vm422 = vweird.f32 %v326
        %v423 = vadd.s32 %v419, 3
        %v424 = vand.u32 %v423, 3
        %vm425 = vcmp.lt.s32.totalorder %v424, 2
        %vm426 = vcmp.eq.s32.totalorder %v424, 0
        %v427 = vxor.u32 %v421, 2147483648
        %v428 = vsel %vm426, %v420, %v427
        %vm429 = vcmp.eq.s32.totalorder %v424, 2
        %v430 = vxor.u32 %v420, 2147483648
        %v431 = vsel %vm429, %v430, %v421
        %v432 = vsel %vm425, %v428, %v431
        %v433 = vsel %vm422, nan, %v432
        %v434 = vand.u32 2147483647, %v327
        %vm435 = vcmp.le.f32.partialorder %v434, 0.7853982
        %vm436 = vcmp.lt.s32.totalorder %v327, 0
        %v437 = vand.u32 %v327, 2139095040
        %v438 = vshrl.u32 %v437, 23
        %v439 = vsub.s32 %v438, 127
        %v440 = vand.u32 2147483647, %v327
        %v441 = vand.u32 %v440, 8388607
        %v442 = vor.u32 %v441, 8388608
        %v443 = vsub.s32 0, %v442
        %v444 = vadd.s32 %v439, 1
        %vm445 = vcmp.gt.s32.totalorder %v444, 0
        %v446 = vsel %vm445, %v444, 0
        %v447 = vshrl.u32 %v446, 5
        %v448 = vand.u32 %v446, 31
        %v449 = vsub.s32 32, %v448
        %v450 = vshrl.u32 683565275, %v449
        %v451 = vshll.u32 683565275, %v448
        %v452 = vshrl.u32 2475754826, %v449
        %v453 = vor.u32 %v451, %v452
        %v454 = vshll.u32 2475754826, %v448
        %v455 = vshrl.u32 2131351028, %v449
        %v456 = vor.u32 %v454, %v455
        %v457 = vshll.u32 2131351028, %v448
        %v458 = vshrl.u32 2102212464, %v449
        %v459 = vor.u32 %v457, %v458
        %v460 = vshll.u32 2102212464, %v448
        %v461 = vshrl.u32 920167782, %v449
        %v462 = vor.u32 %v460, %v461
        %v463 = vshll.u32 920167782, %v448
        %v464 = vshrl.u32 1326507024, %v449
        %v465 = vor.u32 %v463, %v464
        %vm466 = vcmp.lt.s32.totalorder %v447, 1
        %vm467 = vcmp.lt.s32.totalorder %v447, 2
        %vm468 = vcmp.lt.s32.totalorder %v447, 3
        %vm469 = vcmp.lt.s32.totalorder %v447, 4
        %v470 = vsel %vm466, %v450, %v453
        %v471 = vsel %vm469, %v459, 2102212464
        %v472 = vsel %vm468, %v456, %v471
        %v473 = vsel %vm467, %v470, %v472
        %v474 = vsel %vm466, %v453, %v456
        %v475 = vsel %vm469, %v462, 920167782
        %v476 = vsel %vm468, %v459, %v475
        %v477 = vsel %vm467, %v474, %v476
        %v478 = vsel %vm466, %v456, %v459
        %v479 = vsel %vm469, %v465, 1326507024
        %v480 = vsel %vm468, %v462, %v479
        %v481 = vsel %vm467, %v478, %v480
        %v482 = vshll.u32 %v442, 8
        %v483 = vmul.u32.u64.compose %v482, %v481
        %v484 = vextract.low.u32 %v483
        %v485 = vextract.high.u32 %v483
        %v486 = vmul.u32.u64.compose %v482, %v477
        %v487 = vextract.low.u32 %v486
        %v488 = vextract.high.u32 %v486
        %v489 = vmul.u32 %v482, %v473
        %v490 = vadd.s32 %v485, %v487
        %vm491 = vc.u32 %v485, %v487
        %v492 = vadd.s32 %v488, 1
        %v493 = vsel %vm491, %v492, %v488
        %v494 = vadd.s32 %v489, %v493
        %v495 = vadd.s32 %v494, 536870912
        %v496 = vshrl.u32 %v495, 30
        %v497 = vshll.u32 %v496, 30
        %v498 = vsub.s32 %v494, %v497
        %vm499 = vcmp.lt.s32.totalorder %v498, 0
        %v500 = vsub.s32 0, %v498
        %v501 = vsel %vm499, %v500, %v498
        %v502 = vclz %v501
        %v503 = vsub.s32 %v502, 2
        %vm504 = vcmp.gt.s32.totalorder 0, %v503
        %v505 = vsel %vm504, 0, %v503
        %v506 = vsub.s32 32, %v505
        %v507 = vshll.u32 %v498, %v505
        %v508 = vshrl.u32 %v490, %v506
        %v509 = vor.u32 %v507, %v508
        %v510 = vsub.s32 4294967266, %v505
        %v511 = vadd.s32 %v510, 127
        %v512 = vshll.u32 %v511, 23
        %v513 = vor.u32 4788187, %v512
        %v514 = vand.u32 2147483647, %v513
        %v516 = vcvt.s32.f32 %v509
        %v517 = vmul.f32 %v516, %v514
        %v518 = vxor.u32 %v517, 2147483648
        %v519 = vsel %vm436, %v518, %v517
        %v520 = vsub.s32 4, %v496
        %v521 = vsel %vm436, %v520, %v496
        %v522 = vsel %vm435, %v327, %v519
        %v523 = vsel %vm435, 0, %v521
        %v524 = vcosq.f32.pop %v522
        %v525 = vsinq.f32.pop %v522
        %vm526 = vweird.f32 %v327
        %v527 = vadd.s32 %v523, 3
        %v528 = vand.u32 %v527, 3
        %vm529 = vcmp.lt.s32.totalorder %v528, 2
        %vm530 = vcmp.eq.s32.totalorder %v528, 0
        %v531 = vxor.u32 %v525, 2147483648
        %v532 = vsel %vm530, %v524, %v531
        %vm533 = vcmp.eq.s32.totalorder %v528, 2
        %v534 = vxor.u32 %v524, 2147483648
        %v535 = vsel %vm533, %v534, %v525
        %v536 = vsel %vm529, %v532, %v535
        %v537 = vsel %vm526, nan, %v536
        %v538 = vand.u32 2147483647, %v328
        %vm539 = vcmp.le.f32.partialorder %v538, 0.7853982
        %vm540 = vcmp.lt.s32.totalorder %v328, 0
        %v541 = vand.u32 %v328, 2139095040
        %v542 = vshrl.u32 %v541, 23
        %v543 = vsub.s32 %v542, 127
        %v544 = vand.u32 2147483647, %v328
        %v545 = vand.u32 %v544, 8388607
        %v546 = vor.u32 %v545, 8388608
        %v547 = vsub.s32 0, %v546
        %v548 = vadd.s32 %v543, 1
        %vm549 = vcmp.gt.s32.totalorder %v548, 0
        %v550 = vsel %vm549, %v548, 0
        %v551 = vshrl.u32 %v550, 5
        %v552 = vand.u32 %v550, 31
        %v553 = vsub.s32 32, %v552
        %v554 = vshrl.u32 683565275, %v553
        %v555 = vshll.u32 683565275, %v552
        %v556 = vshrl.u32 2475754826, %v553
        %v557 = vor.u32 %v555, %v556
        %v558 = vshll.u32 2475754826, %v552
        %v559 = vshrl.u32 2131351028, %v553
        %v560 = vor.u32 %v558, %v559
        %v561 = vshll.u32 2131351028, %v552
        %v562 = vshrl.u32 2102212464, %v553
        %v563 = vor.u32 %v561, %v562
        %v564 = vshll.u32 2102212464, %v552
        %v565 = vshrl.u32 920167782, %v553
        %v566 = vor.u32 %v564, %v565
        %v567 = vshll.u32 920167782, %v552
        %v568 = vshrl.u32 1326507024, %v553
        %v569 = vor.u32 %v567, %v568
        %vm570 = vcmp.lt.s32.totalorder %v551, 1
        %vm571 = vcmp.lt.s32.totalorder %v551, 2
        %vm572 = vcmp.lt.s32.totalorder %v551, 3
        %vm573 = vcmp.lt.s32.totalorder %v551, 4
        %v574 = vsel %vm570, %v554, %v557
        %v575 = vsel %vm573, %v563, 2102212464
        %v576 = vsel %vm572, %v560, %v575
        %v577 = vsel %vm571, %v574, %v576
        %v578 = vsel %vm570, %v557, %v560
        %v579 = vsel %vm573, %v566, 920167782
        %v580 = vsel %vm572, %v563, %v579
        %v581 = vsel %vm571, %v578, %v580
        %v582 = vsel %vm570, %v560, %v563
        %v583 = vsel %vm573, %v569, 1326507024
        %v584 = vsel %vm572, %v566, %v583
        %v585 = vsel %vm571, %v582, %v584
        %v586 = vshll.u32 %v546, 8
        %v587 = vmul.u32.u64.compose %v586, %v585
        %v588 = vextract.low.u32 %v587
        %v589 = vextract.high.u32 %v587
        %v590 = vmul.u32.u64.compose %v586, %v581
        %v591 = vextract.low.u32 %v590
        %v592 = vextract.high.u32 %v590
        %v593 = vmul.u32 %v586, %v577
        %v594 = vadd.s32 %v589, %v591
        %vm595 = vc.u32 %v589, %v591
        %v596 = vadd.s32 %v592, 1
        %v597 = vsel %vm595, %v596, %v592
        %v598 = vadd.s32 %v593, %v597
        %v599 = vadd.s32 %v598, 536870912
        %v600 = vshrl.u32 %v599, 30
        %v601 = vshll.u32 %v600, 30
        %v602 = vsub.s32 %v598, %v601
        %vm603 = vcmp.lt.s32.totalorder %v602, 0
        %v604 = vsub.s32 0, %v602
        %v605 = vsel %vm603, %v604, %v602
        %v606 = vclz %v605
        %v607 = vsub.s32 %v606, 2
        %vm608 = vcmp.gt.s32.totalorder 0, %v607
        %v609 = vsel %vm608, 0, %v607
        %v610 = vsub.s32 32, %v609
        %v611 = vshll.u32 %v602, %v609
        %v612 = vshrl.u32 %v594, %v610
        %v613 = vor.u32 %v611, %v612
        %v614 = vsub.s32 4294967266, %v609
        %v615 = vadd.s32 %v614, 127
        %v616 = vshll.u32 %v615, 23
        %v617 = vor.u32 4788187, %v616
        %v618 = vand.u32 2147483647, %v617
        %v620 = vcvt.s32.f32 %v613
        %v621 = vmul.f32 %v620, %v618
        %v622 = vxor.u32 %v621, 2147483648
        %v623 = vsel %vm540, %v622, %v621
        %v624 = vsub.s32 4, %v600
        %v625 = vsel %vm540, %v624, %v600
        %v626 = vsel %vm539, %v328, %v623
        %v627 = vsel %vm539, 0, %v625
        %v628 = vcosq.f32.pop %v626
        %v629 = vsinq.f32.pop %v626
        %vm630 = vweird.f32 %v328
        %v631 = vadd.s32 %v627, 3
        %v632 = vand.u32 %v631, 3
        %vm633 = vcmp.lt.s32.totalorder %v632, 2
        %vm634 = vcmp.eq.s32.totalorder %v632, 0
        %v635 = vxor.u32 %v629, 2147483648
        %v636 = vsel %vm634, %v628, %v635
        %vm637 = vcmp.eq.s32.totalorder %v632, 2
        %v638 = vxor.u32 %v628, 2147483648
        %v639 = vsel %vm637, %v638, %v629
        %v640 = vsel %vm633, %v636, %v639
        %v641 = vsel %vm630, nan, %v640
        %v642 = vand.u32 2147483647, %v329
        %vm643 = vcmp.le.f32.partialorder %v642, 0.7853982
        %vm644 = vcmp.lt.s32.totalorder %v329, 0
        %v645 = vand.u32 %v329, 2139095040
        %v646 = vshrl.u32 %v645, 23
        %v647 = vsub.s32 %v646, 127
        %v648 = vand.u32 2147483647, %v329
        %v649 = vand.u32 %v648, 8388607
        %v650 = vor.u32 %v649, 8388608
        %v651 = vsub.s32 0, %v650
        %v652 = vadd.s32 %v647, 1
        %vm653 = vcmp.gt.s32.totalorder %v652, 0
        %v654 = vsel %vm653, %v652, 0
        %v655 = vshrl.u32 %v654, 5
        %v656 = vand.u32 %v654, 31
        %v657 = vsub.s32 32, %v656
        %v658 = vshrl.u32 683565275, %v657
        %v659 = vshll.u32 683565275, %v656
        %v660 = vshrl.u32 2475754826, %v657
        %v661 = vor.u32 %v659, %v660
        %v662 = vshll.u32 2475754826, %v656
        %v663 = vshrl.u32 2131351028, %v657
        %v664 = vor.u32 %v662, %v663
        %v665 = vshll.u32 2131351028, %v656
        %v666 = vshrl.u32 2102212464, %v657
        %v667 = vor.u32 %v665, %v666
        %v668 = vshll.u32 2102212464, %v656
        %v669 = vshrl.u32 920167782, %v657
        %v670 = vor.u32 %v668, %v669
        %v671 = vshll.u32 920167782, %v656
        %v672 = vshrl.u32 1326507024, %v657
        %v673 = vor.u32 %v671, %v672
        %vm674 = vcmp.lt.s32.totalorder %v655, 1
        %vm675 = vcmp.lt.s32.totalorder %v655, 2
        %vm676 = vcmp.lt.s32.totalorder %v655, 3
        %vm677 = vcmp.lt.s32.totalorder %v655, 4
        %v678 = vsel %vm674, %v658, %v661
        %v679 = vsel %vm677, %v667, 2102212464
        %v680 = vsel %vm676, %v664, %v679
        %v681 = vsel %vm675, %v678, %v680
        %v682 = vsel %vm674, %v661, %v664
        %v683 = vsel %vm677, %v670, 920167782
        %v684 = vsel %vm676, %v667, %v683
        %v685 = vsel %vm675, %v682, %v684
        %v686 = vsel %vm674, %v664, %v667
        %v687 = vsel %vm677, %v673, 1326507024
        %v688 = vsel %vm676, %v670, %v687
        %v689 = vsel %vm675, %v686, %v688
        %v690 = vshll.u32 %v650, 8
        %v691 = vmul.u32.u64.compose %v690, %v689
        %v692 = vextract.low.u32 %v691
        %v693 = vextract.high.u32 %v691
        %v694 = vmul.u32.u64.compose %v690, %v685
        %v695 = vextract.low.u32 %v694
        %v696 = vextract.high.u32 %v694
        %v697 = vmul.u32 %v690, %v681
        %v698 = vadd.s32 %v693, %v695
        %vm699 = vc.u32 %v693, %v695
        %v700 = vadd.s32 %v696, 1
        %v701 = vsel %vm699, %v700, %v696
        %v702 = vadd.s32 %v697, %v701
        %v703 = vadd.s32 %v702, 536870912
        %v704 = vshrl.u32 %v703, 30
        %v705 = vshll.u32 %v704, 30
        %v706 = vsub.s32 %v702, %v705
        %vm707 = vcmp.lt.s32.totalorder %v706, 0
        %v708 = vsub.s32 0, %v706
        %v709 = vsel %vm707, %v708, %v706
        %v710 = vclz %v709
        %v711 = vsub.s32 %v710, 2
        %vm712 = vcmp.gt.s32.totalorder 0, %v711
        %v713 = vsel %vm712, 0, %v711
        %v714 = vsub.s32 32, %v713
        %v715 = vshll.u32 %v706, %v713
        %v716 = vshrl.u32 %v698, %v714
        %v717 = vor.u32 %v715, %v716
        %v718 = vsub.s32 4294967266, %v713
        %v719 = vadd.s32 %v718, 127
        %v720 = vshll.u32 %v719, 23
        %v721 = vor.u32 4788187, %v720
        %v722 = vand.u32 2147483647, %v721
        %v724 = vcvt.s32.f32 %v717
        %v725 = vmul.f32 %v724, %v722
        %v726 = vxor.u32 %v725, 2147483648
        %v727 = vsel %vm644, %v726, %v725
        %v728 = vsub.s32 4, %v704
        %v729 = vsel %vm644, %v728, %v704
        %v730 = vsel %vm643, %v329, %v727
        %v731 = vsel %vm643, 0, %v729
        %v732 = vcosq.f32.pop %v730
        %v733 = vsinq.f32.pop %v730
        %vm734 = vweird.f32 %v329
        %v735 = vadd.s32 %v731, 3
        %v736 = vand.u32 %v735, 3
        %vm737 = vcmp.lt.s32.totalorder %v736, 2
        %vm738 = vcmp.eq.s32.totalorder %v736, 0
        %v739 = vxor.u32 %v733, 2147483648
        %v740 = vsel %vm738, %v732, %v739
        %vm741 = vcmp.eq.s32.totalorder %v736, 2
        %v742 = vxor.u32 %v732, 2147483648
        %v743 = vsel %vm741, %v742, %v733
        %v744 = vsel %vm737, %v740, %v743
        %v745 = vsel %vm734, nan, %v744
        %747 = vset.pattern.permute.xlu0 0
        %748 = vperm.xlu0 %747, %v289
        %v749 = vpop.permute.xlu0 %748
        %752 = vset.pattern.permute.xlu0 0
        %753 = vperm.xlu0 %752, %v290
        %v754 = vpop.permute.xlu0 %753
        %757 = vset.pattern.permute.xlu0 0
        %758 = vperm.xlu0 %757, %v291
        %v759 = vpop.permute.xlu0 %758
        %762 = vset.pattern.permute.xlu0 0
        %763 = vperm.xlu0 %762, %v292
        %v764 = vpop.permute.xlu0 %763
        %vm766 = vcmask 261120
        %v768 = vsel %vm766, %v280, 0
        %v771 = vsel %vm766, %v281, 0
        %v774 = vsel %vm766, %v282, 0
        %v777 = vsel %vm766, %v283, 0
        %779 = vmatprep.subr.mxu0 0.0
        %780 = vmatpush1.msra.mxu0 0.0
        %781 = vmatprep.subr.mxu0 0.0
        %782 = vmatpush1.msra.mxu0 0.0
        %783 = vmatprep.subr.mxu0 0.0
        %784 = vmatpush1.msra.mxu0 0.0
        %785 = vmatprep.subr.mxu0 0.0
        %786 = vmatpush1.msra.mxu0 0.0
        %787 = vmatprep.subr.mxu0 0.0
        %788 = vmatpush1.msra.mxu0 0.0
        %789 = vmatprep.subr.mxu0 0.0
        %790 = vmatpush1.msra.mxu0 0.0
        %791 = vmatprep.subr.mxu0 0.0
        %792 = vmatpush1.msra.mxu0 0.0
        %793 = vmatprep.subr.mxu0 0.0
        %794 = vmatpush1.msra.mxu0 0.0
        %795 = vmatprep.subr.mxu0 0.0
        %796 = vmatpush1.msra.mxu0 0.0
        %797 = vmatprep.subr.mxu0 0.0
        %798 = vmatpush1.msra.mxu0 0.0
        %799 = vmatprep.subr.mxu0 0.0
        %800 = vmatpush1.msra.mxu0 0.0
        %801 = vmatprep.subr.mxu0 0.0
        %802 = vmatpush1.msra.mxu0 0.0
        %803 = vmatprep.subr.mxu0 0.0
        %v804 = vand.u32 %v745, 4294901760
        %805 = vmatpush1.msra.mxu0 %v804
        %806 = vmatprep.subr.mxu0 0.0
        %v807 = vand.u32 %v641, 4294901760
        %808 = vmatpush1.msra.mxu0 %v807
        %809 = vmatprep.subr.mxu0 0.0
        %v810 = vand.u32 %v537, 4294901760
        %811 = vmatpush1.msra.mxu0 %v810
        %812 = vmatprep.subr.mxu0 0.0
        %v813 = vand.u32 %v433, 4294901760
        %814 = vmatpush1.msra.mxu0 %v813
        %815 = vmatprep.subr.mxu0 0.0
        %816 = vmatpush2.msra.mxu0 0.0
        %817 = vmatprep.subr.mxu0 0.0
        %818 = vmatpush2.msra.mxu0 0.0
        %819 = vmatprep.subr.mxu0 0.0
        %820 = vmatpush2.msra.mxu0 0.0
        %821 = vmatprep.subr.mxu0 0.0
        %822 = vmatpush2.msra.mxu0 0.0
        %823 = vmatprep.subr.mxu0 0.0
        %824 = vmatpush2.msra.mxu0 0.0
        %825 = vmatprep.subr.mxu0 0.0
        %826 = vmatpush2.msra.mxu0 0.0
        %827 = vmatprep.subr.mxu0 0.0
        %828 = vmatpush2.msra.mxu0 0.0
        %829 = vmatprep.subr.mxu0 0.0
        %830 = vmatpush2.msra.mxu0 0.0
        %831 = vmatprep.subr.mxu0 0.0
        %832 = vmatpush2.msra.mxu0 0.0
        %833 = vmatprep.subr.mxu0 0.0
        %834 = vmatpush2.msra.mxu0 0.0
        %835 = vmatprep.subr.mxu0 0.0
        %836 = vmatpush2.msra.mxu0 0.0
        %837 = vmatprep.subr.mxu0 0.0
        %838 = vmatpush2.msra.mxu0 0.0
        %839 = vmatprep.subr.mxu0 0.0
        %840 = vmatpush2.msra.mxu0 0.0
        %841 = vmatprep.subr.mxu0 0.0
        %842 = vmatpush2.msra.mxu0 0.0
        %843 = vmatprep.subr.mxu0 0.0
        %844 = vmatpush2.msra.mxu0 0.0
        %845 = vmatprep.subr.mxu0 0.0
        %846 = vmatpush2.msra.mxu0 0.0
        %847 = vmatprep.mubr.f32.mxu0 0.0
        %v848 = vand.u32 %v768, 4294901760
        %v849 = vsub.f32 %v768, %v848
        %v850 = vand.u32 %v849, 4294901760
        %v851 = vsub.f32 %v849, %v850
        %v852 = vand.u32 %v851, 4294901760
        %853 = vmatmul.mubr.f32.gmra.mxu0 %v852
        %v854 = vpop.f32.mrf.mxu0
        %v855 = vadd.f32 %v749, %v854
        %v856 = vpop.f32.mrf.mxu0
        %857 = vmatprep.mubr.f32.mxu0 0.0
        %v858 = vand.u32 %v771, 4294901760
        %v859 = vsub.f32 %v771, %v858
        %v860 = vand.u32 %v859, 4294901760
        %v861 = vsub.f32 %v859, %v860
        %v862 = vand.u32 %v861, 4294901760
        %863 = vmatmul.mubr.f32.gmra.mxu0 %v862
        %v864 = vpop.f32.mrf.mxu0
        %v865 = vadd.f32 %v754, %v864
        %v866 = vpop.f32.mrf.mxu0
        %867 = vmatprep.mubr.f32.mxu0 0.0
        %v868 = vand.u32 %v774, 4294901760
        %v869 = vsub.f32 %v774, %v868
        %v870 = vand.u32 %v869, 4294901760
        %v871 = vsub.f32 %v869, %v870
        %v872 = vand.u32 %v871, 4294901760
        %873 = vmatmul.mubr.f32.gmra.mxu0 %v872
        %v874 = vpop.f32.mrf.mxu0
        %v875 = vadd.f32 %v759, %v874
        %v876 = vpop.f32.mrf.mxu0
        %877 = vmatprep.mubr.f32.mxu0 0.0
        %v878 = vand.u32 %v777, 4294901760
        %v879 = vsub.f32 %v777, %v878
        %v880 = vand.u32 %v879, 4294901760
        %v881 = vsub.f32 %v879, %v880
        %v882 = vand.u32 %v881, 4294901760
        %883 = vmatmul.mubr.f32.gmra.mxu0 %v882
        %v884 = vpop.f32.mrf.mxu0
        %v885 = vadd.f32 %v764, %v884
        %v886 = vpop.f32.mrf.mxu0
        %887 = vdwg.mxu0
        %888 = vmatprep.subr.mxu0 0.0
        %889 = vmatpush1.msra.mxu0 0.0
        %890 = vmatprep.subr.mxu0 0.0
        %891 = vmatpush1.msra.mxu0 0.0
        %892 = vmatprep.subr.mxu0 0.0
        %893 = vmatpush1.msra.mxu0 0.0
        %894 = vmatprep.subr.mxu0 0.0
        %895 = vmatpush1.msra.mxu0 0.0
        %896 = vmatprep.subr.mxu0 0.0
        %897 = vmatpush1.msra.mxu0 0.0
        %898 = vmatprep.subr.mxu0 0.0
        %899 = vmatpush1.msra.mxu0 0.0
        %900 = vmatprep.subr.mxu0 0.0
        %901 = vmatpush1.msra.mxu0 0.0
        %902 = vmatprep.subr.mxu0 0.0
        %903 = vmatpush1.msra.mxu0 0.0
        %904 = vmatprep.subr.mxu0 0.0
        %905 = vmatpush1.msra.mxu0 0.0
        %906 = vmatprep.subr.mxu0 0.0
        %907 = vmatpush1.msra.mxu0 0.0
        %908 = vmatprep.subr.mxu0 0.0
        %909 = vmatpush1.msra.mxu0 0.0
        %910 = vmatprep.subr.mxu0 0.0
        %911 = vmatpush1.msra.mxu0 0.0
        %912 = vmatprep.subr.mxu0 0.0
        %v913 = vand.u32 %v745, 4294901760
        %v914 = vsub.f32 %v745, %v913
        %v915 = vand.u32 %v914, 4294901760
        %v916 = vsub.f32 %v914, %v915
        %v917 = vand.u32 %v916, 4294901760
        %918 = vmatpush1.msra.mxu0 %v917
        %919 = vmatprep.subr.mxu0 0.0
        %v920 = vand.u32 %v641, 4294901760
        %v921 = vsub.f32 %v641, %v920
        %v922 = vand.u32 %v921, 4294901760
        %v923 = vsub.f32 %v921, %v922
        %v924 = vand.u32 %v923, 4294901760
        %925 = vmatpush1.msra.mxu0 %v924
        %926 = vmatprep.subr.mxu0 0.0
        %v927 = vand.u32 %v537, 4294901760
        %v928 = vsub.f32 %v537, %v927
        %v929 = vand.u32 %v928, 4294901760
        %v930 = vsub.f32 %v928, %v929
        %v931 = vand.u32 %v930, 4294901760
        %932 = vmatpush1.msra.mxu0 %v931
        %933 = vmatprep.subr.mxu0 0.0
        %v934 = vand.u32 %v433, 4294901760
        %v935 = vsub.f32 %v433, %v934
        %v936 = vand.u32 %v935, 4294901760
        %v937 = vsub.f32 %v935, %v936
        %v938 = vand.u32 %v937, 4294901760
        %939 = vmatpush1.msra.mxu0 %v938
        %940 = vmatprep.subr.mxu0 0.0
        %941 = vmatpush2.msra.mxu0 0.0
        %942 = vmatprep.subr.mxu0 0.0
        %943 = vmatpush2.msra.mxu0 0.0
        %944 = vmatprep.subr.mxu0 0.0
        %945 = vmatpush2.msra.mxu0 0.0
        %946 = vmatprep.subr.mxu0 0.0
        %947 = vmatpush2.msra.mxu0 0.0
        %948 = vmatprep.subr.mxu0 0.0
        %949 = vmatpush2.msra.mxu0 0.0
        %950 = vmatprep.subr.mxu0 0.0
        %951 = vmatpush2.msra.mxu0 0.0
        %952 = vmatprep.subr.mxu0 0.0
        %953 = vmatpush2.msra.mxu0 0.0
        %954 = vmatprep.subr.mxu0 0.0
        %955 = vmatpush2.msra.mxu0 0.0
        %956 = vmatprep.subr.mxu0 0.0
        %957 = vmatpush2.msra.mxu0 0.0
        %958 = vmatprep.subr.mxu0 0.0
        %959 = vmatpush2.msra.mxu0 0.0
        %960 = vmatprep.subr.mxu0 0.0
        %961 = vmatpush2.msra.mxu0 0.0
        %962 = vmatprep.subr.mxu0 0.0
        %963 = vmatpush2.msra.mxu0 0.0
        %964 = vmatprep.subr.mxu0 0.0
        %965 = vmatpush2.msra.mxu0 0.0
        %966 = vmatprep.subr.mxu0 0.0
        %967 = vmatpush2.msra.mxu0 0.0
        %968 = vmatprep.subr.mxu0 0.0
        %969 = vmatpush2.msra.mxu0 0.0
        %970 = vmatprep.subr.mxu0 0.0
        %971 = vmatpush2.msra.mxu0 0.0
        %972 = vmatprep.mubr.f32.mxu0 0.0
        %v973 = vand.u32 %v768, 4294901760
        %974 = vmatmul.mubr.f32.gmra.mxu0 %v973
        %v975 = vpop.f32.mrf.mxu0
        %v976 = vadd.f32 %v855, %v975
        %v977 = vpop.f32.mrf.mxu0
        %978 = vmatprep.mubr.f32.mxu0 0.0
        %v979 = vand.u32 %v771, 4294901760
        %980 = vmatmul.mubr.f32.gmra.mxu0 %v979
        %v981 = vpop.f32.mrf.mxu0
        %v982 = vadd.f32 %v865, %v981
        %v983 = vpop.f32.mrf.mxu0
        %984 = vmatprep.mubr.f32.mxu0 0.0
        %v985 = vand.u32 %v774, 4294901760
        %986 = vmatmul.mubr.f32.gmra.mxu0 %v985
        %v987 = vpop.f32.mrf.mxu0
        %v988 = vadd.f32 %v875, %v987
        %v989 = vpop.f32.mrf.mxu0
        %990 = vmatprep.mubr.f32.mxu0 0.0
        %v991 = vand.u32 %v777, 4294901760
        %992 = vmatmul.mubr.f32.gmra.mxu0 %v991
        %v993 = vpop.f32.mrf.mxu0
        %v994 = vadd.f32 %v885, %v993
        %v995 = vpop.f32.mrf.mxu0
        %996 = vdwg.mxu0
        %997 = vmatprep.subr.mxu0 0.0
        %998 = vmatpush1.msra.mxu0 0.0
        %999 = vmatprep.subr.mxu0 0.0
        %1000 = vmatpush1.msra.mxu0 0.0
        %1001 = vmatprep.subr.mxu0 0.0
        %1002 = vmatpush1.msra.mxu0 0.0
        %1003 = vmatprep.subr.mxu0 0.0
        %1004 = vmatpush1.msra.mxu0 0.0
        %1005 = vmatprep.subr.mxu0 0.0
        %1006 = vmatpush1.msra.mxu0 0.0
        %1007 = vmatprep.subr.mxu0 0.0
        %1008 = vmatpush1.msra.mxu0 0.0
        %1009 = vmatprep.subr.mxu0 0.0
        %1010 = vmatpush1.msra.mxu0 0.0
        %1011 = vmatprep.subr.mxu0 0.0
        %1012 = vmatpush1.msra.mxu0 0.0
        %1013 = vmatprep.subr.mxu0 0.0
        %1014 = vmatpush1.msra.mxu0 0.0
        %1015 = vmatprep.subr.mxu0 0.0
        %1016 = vmatpush1.msra.mxu0 0.0
        %1017 = vmatprep.subr.mxu0 0.0
        %1018 = vmatpush1.msra.mxu0 0.0
        %1019 = vmatprep.subr.mxu0 0.0
        %1020 = vmatpush1.msra.mxu0 0.0
        %1021 = vmatprep.subr.mxu0 0.0
        %v1022 = vand.u32 %v745, 4294901760
        %v1023 = vsub.f32 %v745, %v1022
        %1024 = vmatpush1.msra.mxu0 %v1023
        %1025 = vmatprep.subr.mxu0 0.0
        %v1026 = vand.u32 %v641, 4294901760
        %v1027 = vsub.f32 %v641, %v1026
        %1028 = vmatpush1.msra.mxu0 %v1027
        %1029 = vmatprep.subr.mxu0 0.0
        %v1030 = vand.u32 %v537, 4294901760
        %v1031 = vsub.f32 %v537, %v1030
        %1032 = vmatpush1.msra.mxu0 %v1031
        %1033 = vmatprep.subr.mxu0 0.0
        %v1034 = vand.u32 %v433, 4294901760
        %v1035 = vsub.f32 %v433, %v1034
        %1036 = vmatpush1.msra.mxu0 %v1035
        %1037 = vmatprep.subr.mxu0 0.0
        %1038 = vmatpush2.msra.mxu0 0.0
        %1039 = vmatprep.subr.mxu0 0.0
        %1040 = vmatpush2.msra.mxu0 0.0
        %1041 = vmatprep.subr.mxu0 0.0
        %1042 = vmatpush2.msra.mxu0 0.0
        %1043 = vmatprep.subr.mxu0 0.0
        %1044 = vmatpush2.msra.mxu0 0.0
        %1045 = vmatprep.subr.mxu0 0.0
        %1046 = vmatpush2.msra.mxu0 0.0
        %1047 = vmatprep.subr.mxu0 0.0
        %1048 = vmatpush2.msra.mxu0 0.0
        %1049 = vmatprep.subr.mxu0 0.0
        %1050 = vmatpush2.msra.mxu0 0.0
        %1051 = vmatprep.subr.mxu0 0.0
        %1052 = vmatpush2.msra.mxu0 0.0
        %1053 = vmatprep.subr.mxu0 0.0
        %1054 = vmatpush2.msra.mxu0 0.0
        %1055 = vmatprep.subr.mxu0 0.0
        %1056 = vmatpush2.msra.mxu0 0.0
        %1057 = vmatprep.subr.mxu0 0.0
        %1058 = vmatpush2.msra.mxu0 0.0
        %1059 = vmatprep.subr.mxu0 0.0
        %1060 = vmatpush2.msra.mxu0 0.0
        %1061 = vmatprep.subr.mxu0 0.0
        %1062 = vmatpush2.msra.mxu0 0.0
        %1063 = vmatprep.subr.mxu0 0.0
        %1064 = vmatpush2.msra.mxu0 0.0
        %1065 = vmatprep.subr.mxu0 0.0
        %1066 = vmatpush2.msra.mxu0 0.0
        %1067 = vmatprep.subr.mxu0 0.0
        %1068 = vmatpush2.msra.mxu0 0.0
        %1069 = vmatprep.mubr.f32.mxu0 0.0
        %v1070 = vand.u32 %v768, 4294901760
        %v1071 = vsub.f32 %v768, %v1070
        %1072 = vmatmul.mubr.f32.gmra.mxu0 %v1071
        %v1073 = vpop.f32.mrf.mxu0
        %v1074 = vadd.f32 %v976, %v1073
        %v1075 = vpop.f32.mrf.mxu0
        %1076 = vmatprep.mubr.f32.mxu0 0.0
        %v1077 = vand.u32 %v771, 4294901760
        %v1078 = vsub.f32 %v771, %v1077
        %1079 = vmatmul.mubr.f32.gmra.mxu0 %v1078
        %v1080 = vpop.f32.mrf.mxu0
        %v1081 = vadd.f32 %v982, %v1080
        %v1082 = vpop.f32.mrf.mxu0
        %1083 = vmatprep.mubr.f32.mxu0 0.0
        %v1084 = vand.u32 %v774, 4294901760
        %v1085 = vsub.f32 %v774, %v1084
        %1086 = vmatmul.mubr.f32.gmra.mxu0 %v1085
        %v1087 = vpop.f32.mrf.mxu0
        %v1088 = vadd.f32 %v988, %v1087
        %v1089 = vpop.f32.mrf.mxu0
        %1090 = vmatprep.mubr.f32.mxu0 0.0
        %v1091 = vand.u32 %v777, 4294901760
        %v1092 = vsub.f32 %v777, %v1091
        %1093 = vmatmul.mubr.f32.gmra.mxu0 %v1092
        %v1094 = vpop.f32.mrf.mxu0
        %v1095 = vadd.f32 %v994, %v1094
        %v1096 = vpop.f32.mrf.mxu0
        %1097 = vdwg.mxu0
        %1098 = vmatprep.subr.mxu0 0.0
        %1099 = vmatpush1.msra.mxu0 0.0
        %1100 = vmatprep.subr.mxu0 0.0
        %1101 = vmatpush1.msra.mxu0 0.0
        %1102 = vmatprep.subr.mxu0 0.0
        %1103 = vmatpush1.msra.mxu0 0.0
        %1104 = vmatprep.subr.mxu0 0.0
        %1105 = vmatpush1.msra.mxu0 0.0
        %1106 = vmatprep.subr.mxu0 0.0
        %1107 = vmatpush1.msra.mxu0 0.0
        %1108 = vmatprep.subr.mxu0 0.0
        %1109 = vmatpush1.msra.mxu0 0.0
        %1110 = vmatprep.subr.mxu0 0.0
        %1111 = vmatpush1.msra.mxu0 0.0
        %1112 = vmatprep.subr.mxu0 0.0
        %1113 = vmatpush1.msra.mxu0 0.0
        %1114 = vmatprep.subr.mxu0 0.0
        %1115 = vmatpush1.msra.mxu0 0.0
        %1116 = vmatprep.subr.mxu0 0.0
        %1117 = vmatpush1.msra.mxu0 0.0
        %1118 = vmatprep.subr.mxu0 0.0
        %1119 = vmatpush1.msra.mxu0 0.0
        %1120 = vmatprep.subr.mxu0 0.0
        %1121 = vmatpush1.msra.mxu0 0.0
        %1122 = vmatprep.subr.mxu0 0.0
        %v1123 = vand.u32 %v745, 4294901760
        %1124 = vmatpush1.msra.mxu0 %v1123
        %1125 = vmatprep.subr.mxu0 0.0
        %v1126 = vand.u32 %v641, 4294901760
        %1127 = vmatpush1.msra.mxu0 %v1126
        %1128 = vmatprep.subr.mxu0 0.0
        %v1129 = vand.u32 %v537, 4294901760
        %1130 = vmatpush1.msra.mxu0 %v1129
        %1131 = vmatprep.subr.mxu0 0.0
        %v1132 = vand.u32 %v433, 4294901760
        %1133 = vmatpush1.msra.mxu0 %v1132
        %1134 = vmatprep.subr.mxu0 0.0
        %1135 = vmatpush2.msra.mxu0 0.0
        %1136 = vmatprep.subr.mxu0 0.0
        %1137 = vmatpush2.msra.mxu0 0.0
        %1138 = vmatprep.subr.mxu0 0.0
        %1139 = vmatpush2.msra.mxu0 0.0
        %1140 = vmatprep.subr.mxu0 0.0
        %1141 = vmatpush2.msra.mxu0 0.0
        %1142 = vmatprep.subr.mxu0 0.0
        %1143 = vmatpush2.msra.mxu0 0.0
        %1144 = vmatprep.subr.mxu0 0.0
        %1145 = vmatpush2.msra.mxu0 0.0
        %1146 = vmatprep.subr.mxu0 0.0
        %1147 = vmatpush2.msra.mxu0 0.0
        %1148 = vmatprep.subr.mxu0 0.0
        %1149 = vmatpush2.msra.mxu0 0.0
        %1150 = vmatprep.subr.mxu0 0.0
        %1151 = vmatpush2.msra.mxu0 0.0
        %1152 = vmatprep.subr.mxu0 0.0
        %1153 = vmatpush2.msra.mxu0 0.0
        %1154 = vmatprep.subr.mxu0 0.0
        %1155 = vmatpush2.msra.mxu0 0.0
        %1156 = vmatprep.subr.mxu0 0.0
        %1157 = vmatpush2.msra.mxu0 0.0
        %1158 = vmatprep.subr.mxu0 0.0
        %1159 = vmatpush2.msra.mxu0 0.0
        %1160 = vmatprep.subr.mxu0 0.0
        %1161 = vmatpush2.msra.mxu0 0.0
        %1162 = vmatprep.subr.mxu0 0.0
        %1163 = vmatpush2.msra.mxu0 0.0
        %1164 = vmatprep.subr.mxu0 0.0
        %1165 = vmatpush2.msra.mxu0 0.0
        %1166 = vmatprep.mubr.f32.mxu0 0.0
        %v1167 = vand.u32 %v768, 4294901760
        %v1168 = vsub.f32 %v768, %v1167
        %v1169 = vand.u32 %v1168, 4294901760
        %1170 = vmatmul.mubr.f32.gmra.mxu0 %v1169
        %v1171 = vpop.f32.mrf.mxu0
        %v1172 = vadd.f32 %v1074, %v1171
        %v1173 = vpop.f32.mrf.mxu0
        %1174 = vmatprep.mubr.f32.mxu0 0.0
        %v1175 = vand.u32 %v771, 4294901760
        %v1176 = vsub.f32 %v771, %v1175
        %v1177 = vand.u32 %v1176, 4294901760
        %1178 = vmatmul.mubr.f32.gmra.mxu0 %v1177
        %v1179 = vpop.f32.mrf.mxu0
        %v1180 = vadd.f32 %v1081, %v1179
        %v1181 = vpop.f32.mrf.mxu0
        %1182 = vmatprep.mubr.f32.mxu0 0.0
        %v1183 = vand.u32 %v774, 4294901760
        %v1184 = vsub.f32 %v774, %v1183
        %v1185 = vand.u32 %v1184, 4294901760
        %1186 = vmatmul.mubr.f32.gmra.mxu0 %v1185
        %v1187 = vpop.f32.mrf.mxu0
        %v1188 = vadd.f32 %v1088, %v1187
        %v1189 = vpop.f32.mrf.mxu0
        %1190 = vmatprep.mubr.f32.mxu0 0.0
        %v1191 = vand.u32 %v777, 4294901760
        %v1192 = vsub.f32 %v777, %v1191
        %v1193 = vand.u32 %v1192, 4294901760
        %1194 = vmatmul.mubr.f32.gmra.mxu0 %v1193
        %v1195 = vpop.f32.mrf.mxu0
        %v1196 = vadd.f32 %v1095, %v1195
        %v1197 = vpop.f32.mrf.mxu0
        %1198 = vdwg.mxu0
        %1199 = vmatprep.subr.mxu0 0.0
        %1200 = vmatpush1.msra.mxu0 0.0
        %1201 = vmatprep.subr.mxu0 0.0
        %1202 = vmatpush1.msra.mxu0 0.0
        %1203 = vmatprep.subr.mxu0 0.0
        %1204 = vmatpush1.msra.mxu0 0.0
        %1205 = vmatprep.subr.mxu0 0.0
        %1206 = vmatpush1.msra.mxu0 0.0
        %1207 = vmatprep.subr.mxu0 0.0
        %1208 = vmatpush1.msra.mxu0 0.0
        %1209 = vmatprep.subr.mxu0 0.0
        %1210 = vmatpush1.msra.mxu0 0.0
        %1211 = vmatprep.subr.mxu0 0.0
        %1212 = vmatpush1.msra.mxu0 0.0
        %1213 = vmatprep.subr.mxu0 0.0
        %1214 = vmatpush1.msra.mxu0 0.0
        %1215 = vmatprep.subr.mxu0 0.0
        %1216 = vmatpush1.msra.mxu0 0.0
        %1217 = vmatprep.subr.mxu0 0.0
        %1218 = vmatpush1.msra.mxu0 0.0
        %1219 = vmatprep.subr.mxu0 0.0
        %1220 = vmatpush1.msra.mxu0 0.0
        %1221 = vmatprep.subr.mxu0 0.0
        %1222 = vmatpush1.msra.mxu0 0.0
        %1223 = vmatprep.subr.mxu0 0.0
        %v1224 = vand.u32 %v745, 4294901760
        %v1225 = vsub.f32 %v745, %v1224
        %v1226 = vand.u32 %v1225, 4294901760
        %1227 = vmatpush1.msra.mxu0 %v1226
        %1228 = vmatprep.subr.mxu0 0.0
        %v1229 = vand.u32 %v641, 4294901760
        %v1230 = vsub.f32 %v641, %v1229
        %v1231 = vand.u32 %v1230, 4294901760
        %1232 = vmatpush1.msra.mxu0 %v1231
        %1233 = vmatprep.subr.mxu0 0.0
        %v1234 = vand.u32 %v537, 4294901760
        %v1235 = vsub.f32 %v537, %v1234
        %v1236 = vand.u32 %v1235, 4294901760
        %1237 = vmatpush1.msra.mxu0 %v1236
        %1238 = vmatprep.subr.mxu0 0.0
        %v1239 = vand.u32 %v433, 4294901760
        %v1240 = vsub.f32 %v433, %v1239
        %v1241 = vand.u32 %v1240, 4294901760
        %1242 = vmatpush1.msra.mxu0 %v1241
        %1243 = vmatprep.subr.mxu0 0.0
        %1244 = vmatpush2.msra.mxu0 0.0
        %1245 = vmatprep.subr.mxu0 0.0
        %1246 = vmatpush2.msra.mxu0 0.0
        %1247 = vmatprep.subr.mxu0 0.0
        %1248 = vmatpush2.msra.mxu0 0.0
        %1249 = vmatprep.subr.mxu0 0.0
        %1250 = vmatpush2.msra.mxu0 0.0
        %1251 = vmatprep.subr.mxu0 0.0
        %1252 = vmatpush2.msra.mxu0 0.0
        %1253 = vmatprep.subr.mxu0 0.0
        %1254 = vmatpush2.msra.mxu0 0.0
        %1255 = vmatprep.subr.mxu0 0.0
        %1256 = vmatpush2.msra.mxu0 0.0
        %1257 = vmatprep.subr.mxu0 0.0
        %1258 = vmatpush2.msra.mxu0 0.0
        %1259 = vmatprep.subr.mxu0 0.0
        %1260 = vmatpush2.msra.mxu0 0.0
        %1261 = vmatprep.subr.mxu0 0.0
        %1262 = vmatpush2.msra.mxu0 0.0
        %1263 = vmatprep.subr.mxu0 0.0
        %1264 = vmatpush2.msra.mxu0 0.0
        %1265 = vmatprep.subr.mxu0 0.0
        %1266 = vmatpush2.msra.mxu0 0.0
        %1267 = vmatprep.subr.mxu0 0.0
        %1268 = vmatpush2.msra.mxu0 0.0
        %1269 = vmatprep.subr.mxu0 0.0
        %1270 = vmatpush2.msra.mxu0 0.0
        %1271 = vmatprep.subr.mxu0 0.0
        %1272 = vmatpush2.msra.mxu0 0.0
        %1273 = vmatprep.subr.mxu0 0.0
        %1274 = vmatpush2.msra.mxu0 0.0
        %1275 = vmatprep.mubr.f32.mxu0 0.0
        %v1276 = vand.u32 %v768, 4294901760
        %1277 = vmatmul.mubr.f32.gmra.mxu0 %v1276
        %v1278 = vpop.f32.mrf.mxu0
        %v1279 = vadd.f32 %v1172, %v1278
        %v1280 = vpop.f32.mrf.mxu0
        %1281 = vmatprep.mubr.f32.mxu0 0.0
        %v1282 = vand.u32 %v771, 4294901760
        %1283 = vmatmul.mubr.f32.gmra.mxu0 %v1282
        %v1284 = vpop.f32.mrf.mxu0
        %v1285 = vadd.f32 %v1180, %v1284
        %v1286 = vpop.f32.mrf.mxu0
        %1287 = vmatprep.mubr.f32.mxu0 0.0
        %v1288 = vand.u32 %v774, 4294901760
        %1289 = vmatmul.mubr.f32.gmra.mxu0 %v1288
        %v1290 = vpop.f32.mrf.mxu0
        %v1291 = vadd.f32 %v1188, %v1290
        %v1292 = vpop.f32.mrf.mxu0
        %1293 = vmatprep.mubr.f32.mxu0 0.0
        %v1294 = vand.u32 %v777, 4294901760
        %1295 = vmatmul.mubr.f32.gmra.mxu0 %v1294
        %v1296 = vpop.f32.mrf.mxu0
        %v1297 = vadd.f32 %v1196, %v1296
        %v1298 = vpop.f32.mrf.mxu0
        %1299 = vdwg.mxu0
        %1300 = vmatprep.subr.mxu0 0.0
        %1301 = vmatpush1.msra.mxu0 0.0
        %1302 = vmatprep.subr.mxu0 0.0
        %1303 = vmatpush1.msra.mxu0 0.0
        %1304 = vmatprep.subr.mxu0 0.0
        %1305 = vmatpush1.msra.mxu0 0.0
        %1306 = vmatprep.subr.mxu0 0.0
        %1307 = vmatpush1.msra.mxu0 0.0
        %1308 = vmatprep.subr.mxu0 0.0
        %1309 = vmatpush1.msra.mxu0 0.0
        %1310 = vmatprep.subr.mxu0 0.0
        %1311 = vmatpush1.msra.mxu0 0.0
        %1312 = vmatprep.subr.mxu0 0.0
        %1313 = vmatpush1.msra.mxu0 0.0
        %1314 = vmatprep.subr.mxu0 0.0
        %1315 = vmatpush1.msra.mxu0 0.0
        %1316 = vmatprep.subr.mxu0 0.0
        %1317 = vmatpush1.msra.mxu0 0.0
        %1318 = vmatprep.subr.mxu0 0.0
        %1319 = vmatpush1.msra.mxu0 0.0
        %1320 = vmatprep.subr.mxu0 0.0
        %1321 = vmatpush1.msra.mxu0 0.0
        %1322 = vmatprep.subr.mxu0 0.0
        %1323 = vmatpush1.msra.mxu0 0.0
        %1324 = vmatprep.subr.mxu0 0.0
        %v1325 = vand.u32 %v745, 4294901760
        %1326 = vmatpush1.msra.mxu0 %v1325
        %1327 = vmatprep.subr.mxu0 0.0
        %v1328 = vand.u32 %v641, 4294901760
        %1329 = vmatpush1.msra.mxu0 %v1328
        %1330 = vmatprep.subr.mxu0 0.0
        %v1331 = vand.u32 %v537, 4294901760
        %1332 = vmatpush1.msra.mxu0 %v1331
        %1333 = vmatprep.subr.mxu0 0.0
        %v1334 = vand.u32 %v433, 4294901760
        %1335 = vmatpush1.msra.mxu0 %v1334
        %1336 = vmatprep.subr.mxu0 0.0
        %1337 = vmatpush2.msra.mxu0 0.0
        %1338 = vmatprep.subr.mxu0 0.0
        %1339 = vmatpush2.msra.mxu0 0.0
        %1340 = vmatprep.subr.mxu0 0.0
        %1341 = vmatpush2.msra.mxu0 0.0
        %1342 = vmatprep.subr.mxu0 0.0
        %1343 = vmatpush2.msra.mxu0 0.0
        %1344 = vmatprep.subr.mxu0 0.0
        %1345 = vmatpush2.msra.mxu0 0.0
        %1346 = vmatprep.subr.mxu0 0.0
        %1347 = vmatpush2.msra.mxu0 0.0
        %1348 = vmatprep.subr.mxu0 0.0
        %1349 = vmatpush2.msra.mxu0 0.0
        %1350 = vmatprep.subr.mxu0 0.0
        %1351 = vmatpush2.msra.mxu0 0.0
        %1352 = vmatprep.subr.mxu0 0.0
        %1353 = vmatpush2.msra.mxu0 0.0
        %1354 = vmatprep.subr.mxu0 0.0
        %1355 = vmatpush2.msra.mxu0 0.0
        %1356 = vmatprep.subr.mxu0 0.0
        %1357 = vmatpush2.msra.mxu0 0.0
        %1358 = vmatprep.subr.mxu0 0.0
        %1359 = vmatpush2.msra.mxu0 0.0
        %1360 = vmatprep.subr.mxu0 0.0
        %1361 = vmatpush2.msra.mxu0 0.0
        %1362 = vmatprep.subr.mxu0 0.0
        %1363 = vmatpush2.msra.mxu0 0.0
        %1364 = vmatprep.subr.mxu0 0.0
        %1365 = vmatpush2.msra.mxu0 0.0
        %1366 = vmatprep.subr.mxu0 0.0
        %1367 = vmatpush2.msra.mxu0 0.0
        %1368 = vmatprep.mubr.f32.mxu0 0.0
        %v1369 = vand.u32 %v768, 4294901760
        %1370 = vmatmul.mubr.f32.gmra.mxu0 %v1369
        %v1371 = vpop.f32.mrf.mxu0
        %v1372 = vadd.f32 %v1279, %v1371
        %v1373 = vpop.f32.mrf.mxu0
        %1374 = vmatprep.mubr.f32.mxu0 0.0
        %v1375 = vand.u32 %v771, 4294901760
        %1376 = vmatmul.mubr.f32.gmra.mxu0 %v1375
        %v1377 = vpop.f32.mrf.mxu0
        %v1378 = vadd.f32 %v1285, %v1377
        %v1379 = vpop.f32.mrf.mxu0
        %1380 = vmatprep.mubr.f32.mxu0 0.0
        %v1381 = vand.u32 %v774, 4294901760
        %1382 = vmatmul.mubr.f32.gmra.mxu0 %v1381
        %v1383 = vpop.f32.mrf.mxu0
        %v1384 = vadd.f32 %v1291, %v1383
        %v1385 = vpop.f32.mrf.mxu0
        %1386 = vmatprep.mubr.f32.mxu0 0.0
        %v1387 = vand.u32 %v777, 4294901760
        %1388 = vmatmul.mubr.f32.gmra.mxu0 %v1387
        %v1389 = vpop.f32.mrf.mxu0
        %v1390 = vadd.f32 %v1297, %v1389
        %v1391 = vpop.f32.mrf.mxu0
        %1392 = vdwg.mxu0
        %v1393 = vand.u32 2147483647, %v1372
        %vm1394 = vcmp.le.f32.partialorder %v1393, 0.7853982
        %vm1395 = vcmp.lt.s32.totalorder %v1372, 0
        %v1396 = vand.u32 %v1372, 2139095040
        %v1397 = vshrl.u32 %v1396, 23
        %v1398 = vsub.s32 %v1397, 127
        %v1399 = vand.u32 2147483647, %v1372
        %v1400 = vand.u32 %v1399, 8388607
        %v1401 = vor.u32 %v1400, 8388608
        %v1402 = vsub.s32 0, %v1401
        %v1403 = vadd.s32 %v1398, 1
        %vm1404 = vcmp.gt.s32.totalorder %v1403, 0
        %v1405 = vsel %vm1404, %v1403, 0
        %v1406 = vshrl.u32 %v1405, 5
        %v1407 = vand.u32 %v1405, 31
        %v1408 = vsub.s32 32, %v1407
        %v1409 = vshrl.u32 683565275, %v1408
        %v1410 = vshll.u32 683565275, %v1407
        %v1411 = vshrl.u32 2475754826, %v1408
        %v1412 = vor.u32 %v1410, %v1411
        %v1413 = vshll.u32 2475754826, %v1407
        %v1414 = vshrl.u32 2131351028, %v1408
        %v1415 = vor.u32 %v1413, %v1414
        %v1416 = vshll.u32 2131351028, %v1407
        %v1417 = vshrl.u32 2102212464, %v1408
        %v1418 = vor.u32 %v1416, %v1417
        %v1419 = vshll.u32 2102212464, %v1407
        %v1420 = vshrl.u32 920167782, %v1408
        %v1421 = vor.u32 %v1419, %v1420
        %v1422 = vshll.u32 920167782, %v1407
        %v1423 = vshrl.u32 1326507024, %v1408
        %v1424 = vor.u32 %v1422, %v1423
        %vm1425 = vcmp.lt.s32.totalorder %v1406, 1
        %vm1426 = vcmp.lt.s32.totalorder %v1406, 2
        %vm1427 = vcmp.lt.s32.totalorder %v1406, 3
        %vm1428 = vcmp.lt.s32.totalorder %v1406, 4
        %v1429 = vsel %vm1425, %v1409, %v1412
        %v1430 = vsel %vm1428, %v1418, 2102212464
        %v1431 = vsel %vm1427, %v1415, %v1430
        %v1432 = vsel %vm1426, %v1429, %v1431
        %v1433 = vsel %vm1425, %v1412, %v1415
        %v1434 = vsel %vm1428, %v1421, 920167782
        %v1435 = vsel %vm1427, %v1418, %v1434
        %v1436 = vsel %vm1426, %v1433, %v1435
        %v1437 = vsel %vm1425, %v1415, %v1418
        %v1438 = vsel %vm1428, %v1424, 1326507024
        %v1439 = vsel %vm1427, %v1421, %v1438
        %v1440 = vsel %vm1426, %v1437, %v1439
        %v1441 = vshll.u32 %v1401, 8
        %v1442 = vmul.u32.u64.compose %v1441, %v1440
        %v1443 = vextract.low.u32 %v1442
        %v1444 = vextract.high.u32 %v1442
        %v1445 = vmul.u32.u64.compose %v1441, %v1436
        %v1446 = vextract.low.u32 %v1445
        %v1447 = vextract.high.u32 %v1445
        %v1448 = vmul.u32 %v1441, %v1432
        %v1449 = vadd.s32 %v1444, %v1446
        %vm1450 = vc.u32 %v1444, %v1446
        %v1451 = vadd.s32 %v1447, 1
        %v1452 = vsel %vm1450, %v1451, %v1447
        %v1453 = vadd.s32 %v1448, %v1452
        %v1454 = vadd.s32 %v1453, 536870912
        %v1455 = vshrl.u32 %v1454, 30
        %v1456 = vshll.u32 %v1455, 30
        %v1457 = vsub.s32 %v1453, %v1456
        %vm1458 = vcmp.lt.s32.totalorder %v1457, 0
        %v1459 = vsub.s32 0, %v1457
        %v1460 = vsel %vm1458, %v1459, %v1457
        %v1461 = vclz %v1460
        %v1462 = vsub.s32 %v1461, 2
        %vm1463 = vcmp.gt.s32.totalorder 0, %v1462
        %v1464 = vsel %vm1463, 0, %v1462
        %v1465 = vsub.s32 32, %v1464
        %v1466 = vshll.u32 %v1457, %v1464
        %v1467 = vshrl.u32 %v1449, %v1465
        %v1468 = vor.u32 %v1466, %v1467
        %v1469 = vsub.s32 4294967266, %v1464
        %v1470 = vadd.s32 %v1469, 127
        %v1471 = vshll.u32 %v1470, 23
        %v1472 = vor.u32 4788187, %v1471
        %v1473 = vand.u32 2147483647, %v1472
        %v1475 = vcvt.s32.f32 %v1468
        %v1476 = vmul.f32 %v1475, %v1473
        %v1477 = vxor.u32 %v1476, 2147483648
        %v1478 = vsel %vm1395, %v1477, %v1476
        %v1479 = vsub.s32 4, %v1455
        %v1480 = vsel %vm1395, %v1479, %v1455
        %v1481 = vsel %vm1394, %v1372, %v1478
        %v1482 = vsel %vm1394, 0, %v1480
        %v1483 = vcosq.f32.pop %v1481
        %v1484 = vsinq.f32.pop %v1481
        %vm1485 = vweird.f32 %v1372
        %v1486 = vadd.s32 %v1482, 3
        %v1487 = vand.u32 %v1486, 3
        %vm1488 = vcmp.lt.s32.totalorder %v1487, 2
        %vm1489 = vcmp.eq.s32.totalorder %v1487, 0
        %v1490 = vxor.u32 %v1484, 2147483648
        %v1491 = vsel %vm1489, %v1483, %v1490
        %vm1492 = vcmp.eq.s32.totalorder %v1487, 2
        %v1493 = vxor.u32 %v1483, 2147483648
        %v1494 = vsel %vm1492, %v1493, %v1484
        %v1495 = vsel %vm1488, %v1491, %v1494
        %v1496 = vsel %vm1485, nan, %v1495
        %v1497 = vand.u32 2147483647, %v1378
        %vm1498 = vcmp.le.f32.partialorder %v1497, 0.7853982
        %vm1499 = vcmp.lt.s32.totalorder %v1378, 0
        %v1500 = vand.u32 %v1378, 2139095040
        %v1501 = vshrl.u32 %v1500, 23
        %v1502 = vsub.s32 %v1501, 127
        %v1503 = vand.u32 2147483647, %v1378
        %v1504 = vand.u32 %v1503, 8388607
        %v1505 = vor.u32 %v1504, 8388608
        %v1506 = vsub.s32 0, %v1505
        %v1507 = vadd.s32 %v1502, 1
        %vm1508 = vcmp.gt.s32.totalorder %v1507, 0
        %v1509 = vsel %vm1508, %v1507, 0
        %v1510 = vshrl.u32 %v1509, 5
        %v1511 = vand.u32 %v1509, 31
        %v1512 = vsub.s32 32, %v1511
        %v1513 = vshrl.u32 683565275, %v1512
        %v1514 = vshll.u32 683565275, %v1511
        %v1515 = vshrl.u32 2475754826, %v1512
        %v1516 = vor.u32 %v1514, %v1515
        %v1517 = vshll.u32 2475754826, %v1511
        %v1518 = vshrl.u32 2131351028, %v1512
        %v1519 = vor.u32 %v1517, %v1518
        %v1520 = vshll.u32 2131351028, %v1511
        %v1521 = vshrl.u32 2102212464, %v1512
        %v1522 = vor.u32 %v1520, %v1521
        %v1523 = vshll.u32 2102212464, %v1511
        %v1524 = vshrl.u32 920167782, %v1512
        %v1525 = vor.u32 %v1523, %v1524
        %v1526 = vshll.u32 920167782, %v1511
        %v1527 = vshrl.u32 1326507024, %v1512
        %v1528 = vor.u32 %v1526, %v1527
        %vm1529 = vcmp.lt.s32.totalorder %v1510, 1
        %vm1530 = vcmp.lt.s32.totalorder %v1510, 2
        %vm1531 = vcmp.lt.s32.totalorder %v1510, 3
        %vm1532 = vcmp.lt.s32.totalorder %v1510, 4
        %v1533 = vsel %vm1529, %v1513, %v1516
        %v1534 = vsel %vm1532, %v1522, 2102212464
        %v1535 = vsel %vm1531, %v1519, %v1534
        %v1536 = vsel %vm1530, %v1533, %v1535
        %v1537 = vsel %vm1529, %v1516, %v1519
        %v1538 = vsel %vm1532, %v1525, 920167782
        %v1539 = vsel %vm1531, %v1522, %v1538
        %v1540 = vsel %vm1530, %v1537, %v1539
        %v1541 = vsel %vm1529, %v1519, %v1522
        %v1542 = vsel %vm1532, %v1528, 1326507024
        %v1543 = vsel %vm1531, %v1525, %v1542
        %v1544 = vsel %vm1530, %v1541, %v1543
        %v1545 = vshll.u32 %v1505, 8
        %v1546 = vmul.u32.u64.compose %v1545, %v1544
        %v1547 = vextract.low.u32 %v1546
        %v1548 = vextract.high.u32 %v1546
        %v1549 = vmul.u32.u64.compose %v1545, %v1540
        %v1550 = vextract.low.u32 %v1549
        %v1551 = vextract.high.u32 %v1549
        %v1552 = vmul.u32 %v1545, %v1536
        %v1553 = vadd.s32 %v1548, %v1550
        %vm1554 = vc.u32 %v1548, %v1550
        %v1555 = vadd.s32 %v1551, 1
        %v1556 = vsel %vm1554, %v1555, %v1551
        %v1557 = vadd.s32 %v1552, %v1556
        %v1558 = vadd.s32 %v1557, 536870912
        %v1559 = vshrl.u32 %v1558, 30
        %v1560 = vshll.u32 %v1559, 30
        %v1561 = vsub.s32 %v1557, %v1560
        %vm1562 = vcmp.lt.s32.totalorder %v1561, 0
        %v1563 = vsub.s32 0, %v1561
        %v1564 = vsel %vm1562, %v1563, %v1561
        %v1565 = vclz %v1564
        %v1566 = vsub.s32 %v1565, 2
        %vm1567 = vcmp.gt.s32.totalorder 0, %v1566
        %v1568 = vsel %vm1567, 0, %v1566
        %v1569 = vsub.s32 32, %v1568
        %v1570 = vshll.u32 %v1561, %v1568
        %v1571 = vshrl.u32 %v1553, %v1569
        %v1572 = vor.u32 %v1570, %v1571
        %v1573 = vsub.s32 4294967266, %v1568
        %v1574 = vadd.s32 %v1573, 127
        %v1575 = vshll.u32 %v1574, 23
        %v1576 = vor.u32 4788187, %v1575
        %v1577 = vand.u32 2147483647, %v1576
        %v1579 = vcvt.s32.f32 %v1572
        %v1580 = vmul.f32 %v1579, %v1577
        %v1581 = vxor.u32 %v1580, 2147483648
        %v1582 = vsel %vm1499, %v1581, %v1580
        %v1583 = vsub.s32 4, %v1559
        %v1584 = vsel %vm1499, %v1583, %v1559
        %v1585 = vsel %vm1498, %v1378, %v1582
        %v1586 = vsel %vm1498, 0, %v1584
        %v1587 = vcosq.f32.pop %v1585
        %v1588 = vsinq.f32.pop %v1585
        %vm1589 = vweird.f32 %v1378
        %v1590 = vadd.s32 %v1586, 3
        %v1591 = vand.u32 %v1590, 3
        %vm1592 = vcmp.lt.s32.totalorder %v1591, 2
        %vm1593 = vcmp.eq.s32.totalorder %v1591, 0
        %v1594 = vxor.u32 %v1588, 2147483648
        %v1595 = vsel %vm1593, %v1587, %v1594
        %vm1596 = vcmp.eq.s32.totalorder %v1591, 2
        %v1597 = vxor.u32 %v1587, 2147483648
        %v1598 = vsel %vm1596, %v1597, %v1588
        %v1599 = vsel %vm1592, %v1595, %v1598
        %v1600 = vsel %vm1589, nan, %v1599
        %v1601 = vand.u32 2147483647, %v1384
        %vm1602 = vcmp.le.f32.partialorder %v1601, 0.7853982
        %vm1603 = vcmp.lt.s32.totalorder %v1384, 0
        %v1604 = vand.u32 %v1384, 2139095040
        %v1605 = vshrl.u32 %v1604, 23
        %v1606 = vsub.s32 %v1605, 127
        %v1607 = vand.u32 2147483647, %v1384
        %v1608 = vand.u32 %v1607, 8388607
        %v1609 = vor.u32 %v1608, 8388608
        %v1610 = vsub.s32 0, %v1609
        %v1611 = vadd.s32 %v1606, 1
        %vm1612 = vcmp.gt.s32.totalorder %v1611, 0
        %v1613 = vsel %vm1612, %v1611, 0
        %v1614 = vshrl.u32 %v1613, 5
        %v1615 = vand.u32 %v1613, 31
        %v1616 = vsub.s32 32, %v1615
        %v1617 = vshrl.u32 683565275, %v1616
        %v1618 = vshll.u32 683565275, %v1615
        %v1619 = vshrl.u32 2475754826, %v1616
        %v1620 = vor.u32 %v1618, %v1619
        %v1621 = vshll.u32 2475754826, %v1615
        %v1622 = vshrl.u32 2131351028, %v1616
        %v1623 = vor.u32 %v1621, %v1622
        %v1624 = vshll.u32 2131351028, %v1615
        %v1625 = vshrl.u32 2102212464, %v1616
        %v1626 = vor.u32 %v1624, %v1625
        %v1627 = vshll.u32 2102212464, %v1615
        %v1628 = vshrl.u32 920167782, %v1616
        %v1629 = vor.u32 %v1627, %v1628
        %v1630 = vshll.u32 920167782, %v1615
        %v1631 = vshrl.u32 1326507024, %v1616
        %v1632 = vor.u32 %v1630, %v1631
        %vm1633 = vcmp.lt.s32.totalorder %v1614, 1
        %vm1634 = vcmp.lt.s32.totalorder %v1614, 2
        %vm1635 = vcmp.lt.s32.totalorder %v1614, 3
        %vm1636 = vcmp.lt.s32.totalorder %v1614, 4
        %v1637 = vsel %vm1633, %v1617, %v1620
        %v1638 = vsel %vm1636, %v1626, 2102212464
        %v1639 = vsel %vm1635, %v1623, %v1638
        %v1640 = vsel %vm1634, %v1637, %v1639
        %v1641 = vsel %vm1633, %v1620, %v1623
        %v1642 = vsel %vm1636, %v1629, 920167782
        %v1643 = vsel %vm1635, %v1626, %v1642
        %v1644 = vsel %vm1634, %v1641, %v1643
        %v1645 = vsel %vm1633, %v1623, %v1626
        %v1646 = vsel %vm1636, %v1632, 1326507024
        %v1647 = vsel %vm1635, %v1629, %v1646
        %v1648 = vsel %vm1634, %v1645, %v1647
        %v1649 = vshll.u32 %v1609, 8
        %v1650 = vmul.u32.u64.compose %v1649, %v1648
        %v1651 = vextract.low.u32 %v1650
        %v1652 = vextract.high.u32 %v1650
        %v1653 = vmul.u32.u64.compose %v1649, %v1644
        %v1654 = vextract.low.u32 %v1653
        %v1655 = vextract.high.u32 %v1653
        %v1656 = vmul.u32 %v1649, %v1640
        %v1657 = vadd.s32 %v1652, %v1654
        %vm1658 = vc.u32 %v1652, %v1654
        %v1659 = vadd.s32 %v1655, 1
        %v1660 = vsel %vm1658, %v1659, %v1655
        %v1661 = vadd.s32 %v1656, %v1660
        %v1662 = vadd.s32 %v1661, 536870912
        %v1663 = vshrl.u32 %v1662, 30
        %v1664 = vshll.u32 %v1663, 30
        %v1665 = vsub.s32 %v1661, %v1664
        %vm1666 = vcmp.lt.s32.totalorder %v1665, 0
        %v1667 = vsub.s32 0, %v1665
        %v1668 = vsel %vm1666, %v1667, %v1665
        %v1669 = vclz %v1668
        %v1670 = vsub.s32 %v1669, 2
        %vm1671 = vcmp.gt.s32.totalorder 0, %v1670
        %v1672 = vsel %vm1671, 0, %v1670
        %v1673 = vsub.s32 32, %v1672
        %v1674 = vshll.u32 %v1665, %v1672
        %v1675 = vshrl.u32 %v1657, %v1673
        %v1676 = vor.u32 %v1674, %v1675
        %v1677 = vsub.s32 4294967266, %v1672
        %v1678 = vadd.s32 %v1677, 127
        %v1679 = vshll.u32 %v1678, 23
        %v1680 = vor.u32 4788187, %v1679
        %v1681 = vand.u32 2147483647, %v1680
        %v1683 = vcvt.s32.f32 %v1676
        %v1684 = vmul.f32 %v1683, %v1681
        %v1685 = vxor.u32 %v1684, 2147483648
        %v1686 = vsel %vm1603, %v1685, %v1684
        %v1687 = vsub.s32 4, %v1663
        %v1688 = vsel %vm1603, %v1687, %v1663
        %v1689 = vsel %vm1602, %v1384, %v1686
        %v1690 = vsel %vm1602, 0, %v1688
        %v1691 = vcosq.f32.pop %v1689
        %v1692 = vsinq.f32.pop %v1689
        %vm1693 = vweird.f32 %v1384
        %v1694 = vadd.s32 %v1690, 3
        %v1695 = vand.u32 %v1694, 3
        %vm1696 = vcmp.lt.s32.totalorder %v1695, 2
        %vm1697 = vcmp.eq.s32.totalorder %v1695, 0
        %v1698 = vxor.u32 %v1692, 2147483648
        %v1699 = vsel %vm1697, %v1691, %v1698
        %vm1700 = vcmp.eq.s32.totalorder %v1695, 2
        %v1701 = vxor.u32 %v1691, 2147483648
        %v1702 = vsel %vm1700, %v1701, %v1692
        %v1703 = vsel %vm1696, %v1699, %v1702
        %v1704 = vsel %vm1693, nan, %v1703
        %v1705 = vand.u32 2147483647, %v1390
        %vm1706 = vcmp.le.f32.partialorder %v1705, 0.7853982
        %vm1707 = vcmp.lt.s32.totalorder %v1390, 0
        %v1708 = vand.u32 %v1390, 2139095040
        %v1709 = vshrl.u32 %v1708, 23
        %v1710 = vsub.s32 %v1709, 127
        %v1711 = vand.u32 2147483647, %v1390
        %v1712 = vand.u32 %v1711, 8388607
        %v1713 = vor.u32 %v1712, 8388608
        %v1714 = vsub.s32 0, %v1713
        %v1715 = vadd.s32 %v1710, 1
        %vm1716 = vcmp.gt.s32.totalorder %v1715, 0
        %v1717 = vsel %vm1716, %v1715, 0
        %v1718 = vshrl.u32 %v1717, 5
        %v1719 = vand.u32 %v1717, 31
        %v1720 = vsub.s32 32, %v1719
        %v1721 = vshrl.u32 683565275, %v1720
        %v1722 = vshll.u32 683565275, %v1719
        %v1723 = vshrl.u32 2475754826, %v1720
        %v1724 = vor.u32 %v1722, %v1723
        %v1725 = vshll.u32 2475754826, %v1719
        %v1726 = vshrl.u32 2131351028, %v1720
        %v1727 = vor.u32 %v1725, %v1726
        %v1728 = vshll.u32 2131351028, %v1719
        %v1729 = vshrl.u32 2102212464, %v1720
        %v1730 = vor.u32 %v1728, %v1729
        %v1731 = vshll.u32 2102212464, %v1719
        %v1732 = vshrl.u32 920167782, %v1720
        %v1733 = vor.u32 %v1731, %v1732
        %v1734 = vshll.u32 920167782, %v1719
        %v1735 = vshrl.u32 1326507024, %v1720
        %v1736 = vor.u32 %v1734, %v1735
        %vm1737 = vcmp.lt.s32.totalorder %v1718, 1
        %vm1738 = vcmp.lt.s32.totalorder %v1718, 2
        %vm1739 = vcmp.lt.s32.totalorder %v1718, 3
        %vm1740 = vcmp.lt.s32.totalorder %v1718, 4
        %v1741 = vsel %vm1737, %v1721, %v1724
        %v1742 = vsel %vm1740, %v1730, 2102212464
        %v1743 = vsel %vm1739, %v1727, %v1742
        %v1744 = vsel %vm1738, %v1741, %v1743
        %v1745 = vsel %vm1737, %v1724, %v1727
        %v1746 = vsel %vm1740, %v1733, 920167782
        %v1747 = vsel %vm1739, %v1730, %v1746
        %v1748 = vsel %vm1738, %v1745, %v1747
        %v1749 = vsel %vm1737, %v1727, %v1730
        %v1750 = vsel %vm1740, %v1736, 1326507024
        %v1751 = vsel %vm1739, %v1733, %v1750
        %v1752 = vsel %vm1738, %v1749, %v1751
        %v1753 = vshll.u32 %v1713, 8
        %v1754 = vmul.u32.u64.compose %v1753, %v1752
        %v1755 = vextract.low.u32 %v1754
        %v1756 = vextract.high.u32 %v1754
        %v1757 = vmul.u32.u64.compose %v1753, %v1748
        %v1758 = vextract.low.u32 %v1757
        %v1759 = vextract.high.u32 %v1757
        %v1760 = vmul.u32 %v1753, %v1744
        %v1761 = vadd.s32 %v1756, %v1758
        %vm1762 = vc.u32 %v1756, %v1758
        %v1763 = vadd.s32 %v1759, 1
        %v1764 = vsel %vm1762, %v1763, %v1759
        %v1765 = vadd.s32 %v1760, %v1764
        %v1766 = vadd.s32 %v1765, 536870912
        %v1767 = vshrl.u32 %v1766, 30
        %v1768 = vshll.u32 %v1767, 30
        %v1769 = vsub.s32 %v1765, %v1768
        %vm1770 = vcmp.lt.s32.totalorder %v1769, 0
        %v1771 = vsub.s32 0, %v1769
        %v1772 = vsel %vm1770, %v1771, %v1769
        %v1773 = vclz %v1772
        %v1774 = vsub.s32 %v1773, 2
        %vm1775 = vcmp.gt.s32.totalorder 0, %v1774
        %v1776 = vsel %vm1775, 0, %v1774
        %v1777 = vsub.s32 32, %v1776
        %v1778 = vshll.u32 %v1769, %v1776
        %v1779 = vshrl.u32 %v1761, %v1777
        %v1780 = vor.u32 %v1778, %v1779
        %v1781 = vsub.s32 4294967266, %v1776
        %v1782 = vadd.s32 %v1781, 127
        %v1783 = vshll.u32 %v1782, 23
        %v1784 = vor.u32 4788187, %v1783
        %v1785 = vand.u32 2147483647, %v1784
        %v1787 = vcvt.s32.f32 %v1780
        %v1788 = vmul.f32 %v1787, %v1785
        %v1789 = vxor.u32 %v1788, 2147483648
        %v1790 = vsel %vm1707, %v1789, %v1788
        %v1791 = vsub.s32 4, %v1767
        %v1792 = vsel %vm1707, %v1791, %v1767
        %v1793 = vsel %vm1706, %v1390, %v1790
        %v1794 = vsel %vm1706, 0, %v1792
        %v1795 = vcosq.f32.pop %v1793
        %v1796 = vsinq.f32.pop %v1793
        %vm1797 = vweird.f32 %v1390
        %v1798 = vadd.s32 %v1794, 3
        %v1799 = vand.u32 %v1798, 3
        %vm1800 = vcmp.lt.s32.totalorder %v1799, 2
        %vm1801 = vcmp.eq.s32.totalorder %v1799, 0
        %v1802 = vxor.u32 %v1796, 2147483648
        %v1803 = vsel %vm1801, %v1795, %v1802
        %vm1804 = vcmp.eq.s32.totalorder %v1799, 2
        %v1805 = vxor.u32 %v1795, 2147483648
        %v1806 = vsel %vm1804, %v1805, %v1796
        %v1807 = vsel %vm1800, %v1803, %v1806
        %v1808 = vsel %vm1797, nan, %v1807
        %1810 = vset.pattern.permute.xlu0 0
        %1811 = vperm.xlu0 %1810, %v294
        %v1812 = vpop.permute.xlu0 %1811
        %1815 = vset.pattern.permute.xlu0 0
        %1816 = vperm.xlu0 %1815, %v295
        %v1817 = vpop.permute.xlu0 %1816
        %1820 = vset.pattern.permute.xlu0 0
        %1821 = vperm.xlu0 %1820, %v296
        %v1822 = vpop.permute.xlu0 %1821
        %1825 = vset.pattern.permute.xlu0 0
        %1826 = vperm.xlu0 %1825, %v297
        %v1827 = vpop.permute.xlu0 %1826
        %v1830 = vsel %vm766, %v285, 0
        %v1833 = vsel %vm766, %v286, 0
        %v1836 = vsel %vm766, %v287, 0
        %v1839 = vsel %vm766, %v288, 0
        %1841 = vmatprep.subr.mxu0 0.0
        %1842 = vmatpush1.msra.mxu0 0.0
        %1843 = vmatprep.subr.mxu0 0.0
        %1844 = vmatpush1.msra.mxu0 0.0
        %1845 = vmatprep.subr.mxu0 0.0
        %1846 = vmatpush1.msra.mxu0 0.0
        %1847 = vmatprep.subr.mxu0 0.0
        %1848 = vmatpush1.msra.mxu0 0.0
        %1849 = vmatprep.subr.mxu0 0.0
        %1850 = vmatpush1.msra.mxu0 0.0
        %1851 = vmatprep.subr.mxu0 0.0
        %1852 = vmatpush1.msra.mxu0 0.0
        %1853 = vmatprep.subr.mxu0 0.0
        %1854 = vmatpush1.msra.mxu0 0.0
        %1855 = vmatprep.subr.mxu0 0.0
        %1856 = vmatpush1.msra.mxu0 0.0
        %1857 = vmatprep.subr.mxu0 0.0
        %1858 = vmatpush1.msra.mxu0 0.0
        %1859 = vmatprep.subr.mxu0 0.0
        %1860 = vmatpush1.msra.mxu0 0.0
        %1861 = vmatprep.subr.mxu0 0.0
        %1862 = vmatpush1.msra.mxu0 0.0
        %1863 = vmatprep.subr.mxu0 0.0
        %1864 = vmatpush1.msra.mxu0 0.0
        %1865 = vmatprep.subr.mxu0 0.0
        %v1866 = vand.u32 %v1808, 4294901760
        %1867 = vmatpush1.msra.mxu0 %v1866
        %1868 = vmatprep.subr.mxu0 0.0
        %v1869 = vand.u32 %v1704, 4294901760
        %1870 = vmatpush1.msra.mxu0 %v1869
        %1871 = vmatprep.subr.mxu0 0.0
        %v1872 = vand.u32 %v1600, 4294901760
        %1873 = vmatpush1.msra.mxu0 %v1872
        %1874 = vmatprep.subr.mxu0 0.0
        %v1875 = vand.u32 %v1496, 4294901760
        %1876 = vmatpush1.msra.mxu0 %v1875
        %1877 = vmatprep.subr.mxu0 0.0
        %1878 = vmatpush2.msra.mxu0 0.0
        %1879 = vmatprep.subr.mxu0 0.0
        %1880 = vmatpush2.msra.mxu0 0.0
        %1881 = vmatprep.subr.mxu0 0.0
        %1882 = vmatpush2.msra.mxu0 0.0
        %1883 = vmatprep.subr.mxu0 0.0
        %1884 = vmatpush2.msra.mxu0 0.0
        %1885 = vmatprep.subr.mxu0 0.0
        %1886 = vmatpush2.msra.mxu0 0.0
        %1887 = vmatprep.subr.mxu0 0.0
        %1888 = vmatpush2.msra.mxu0 0.0
        %1889 = vmatprep.subr.mxu0 0.0
        %1890 = vmatpush2.msra.mxu0 0.0
        %1891 = vmatprep.subr.mxu0 0.0
        %1892 = vmatpush2.msra.mxu0 0.0
        %1893 = vmatprep.subr.mxu0 0.0
        %1894 = vmatpush2.msra.mxu0 0.0
        %1895 = vmatprep.subr.mxu0 0.0
        %1896 = vmatpush2.msra.mxu0 0.0
        %1897 = vmatprep.subr.mxu0 0.0
        %1898 = vmatpush2.msra.mxu0 0.0
        %1899 = vmatprep.subr.mxu0 0.0
        %1900 = vmatpush2.msra.mxu0 0.0
        %1901 = vmatprep.subr.mxu0 0.0
        %1902 = vmatpush2.msra.mxu0 0.0
        %1903 = vmatprep.subr.mxu0 0.0
        %1904 = vmatpush2.msra.mxu0 0.0
        %1905 = vmatprep.subr.mxu0 0.0
        %1906 = vmatpush2.msra.mxu0 0.0
        %1907 = vmatprep.subr.mxu0 0.0
        %1908 = vmatpush2.msra.mxu0 0.0
        %1909 = vmatprep.mubr.f32.mxu0 0.0
        %v1910 = vand.u32 %v1830, 4294901760
        %v1911 = vsub.f32 %v1830, %v1910
        %v1912 = vand.u32 %v1911, 4294901760
        %v1913 = vsub.f32 %v1911, %v1912
        %v1914 = vand.u32 %v1913, 4294901760
        %1915 = vmatmul.mubr.f32.gmra.mxu0 %v1914
        %v1916 = vpop.f32.mrf.mxu0
        %v1917 = vadd.f32 %v1812, %v1916
        %v1918 = vpop.f32.mrf.mxu0
        %1919 = vmatprep.mubr.f32.mxu0 0.0
        %v1920 = vand.u32 %v1833, 4294901760
        %v1921 = vsub.f32 %v1833, %v1920
        %v1922 = vand.u32 %v1921, 4294901760
        %v1923 = vsub.f32 %v1921, %v1922
        %v1924 = vand.u32 %v1923, 4294901760
        %1925 = vmatmul.mubr.f32.gmra.mxu0 %v1924
        %v1926 = vpop.f32.mrf.mxu0
        %v1927 = vadd.f32 %v1817, %v1926
        %v1928 = vpop.f32.mrf.mxu0
        %1929 = vmatprep.mubr.f32.mxu0 0.0
        %v1930 = vand.u32 %v1836, 4294901760
        %v1931 = vsub.f32 %v1836, %v1930
        %v1932 = vand.u32 %v1931, 4294901760
        %v1933 = vsub.f32 %v1931, %v1932
        %v1934 = vand.u32 %v1933, 4294901760
        %1935 = vmatmul.mubr.f32.gmra.mxu0 %v1934
        %v1936 = vpop.f32.mrf.mxu0
        %v1937 = vadd.f32 %v1822, %v1936
        %v1938 = vpop.f32.mrf.mxu0
        %1939 = vmatprep.mubr.f32.mxu0 0.0
        %v1940 = vand.u32 %v1839, 4294901760
        %v1941 = vsub.f32 %v1839, %v1940
        %v1942 = vand.u32 %v1941, 4294901760
        %v1943 = vsub.f32 %v1941, %v1942
        %v1944 = vand.u32 %v1943, 4294901760
        %1945 = vmatmul.mubr.f32.gmra.mxu0 %v1944
        %v1946 = vpop.f32.mrf.mxu0
        %v1947 = vadd.f32 %v1827, %v1946
        %v1948 = vpop.f32.mrf.mxu0
        %1949 = vdwg.mxu0
        %1950 = vmatprep.subr.mxu0 0.0
        %1951 = vmatpush1.msra.mxu0 0.0
        %1952 = vmatprep.subr.mxu0 0.0
        %1953 = vmatpush1.msra.mxu0 0.0
        %1954 = vmatprep.subr.mxu0 0.0
        %1955 = vmatpush1.msra.mxu0 0.0
        %1956 = vmatprep.subr.mxu0 0.0
        %1957 = vmatpush1.msra.mxu0 0.0
        %1958 = vmatprep.subr.mxu0 0.0
        %1959 = vmatpush1.msra.mxu0 0.0
        %1960 = vmatprep.subr.mxu0 0.0
        %1961 = vmatpush1.msra.mxu0 0.0
        %1962 = vmatprep.subr.mxu0 0.0
        %1963 = vmatpush1.msra.mxu0 0.0
        %1964 = vmatprep.subr.mxu0 0.0
        %1965 = vmatpush1.msra.mxu0 0.0
        %1966 = vmatprep.subr.mxu0 0.0
        %1967 = vmatpush1.msra.mxu0 0.0
        %1968 = vmatprep.subr.mxu0 0.0
        %1969 = vmatpush1.msra.mxu0 0.0
        %1970 = vmatprep.subr.mxu0 0.0
        %1971 = vmatpush1.msra.mxu0 0.0
        %1972 = vmatprep.subr.mxu0 0.0
        %1973 = vmatpush1.msra.mxu0 0.0
        %1974 = vmatprep.subr.mxu0 0.0
        %v1975 = vand.u32 %v1808, 4294901760
        %v1976 = vsub.f32 %v1808, %v1975
        %v1977 = vand.u32 %v1976, 4294901760
        %v1978 = vsub.f32 %v1976, %v1977
        %v1979 = vand.u32 %v1978, 4294901760
        %1980 = vmatpush1.msra.mxu0 %v1979
        %1981 = vmatprep.subr.mxu0 0.0
        %v1982 = vand.u32 %v1704, 4294901760
        %v1983 = vsub.f32 %v1704, %v1982
        %v1984 = vand.u32 %v1983, 4294901760
        %v1985 = vsub.f32 %v1983, %v1984
        %v1986 = vand.u32 %v1985, 4294901760
        %1987 = vmatpush1.msra.mxu0 %v1986
        %1988 = vmatprep.subr.mxu0 0.0
        %v1989 = vand.u32 %v1600, 4294901760
        %v1990 = vsub.f32 %v1600, %v1989
        %v1991 = vand.u32 %v1990, 4294901760
        %v1992 = vsub.f32 %v1990, %v1991
        %v1993 = vand.u32 %v1992, 4294901760
        %1994 = vmatpush1.msra.mxu0 %v1993
        %1995 = vmatprep.subr.mxu0 0.0
        %v1996 = vand.u32 %v1496, 4294901760
        %v1997 = vsub.f32 %v1496, %v1996
        %v1998 = vand.u32 %v1997, 4294901760
        %v1999 = vsub.f32 %v1997, %v1998
        %v2000 = vand.u32 %v1999, 4294901760
        %2001 = vmatpush1.msra.mxu0 %v2000
        %2002 = vmatprep.subr.mxu0 0.0
        %2003 = vmatpush2.msra.mxu0 0.0
        %2004 = vmatprep.subr.mxu0 0.0
        %2005 = vmatpush2.msra.mxu0 0.0
        %2006 = vmatprep.subr.mxu0 0.0
        %2007 = vmatpush2.msra.mxu0 0.0
        %2008 = vmatprep.subr.mxu0 0.0
        %2009 = vmatpush2.msra.mxu0 0.0
        %2010 = vmatprep.subr.mxu0 0.0
        %2011 = vmatpush2.msra.mxu0 0.0
        %2012 = vmatprep.subr.mxu0 0.0
        %2013 = vmatpush2.msra.mxu0 0.0
        %2014 = vmatprep.subr.mxu0 0.0
        %2015 = vmatpush2.msra.mxu0 0.0
        %2016 = vmatprep.subr.mxu0 0.0
        %2017 = vmatpush2.msra.mxu0 0.0
        %2018 = vmatprep.subr.mxu0 0.0
        %2019 = vmatpush2.msra.mxu0 0.0
        %2020 = vmatprep.subr.mxu0 0.0
        %2021 = vmatpush2.msra.mxu0 0.0
        %2022 = vmatprep.subr.mxu0 0.0
        %2023 = vmatpush2.msra.mxu0 0.0
        %2024 = vmatprep.subr.mxu0 0.0
        %2025 = vmatpush2.msra.mxu0 0.0
        %2026 = vmatprep.subr.mxu0 0.0
        %2027 = vmatpush2.msra.mxu0 0.0
        %2028 = vmatprep.subr.mxu0 0.0
        %2029 = vmatpush2.msra.mxu0 0.0
        %2030 = vmatprep.subr.mxu0 0.0
        %2031 = vmatpush2.msra.mxu0 0.0
        %2032 = vmatprep.subr.mxu0 0.0
        %2033 = vmatpush2.msra.mxu0 0.0
        %2034 = vmatprep.mubr.f32.mxu0 0.0
        %v2035 = vand.u32 %v1830, 4294901760
        %2036 = vmatmul.mubr.f32.gmra.mxu0 %v2035
        %v2037 = vpop.f32.mrf.mxu0
        %v2038 = vadd.f32 %v1917, %v2037
        %v2039 = vpop.f32.mrf.mxu0
        %2040 = vmatprep.mubr.f32.mxu0 0.0
        %v2041 = vand.u32 %v1833, 4294901760
        %2042 = vmatmul.mubr.f32.gmra.mxu0 %v2041
        %v2043 = vpop.f32.mrf.mxu0
        %v2044 = vadd.f32 %v1927, %v2043
        %v2045 = vpop.f32.mrf.mxu0
        %2046 = vmatprep.mubr.f32.mxu0 0.0
        %v2047 = vand.u32 %v1836, 4294901760
        %2048 = vmatmul.mubr.f32.gmra.mxu0 %v2047
        %v2049 = vpop.f32.mrf.mxu0
        %v2050 = vadd.f32 %v1937, %v2049
        %v2051 = vpop.f32.mrf.mxu0
        %2052 = vmatprep.mubr.f32.mxu0 0.0
        %v2053 = vand.u32 %v1839, 4294901760
        %2054 = vmatmul.mubr.f32.gmra.mxu0 %v2053
        %v2055 = vpop.f32.mrf.mxu0
        %v2056 = vadd.f32 %v1947, %v2055
        %v2057 = vpop.f32.mrf.mxu0
        %2058 = vdwg.mxu0
        %2059 = vmatprep.subr.mxu0 0.0
        %2060 = vmatpush1.msra.mxu0 0.0
        %2061 = vmatprep.subr.mxu0 0.0
        %2062 = vmatpush1.msra.mxu0 0.0
        %2063 = vmatprep.subr.mxu0 0.0
        %2064 = vmatpush1.msra.mxu0 0.0
        %2065 = vmatprep.subr.mxu0 0.0
        %2066 = vmatpush1.msra.mxu0 0.0
        %2067 = vmatprep.subr.mxu0 0.0
        %2068 = vmatpush1.msra.mxu0 0.0
        %2069 = vmatprep.subr.mxu0 0.0
        %2070 = vmatpush1.msra.mxu0 0.0
        %2071 = vmatprep.subr.mxu0 0.0
        %2072 = vmatpush1.msra.mxu0 0.0
        %2073 = vmatprep.subr.mxu0 0.0
        %2074 = vmatpush1.msra.mxu0 0.0
        %2075 = vmatprep.subr.mxu0 0.0
        %2076 = vmatpush1.msra.mxu0 0.0
        %2077 = vmatprep.subr.mxu0 0.0
        %2078 = vmatpush1.msra.mxu0 0.0
        %2079 = vmatprep.subr.mxu0 0.0
        %2080 = vmatpush1.msra.mxu0 0.0
        %2081 = vmatprep.subr.mxu0 0.0
        %2082 = vmatpush1.msra.mxu0 0.0
        %2083 = vmatprep.subr.mxu0 0.0
        %v2084 = vand.u32 %v1808, 4294901760
        %v2085 = vsub.f32 %v1808, %v2084
        %2086 = vmatpush1.msra.mxu0 %v2085
        %2087 = vmatprep.subr.mxu0 0.0
        %v2088 = vand.u32 %v1704, 4294901760
        %v2089 = vsub.f32 %v1704, %v2088
        %2090 = vmatpush1.msra.mxu0 %v2089
        %2091 = vmatprep.subr.mxu0 0.0
        %v2092 = vand.u32 %v1600, 4294901760
        %v2093 = vsub.f32 %v1600, %v2092
        %2094 = vmatpush1.msra.mxu0 %v2093
        %2095 = vmatprep.subr.mxu0 0.0
        %v2096 = vand.u32 %v1496, 4294901760
        %v2097 = vsub.f32 %v1496, %v2096
        %2098 = vmatpush1.msra.mxu0 %v2097
        %2099 = vmatprep.subr.mxu0 0.0
        %2100 = vmatpush2.msra.mxu0 0.0
        %2101 = vmatprep.subr.mxu0 0.0
        %2102 = vmatpush2.msra.mxu0 0.0
        %2103 = vmatprep.subr.mxu0 0.0
        %2104 = vmatpush2.msra.mxu0 0.0
        %2105 = vmatprep.subr.mxu0 0.0
        %2106 = vmatpush2.msra.mxu0 0.0
        %2107 = vmatprep.subr.mxu0 0.0
        %2108 = vmatpush2.msra.mxu0 0.0
        %2109 = vmatprep.subr.mxu0 0.0
        %2110 = vmatpush2.msra.mxu0 0.0
        %2111 = vmatprep.subr.mxu0 0.0
        %2112 = vmatpush2.msra.mxu0 0.0
        %2113 = vmatprep.subr.mxu0 0.0
        %2114 = vmatpush2.msra.mxu0 0.0
        %2115 = vmatprep.subr.mxu0 0.0
        %2116 = vmatpush2.msra.mxu0 0.0
        %2117 = vmatprep.subr.mxu0 0.0
        %2118 = vmatpush2.msra.mxu0 0.0
        %2119 = vmatprep.subr.mxu0 0.0
        %2120 = vmatpush2.msra.mxu0 0.0
        %2121 = vmatprep.subr.mxu0 0.0
        %2122 = vmatpush2.msra.mxu0 0.0
        %2123 = vmatprep.subr.mxu0 0.0
        %2124 = vmatpush2.msra.mxu0 0.0
        %2125 = vmatprep.subr.mxu0 0.0
        %2126 = vmatpush2.msra.mxu0 0.0
        %2127 = vmatprep.subr.mxu0 0.0
        %2128 = vmatpush2.msra.mxu0 0.0
        %2129 = vmatprep.subr.mxu0 0.0
        %2130 = vmatpush2.msra.mxu0 0.0
        %2131 = vmatprep.mubr.f32.mxu0 0.0
        %v2132 = vand.u32 %v1830, 4294901760
        %v2133 = vsub.f32 %v1830, %v2132
        %2134 = vmatmul.mubr.f32.gmra.mxu0 %v2133
        %v2135 = vpop.f32.mrf.mxu0
        %v2136 = vadd.f32 %v2038, %v2135
        %v2137 = vpop.f32.mrf.mxu0
        %2138 = vmatprep.mubr.f32.mxu0 0.0
        %v2139 = vand.u32 %v1833, 4294901760
        %v2140 = vsub.f32 %v1833, %v2139
        %2141 = vmatmul.mubr.f32.gmra.mxu0 %v2140
        %v2142 = vpop.f32.mrf.mxu0
        %v2143 = vadd.f32 %v2044, %v2142
        %v2144 = vpop.f32.mrf.mxu0
        %2145 = vmatprep.mubr.f32.mxu0 0.0
        %v2146 = vand.u32 %v1836, 4294901760
        %v2147 = vsub.f32 %v1836, %v2146
        %2148 = vmatmul.mubr.f32.gmra.mxu0 %v2147
        %v2149 = vpop.f32.mrf.mxu0
        %v2150 = vadd.f32 %v2050, %v2149
        %v2151 = vpop.f32.mrf.mxu0
        %2152 = vmatprep.mubr.f32.mxu0 0.0
        %v2153 = vand.u32 %v1839, 4294901760
        %v2154 = vsub.f32 %v1839, %v2153
        %2155 = vmatmul.mubr.f32.gmra.mxu0 %v2154
        %v2156 = vpop.f32.mrf.mxu0
        %v2157 = vadd.f32 %v2056, %v2156
        %v2158 = vpop.f32.mrf.mxu0
        %2159 = vdwg.mxu0
        %2160 = vmatprep.subr.mxu0 0.0
        %2161 = vmatpush1.msra.mxu0 0.0
        %2162 = vmatprep.subr.mxu0 0.0
        %2163 = vmatpush1.msra.mxu0 0.0
        %2164 = vmatprep.subr.mxu0 0.0
        %2165 = vmatpush1.msra.mxu0 0.0
        %2166 = vmatprep.subr.mxu0 0.0
        %2167 = vmatpush1.msra.mxu0 0.0
        %2168 = vmatprep.subr.mxu0 0.0
        %2169 = vmatpush1.msra.mxu0 0.0
        %2170 = vmatprep.subr.mxu0 0.0
        %2171 = vmatpush1.msra.mxu0 0.0
        %2172 = vmatprep.subr.mxu0 0.0
        %2173 = vmatpush1.msra.mxu0 0.0
        %2174 = vmatprep.subr.mxu0 0.0
        %2175 = vmatpush1.msra.mxu0 0.0
        %2176 = vmatprep.subr.mxu0 0.0
        %2177 = vmatpush1.msra.mxu0 0.0
        %2178 = vmatprep.subr.mxu0 0.0
        %2179 = vmatpush1.msra.mxu0 0.0
        %2180 = vmatprep.subr.mxu0 0.0
        %2181 = vmatpush1.msra.mxu0 0.0
        %2182 = vmatprep.subr.mxu0 0.0
        %2183 = vmatpush1.msra.mxu0 0.0
        %2184 = vmatprep.subr.mxu0 0.0
        %v2185 = vand.u32 %v1808, 4294901760
        %2186 = vmatpush1.msra.mxu0 %v2185
        %2187 = vmatprep.subr.mxu0 0.0
        %v2188 = vand.u32 %v1704, 4294901760
        %2189 = vmatpush1.msra.mxu0 %v2188
        %2190 = vmatprep.subr.mxu0 0.0
        %v2191 = vand.u32 %v1600, 4294901760
        %2192 = vmatpush1.msra.mxu0 %v2191
        %2193 = vmatprep.subr.mxu0 0.0
        %v2194 = vand.u32 %v1496, 4294901760
        %2195 = vmatpush1.msra.mxu0 %v2194
        %2196 = vmatprep.subr.mxu0 0.0
        %2197 = vmatpush2.msra.mxu0 0.0
        %2198 = vmatprep.subr.mxu0 0.0
        %2199 = vmatpush2.msra.mxu0 0.0
        %2200 = vmatprep.subr.mxu0 0.0
        %2201 = vmatpush2.msra.mxu0 0.0
        %2202 = vmatprep.subr.mxu0 0.0
        %2203 = vmatpush2.msra.mxu0 0.0
        %2204 = vmatprep.subr.mxu0 0.0
        %2205 = vmatpush2.msra.mxu0 0.0
        %2206 = vmatprep.subr.mxu0 0.0
        %2207 = vmatpush2.msra.mxu0 0.0
        %2208 = vmatprep.subr.mxu0 0.0
        %2209 = vmatpush2.msra.mxu0 0.0
        %2210 = vmatprep.subr.mxu0 0.0
        %2211 = vmatpush2.msra.mxu0 0.0
        %2212 = vmatprep.subr.mxu0 0.0
        %2213 = vmatpush2.msra.mxu0 0.0
        %2214 = vmatprep.subr.mxu0 0.0
        %2215 = vmatpush2.msra.mxu0 0.0
        %2216 = vmatprep.subr.mxu0 0.0
        %2217 = vmatpush2.msra.mxu0 0.0
        %2218 = vmatprep.subr.mxu0 0.0
        %2219 = vmatpush2.msra.mxu0 0.0
        %2220 = vmatprep.subr.mxu0 0.0
        %2221 = vmatpush2.msra.mxu0 0.0
        %2222 = vmatprep.subr.mxu0 0.0
        %2223 = vmatpush2.msra.mxu0 0.0
        %2224 = vmatprep.subr.mxu0 0.0
        %2225 = vmatpush2.msra.mxu0 0.0
        %2226 = vmatprep.subr.mxu0 0.0
        %2227 = vmatpush2.msra.mxu0 0.0
        %2228 = vmatprep.mubr.f32.mxu0 0.0
        %v2229 = vand.u32 %v1830, 4294901760
        %v2230 = vsub.f32 %v1830, %v2229
        %v2231 = vand.u32 %v2230, 4294901760
        %2232 = vmatmul.mubr.f32.gmra.mxu0 %v2231
        %v2233 = vpop.f32.mrf.mxu0
        %v2234 = vadd.f32 %v2136, %v2233
        %v2235 = vpop.f32.mrf.mxu0
        %2236 = vmatprep.mubr.f32.mxu0 0.0
        %v2237 = vand.u32 %v1833, 4294901760
        %v2238 = vsub.f32 %v1833, %v2237
        %v2239 = vand.u32 %v2238, 4294901760
        %2240 = vmatmul.mubr.f32.gmra.mxu0 %v2239
        %v2241 = vpop.f32.mrf.mxu0
        %v2242 = vadd.f32 %v2143, %v2241
        %v2243 = vpop.f32.mrf.mxu0
        %2244 = vmatprep.mubr.f32.mxu0 0.0
        %v2245 = vand.u32 %v1836, 4294901760
        %v2246 = vsub.f32 %v1836, %v2245
        %v2247 = vand.u32 %v2246, 4294901760
        %2248 = vmatmul.mubr.f32.gmra.mxu0 %v2247
        %v2249 = vpop.f32.mrf.mxu0
        %v2250 = vadd.f32 %v2150, %v2249
        %v2251 = vpop.f32.mrf.mxu0
        %2252 = vmatprep.mubr.f32.mxu0 0.0
        %v2253 = vand.u32 %v1839, 4294901760
        %v2254 = vsub.f32 %v1839, %v2253
        %v2255 = vand.u32 %v2254, 4294901760
        %2256 = vmatmul.mubr.f32.gmra.mxu0 %v2255
        %v2257 = vpop.f32.mrf.mxu0
        %v2258 = vadd.f32 %v2157, %v2257
        %v2259 = vpop.f32.mrf.mxu0
        %2260 = vdwg.mxu0
        %2261 = vmatprep.subr.mxu0 0.0
        %2262 = vmatpush1.msra.mxu0 0.0
        %2263 = vmatprep.subr.mxu0 0.0
        %2264 = vmatpush1.msra.mxu0 0.0
        %2265 = vmatprep.subr.mxu0 0.0
        %2266 = vmatpush1.msra.mxu0 0.0
        %2267 = vmatprep.subr.mxu0 0.0
        %2268 = vmatpush1.msra.mxu0 0.0
        %2269 = vmatprep.subr.mxu0 0.0
        %2270 = vmatpush1.msra.mxu0 0.0
        %2271 = vmatprep.subr.mxu0 0.0
        %2272 = vmatpush1.msra.mxu0 0.0
        %2273 = vmatprep.subr.mxu0 0.0
        %2274 = vmatpush1.msra.mxu0 0.0
        %2275 = vmatprep.subr.mxu0 0.0
        %2276 = vmatpush1.msra.mxu0 0.0
        %2277 = vmatprep.subr.mxu0 0.0
        %2278 = vmatpush1.msra.mxu0 0.0
        %2279 = vmatprep.subr.mxu0 0.0
        %2280 = vmatpush1.msra.mxu0 0.0
        %2281 = vmatprep.subr.mxu0 0.0
        %2282 = vmatpush1.msra.mxu0 0.0
        %2283 = vmatprep.subr.mxu0 0.0
        %2284 = vmatpush1.msra.mxu0 0.0
        %2285 = vmatprep.subr.mxu0 0.0
        %v2286 = vand.u32 %v1808, 4294901760
        %v2287 = vsub.f32 %v1808, %v2286
        %v2288 = vand.u32 %v2287, 4294901760
        %2289 = vmatpush1.msra.mxu0 %v2288
        %2290 = vmatprep.subr.mxu0 0.0
        %v2291 = vand.u32 %v1704, 4294901760
        %v2292 = vsub.f32 %v1704, %v2291
        %v2293 = vand.u32 %v2292, 4294901760
        %2294 = vmatpush1.msra.mxu0 %v2293
        %2295 = vmatprep.subr.mxu0 0.0
        %v2296 = vand.u32 %v1600, 4294901760
        %v2297 = vsub.f32 %v1600, %v2296
        %v2298 = vand.u32 %v2297, 4294901760
        %2299 = vmatpush1.msra.mxu0 %v2298
        %2300 = vmatprep.subr.mxu0 0.0
        %v2301 = vand.u32 %v1496, 4294901760
        %v2302 = vsub.f32 %v1496, %v2301
        %v2303 = vand.u32 %v2302, 4294901760
        %2304 = vmatpush1.msra.mxu0 %v2303
        %2305 = vmatprep.subr.mxu0 0.0
        %2306 = vmatpush2.msra.mxu0 0.0
        %2307 = vmatprep.subr.mxu0 0.0
        %2308 = vmatpush2.msra.mxu0 0.0
        %2309 = vmatprep.subr.mxu0 0.0
        %2310 = vmatpush2.msra.mxu0 0.0
        %2311 = vmatprep.subr.mxu0 0.0
        %2312 = vmatpush2.msra.mxu0 0.0
        %2313 = vmatprep.subr.mxu0 0.0
        %2314 = vmatpush2.msra.mxu0 0.0
        %2315 = vmatprep.subr.mxu0 0.0
        %2316 = vmatpush2.msra.mxu0 0.0
        %2317 = vmatprep.subr.mxu0 0.0
        %2318 = vmatpush2.msra.mxu0 0.0
        %2319 = vmatprep.subr.mxu0 0.0
        %2320 = vmatpush2.msra.mxu0 0.0
        %2321 = vmatprep.subr.mxu0 0.0
        %2322 = vmatpush2.msra.mxu0 0.0
        %2323 = vmatprep.subr.mxu0 0.0
        %2324 = vmatpush2.msra.mxu0 0.0
        %2325 = vmatprep.subr.mxu0 0.0
        %2326 = vmatpush2.msra.mxu0 0.0
        %2327 = vmatprep.subr.mxu0 0.0
        %2328 = vmatpush2.msra.mxu0 0.0
        %2329 = vmatprep.subr.mxu0 0.0
        %2330 = vmatpush2.msra.mxu0 0.0
        %2331 = vmatprep.subr.mxu0 0.0
        %2332 = vmatpush2.msra.mxu0 0.0
        %2333 = vmatprep.subr.mxu0 0.0
        %2334 = vmatpush2.msra.mxu0 0.0
        %2335 = vmatprep.subr.mxu0 0.0
        %2336 = vmatpush2.msra.mxu0 0.0
        %2337 = vmatprep.mubr.f32.mxu0 0.0
        %v2338 = vand.u32 %v1830, 4294901760
        %2339 = vmatmul.mubr.f32.gmra.mxu0 %v2338
        %v2340 = vpop.f32.mrf.mxu0
        %v2341 = vadd.f32 %v2234, %v2340
        %v2342 = vpop.f32.mrf.mxu0
        %2343 = vmatprep.mubr.f32.mxu0 0.0
        %v2344 = vand.u32 %v1833, 4294901760
        %2345 = vmatmul.mubr.f32.gmra.mxu0 %v2344
        %v2346 = vpop.f32.mrf.mxu0
        %v2347 = vadd.f32 %v2242, %v2346
        %v2348 = vpop.f32.mrf.mxu0
        %2349 = vmatprep.mubr.f32.mxu0 0.0
        %v2350 = vand.u32 %v1836, 4294901760
        %2351 = vmatmul.mubr.f32.gmra.mxu0 %v2350
        %v2352 = vpop.f32.mrf.mxu0
        %v2353 = vadd.f32 %v2250, %v2352
        %v2354 = vpop.f32.mrf.mxu0
        %2355 = vmatprep.mubr.f32.mxu0 0.0
        %v2356 = vand.u32 %v1839, 4294901760
        %2357 = vmatmul.mubr.f32.gmra.mxu0 %v2356
        %v2358 = vpop.f32.mrf.mxu0
        %v2359 = vadd.f32 %v2258, %v2358
        %v2360 = vpop.f32.mrf.mxu0
        %2361 = vdwg.mxu0
        %2362 = vmatprep.subr.mxu0 0.0
        %2363 = vmatpush1.msra.mxu0 0.0
        %2364 = vmatprep.subr.mxu0 0.0
        %2365 = vmatpush1.msra.mxu0 0.0
        %2366 = vmatprep.subr.mxu0 0.0
        %2367 = vmatpush1.msra.mxu0 0.0
        %2368 = vmatprep.subr.mxu0 0.0
        %2369 = vmatpush1.msra.mxu0 0.0
        %2370 = vmatprep.subr.mxu0 0.0
        %2371 = vmatpush1.msra.mxu0 0.0
        %2372 = vmatprep.subr.mxu0 0.0
        %2373 = vmatpush1.msra.mxu0 0.0
        %2374 = vmatprep.subr.mxu0 0.0
        %2375 = vmatpush1.msra.mxu0 0.0
        %2376 = vmatprep.subr.mxu0 0.0
        %2377 = vmatpush1.msra.mxu0 0.0
        %2378 = vmatprep.subr.mxu0 0.0
        %2379 = vmatpush1.msra.mxu0 0.0
        %2380 = vmatprep.subr.mxu0 0.0
        %2381 = vmatpush1.msra.mxu0 0.0
        %2382 = vmatprep.subr.mxu0 0.0
        %2383 = vmatpush1.msra.mxu0 0.0
        %2384 = vmatprep.subr.mxu0 0.0
        %2385 = vmatpush1.msra.mxu0 0.0
        %2386 = vmatprep.subr.mxu0 0.0
        %v2387 = vand.u32 %v1808, 4294901760
        %2388 = vmatpush1.msra.mxu0 %v2387
        %2389 = vmatprep.subr.mxu0 0.0
        %v2390 = vand.u32 %v1704, 4294901760
        %2391 = vmatpush1.msra.mxu0 %v2390
        %2392 = vmatprep.subr.mxu0 0.0
        %v2393 = vand.u32 %v1600, 4294901760
        %2394 = vmatpush1.msra.mxu0 %v2393
        %2395 = vmatprep.subr.mxu0 0.0
        %v2396 = vand.u32 %v1496, 4294901760
        %2397 = vmatpush1.msra.mxu0 %v2396
        %2398 = vmatprep.subr.mxu0 0.0
        %2399 = vmatpush2.msra.mxu0 0.0
        %2400 = vmatprep.subr.mxu0 0.0
        %2401 = vmatpush2.msra.mxu0 0.0
        %2402 = vmatprep.subr.mxu0 0.0
        %2403 = vmatpush2.msra.mxu0 0.0
        %2404 = vmatprep.subr.mxu0 0.0
        %2405 = vmatpush2.msra.mxu0 0.0
        %2406 = vmatprep.subr.mxu0 0.0
        %2407 = vmatpush2.msra.mxu0 0.0
        %2408 = vmatprep.subr.mxu0 0.0
        %2409 = vmatpush2.msra.mxu0 0.0
        %2410 = vmatprep.subr.mxu0 0.0
        %2411 = vmatpush2.msra.mxu0 0.0
        %2412 = vmatprep.subr.mxu0 0.0
        %2413 = vmatpush2.msra.mxu0 0.0
        %2414 = vmatprep.subr.mxu0 0.0
        %2415 = vmatpush2.msra.mxu0 0.0
        %2416 = vmatprep.subr.mxu0 0.0
        %2417 = vmatpush2.msra.mxu0 0.0
        %2418 = vmatprep.subr.mxu0 0.0
        %2419 = vmatpush2.msra.mxu0 0.0
        %2420 = vmatprep.subr.mxu0 0.0
        %2421 = vmatpush2.msra.mxu0 0.0
        %2422 = vmatprep.subr.mxu0 0.0
        %2423 = vmatpush2.msra.mxu0 0.0
        %2424 = vmatprep.subr.mxu0 0.0
        %2425 = vmatpush2.msra.mxu0 0.0
        %2426 = vmatprep.subr.mxu0 0.0
        %2427 = vmatpush2.msra.mxu0 0.0
        %2428 = vmatprep.subr.mxu0 0.0
        %2429 = vmatpush2.msra.mxu0 0.0
        %2430 = vmatprep.mubr.f32.mxu0 0.0
        %v2431 = vand.u32 %v1830, 4294901760
        %2432 = vmatmul.mubr.f32.gmra.mxu0 %v2431
        %v2433 = vpop.f32.mrf.mxu0
        %v2434 = vadd.f32 %v2341, %v2433
        %v2435 = vpop.f32.mrf.mxu0
        %2436 = vmatprep.mubr.f32.mxu0 0.0
        %v2437 = vand.u32 %v1833, 4294901760
        %2438 = vmatmul.mubr.f32.gmra.mxu0 %v2437
        %v2439 = vpop.f32.mrf.mxu0
        %v2440 = vadd.f32 %v2347, %v2439
        %v2441 = vpop.f32.mrf.mxu0
        %2442 = vmatprep.mubr.f32.mxu0 0.0
        %v2443 = vand.u32 %v1836, 4294901760
        %2444 = vmatmul.mubr.f32.gmra.mxu0 %v2443
        %v2445 = vpop.f32.mrf.mxu0
        %v2446 = vadd.f32 %v2353, %v2445
        %v2447 = vpop.f32.mrf.mxu0
        %2448 = vmatprep.mubr.f32.mxu0 0.0
        %v2449 = vand.u32 %v1839, 4294901760
        %2450 = vmatmul.mubr.f32.gmra.mxu0 %v2449
        %v2451 = vpop.f32.mrf.mxu0
        %v2452 = vadd.f32 %v2359, %v2451
        %v2453 = vpop.f32.mrf.mxu0
        %2454 = vdwg.mxu0
        %v2455 = vand.u32 2147483647, %v2434
        %vm2456 = vcmp.le.f32.partialorder %v2455, 0.7853982
        %vm2457 = vcmp.lt.s32.totalorder %v2434, 0
        %v2458 = vand.u32 %v2434, 2139095040
        %v2459 = vshrl.u32 %v2458, 23
        %v2460 = vsub.s32 %v2459, 127
        %v2461 = vand.u32 2147483647, %v2434
        %v2462 = vand.u32 %v2461, 8388607
        %v2463 = vor.u32 %v2462, 8388608
        %v2464 = vsub.s32 0, %v2463
        %v2465 = vadd.s32 %v2460, 1
        %vm2466 = vcmp.gt.s32.totalorder %v2465, 0
        %v2467 = vsel %vm2466, %v2465, 0
        %v2468 = vshrl.u32 %v2467, 5
        %v2469 = vand.u32 %v2467, 31
        %v2470 = vsub.s32 32, %v2469
        %v2471 = vshrl.u32 683565275, %v2470
        %v2472 = vshll.u32 683565275, %v2469
        %v2473 = vshrl.u32 2475754826, %v2470
        %v2474 = vor.u32 %v2472, %v2473
        %v2475 = vshll.u32 2475754826, %v2469
        %v2476 = vshrl.u32 2131351028, %v2470
        %v2477 = vor.u32 %v2475, %v2476
        %v2478 = vshll.u32 2131351028, %v2469
        %v2479 = vshrl.u32 2102212464, %v2470
        %v2480 = vor.u32 %v2478, %v2479
        %v2481 = vshll.u32 2102212464, %v2469
        %v2482 = vshrl.u32 920167782, %v2470
        %v2483 = vor.u32 %v2481, %v2482
        %v2484 = vshll.u32 920167782, %v2469
        %v2485 = vshrl.u32 1326507024, %v2470
        %v2486 = vor.u32 %v2484, %v2485
        %vm2487 = vcmp.lt.s32.totalorder %v2468, 1
        %vm2488 = vcmp.lt.s32.totalorder %v2468, 2
        %vm2489 = vcmp.lt.s32.totalorder %v2468, 3
        %vm2490 = vcmp.lt.s32.totalorder %v2468, 4
        %v2491 = vsel %vm2487, %v2471, %v2474
        %v2492 = vsel %vm2490, %v2480, 2102212464
        %v2493 = vsel %vm2489, %v2477, %v2492
        %v2494 = vsel %vm2488, %v2491, %v2493
        %v2495 = vsel %vm2487, %v2474, %v2477
        %v2496 = vsel %vm2490, %v2483, 920167782
        %v2497 = vsel %vm2489, %v2480, %v2496
        %v2498 = vsel %vm2488, %v2495, %v2497
        %v2499 = vsel %vm2487, %v2477, %v2480
        %v2500 = vsel %vm2490, %v2486, 1326507024
        %v2501 = vsel %vm2489, %v2483, %v2500
        %v2502 = vsel %vm2488, %v2499, %v2501
        %v2503 = vshll.u32 %v2463, 8
        %v2504 = vmul.u32.u64.compose %v2503, %v2502
        %v2505 = vextract.low.u32 %v2504
        %v2506 = vextract.high.u32 %v2504
        %v2507 = vmul.u32.u64.compose %v2503, %v2498
        %v2508 = vextract.low.u32 %v2507
        %v2509 = vextract.high.u32 %v2507
        %v2510 = vmul.u32 %v2503, %v2494
        %v2511 = vadd.s32 %v2506, %v2508
        %vm2512 = vc.u32 %v2506, %v2508
        %v2513 = vadd.s32 %v2509, 1
        %v2514 = vsel %vm2512, %v2513, %v2509
        %v2515 = vadd.s32 %v2510, %v2514
        %v2516 = vadd.s32 %v2515, 536870912
        %v2517 = vshrl.u32 %v2516, 30
        %v2518 = vshll.u32 %v2517, 30
        %v2519 = vsub.s32 %v2515, %v2518
        %vm2520 = vcmp.lt.s32.totalorder %v2519, 0
        %v2521 = vsub.s32 0, %v2519
        %v2522 = vsel %vm2520, %v2521, %v2519
        %v2523 = vclz %v2522
        %v2524 = vsub.s32 %v2523, 2
        %vm2525 = vcmp.gt.s32.totalorder 0, %v2524
        %v2526 = vsel %vm2525, 0, %v2524
        %v2527 = vsub.s32 32, %v2526
        %v2528 = vshll.u32 %v2519, %v2526
        %v2529 = vshrl.u32 %v2511, %v2527
        %v2530 = vor.u32 %v2528, %v2529
        %v2531 = vsub.s32 4294967266, %v2526
        %v2532 = vadd.s32 %v2531, 127
        %v2533 = vshll.u32 %v2532, 23
        %v2534 = vor.u32 4788187, %v2533
        %v2535 = vand.u32 2147483647, %v2534
        %v2537 = vcvt.s32.f32 %v2530
        %v2538 = vmul.f32 %v2537, %v2535
        %v2539 = vxor.u32 %v2538, 2147483648
        %v2540 = vsel %vm2457, %v2539, %v2538
        %v2541 = vsub.s32 4, %v2517
        %v2542 = vsel %vm2457, %v2541, %v2517
        %v2543 = vsel %vm2456, %v2434, %v2540
        %v2544 = vsel %vm2456, 0, %v2542
        %v2545 = vcosq.f32.pop %v2543
        %v2546 = vsinq.f32.pop %v2543
        %vm2547 = vweird.f32 %v2434
        %v2548 = vadd.s32 %v2544, 3
        %v2549 = vand.u32 %v2548, 3
        %vm2550 = vcmp.lt.s32.totalorder %v2549, 2
        %vm2551 = vcmp.eq.s32.totalorder %v2549, 0
        %v2552 = vxor.u32 %v2546, 2147483648
        %v2553 = vsel %vm2551, %v2545, %v2552
        %vm2554 = vcmp.eq.s32.totalorder %v2549, 2
        %v2555 = vxor.u32 %v2545, 2147483648
        %v2556 = vsel %vm2554, %v2555, %v2546
        %v2557 = vsel %vm2550, %v2553, %v2556
        %v2558 = vsel %vm2547, nan, %v2557
        %v2559 = vand.u32 2147483647, %v2440
        %vm2560 = vcmp.le.f32.partialorder %v2559, 0.7853982
        %vm2561 = vcmp.lt.s32.totalorder %v2440, 0
        %v2562 = vand.u32 %v2440, 2139095040
        %v2563 = vshrl.u32 %v2562, 23
        %v2564 = vsub.s32 %v2563, 127
        %v2565 = vand.u32 2147483647, %v2440
        %v2566 = vand.u32 %v2565, 8388607
        %v2567 = vor.u32 %v2566, 8388608
        %v2568 = vsub.s32 0, %v2567
        %v2569 = vadd.s32 %v2564, 1
        %vm2570 = vcmp.gt.s32.totalorder %v2569, 0
        %v2571 = vsel %vm2570, %v2569, 0
        %v2572 = vshrl.u32 %v2571, 5
        %v2573 = vand.u32 %v2571, 31
        %v2574 = vsub.s32 32, %v2573
        %v2575 = vshrl.u32 683565275, %v2574
        %v2576 = vshll.u32 683565275, %v2573
        %v2577 = vshrl.u32 2475754826, %v2574
        %v2578 = vor.u32 %v2576, %v2577
        %v2579 = vshll.u32 2475754826, %v2573
        %v2580 = vshrl.u32 2131351028, %v2574
        %v2581 = vor.u32 %v2579, %v2580
        %v2582 = vshll.u32 2131351028, %v2573
        %v2583 = vshrl.u32 2102212464, %v2574
        %v2584 = vor.u32 %v2582, %v2583
        %v2585 = vshll.u32 2102212464, %v2573
        %v2586 = vshrl.u32 920167782, %v2574
        %v2587 = vor.u32 %v2585, %v2586
        %v2588 = vshll.u32 920167782, %v2573
        %v2589 = vshrl.u32 1326507024, %v2574
        %v2590 = vor.u32 %v2588, %v2589
        %vm2591 = vcmp.lt.s32.totalorder %v2572, 1
        %vm2592 = vcmp.lt.s32.totalorder %v2572, 2
        %vm2593 = vcmp.lt.s32.totalorder %v2572, 3
        %vm2594 = vcmp.lt.s32.totalorder %v2572, 4
        %v2595 = vsel %vm2591, %v2575, %v2578
        %v2596 = vsel %vm2594, %v2584, 2102212464
        %v2597 = vsel %vm2593, %v2581, %v2596
        %v2598 = vsel %vm2592, %v2595, %v2597
        %v2599 = vsel %vm2591, %v2578, %v2581
        %v2600 = vsel %vm2594, %v2587, 920167782
        %v2601 = vsel %vm2593, %v2584, %v2600
        %v2602 = vsel %vm2592, %v2599, %v2601
        %v2603 = vsel %vm2591, %v2581, %v2584
        %v2604 = vsel %vm2594, %v2590, 1326507024
        %v2605 = vsel %vm2593, %v2587, %v2604
        %v2606 = vsel %vm2592, %v2603, %v2605
        %v2607 = vshll.u32 %v2567, 8
        %v2608 = vmul.u32.u64.compose %v2607, %v2606
        %v2609 = vextract.low.u32 %v2608
        %v2610 = vextract.high.u32 %v2608
        %v2611 = vmul.u32.u64.compose %v2607, %v2602
        %v2612 = vextract.low.u32 %v2611
        %v2613 = vextract.high.u32 %v2611
        %v2614 = vmul.u32 %v2607, %v2598
        %v2615 = vadd.s32 %v2610, %v2612
        %vm2616 = vc.u32 %v2610, %v2612
        %v2617 = vadd.s32 %v2613, 1
        %v2618 = vsel %vm2616, %v2617, %v2613
        %v2619 = vadd.s32 %v2614, %v2618
        %v2620 = vadd.s32 %v2619, 536870912
        %v2621 = vshrl.u32 %v2620, 30
        %v2622 = vshll.u32 %v2621, 30
        %v2623 = vsub.s32 %v2619, %v2622
        %vm2624 = vcmp.lt.s32.totalorder %v2623, 0
        %v2625 = vsub.s32 0, %v2623
        %v2626 = vsel %vm2624, %v2625, %v2623
        %v2627 = vclz %v2626
        %v2628 = vsub.s32 %v2627, 2
        %vm2629 = vcmp.gt.s32.totalorder 0, %v2628
        %v2630 = vsel %vm2629, 0, %v2628
        %v2631 = vsub.s32 32, %v2630
        %v2632 = vshll.u32 %v2623, %v2630
        %v2633 = vshrl.u32 %v2615, %v2631
        %v2634 = vor.u32 %v2632, %v2633
        %v2635 = vsub.s32 4294967266, %v2630
        %v2636 = vadd.s32 %v2635, 127
        %v2637 = vshll.u32 %v2636, 23
        %v2638 = vor.u32 4788187, %v2637
        %v2639 = vand.u32 2147483647, %v2638
        %v2641 = vcvt.s32.f32 %v2634
        %v2642 = vmul.f32 %v2641, %v2639
        %v2643 = vxor.u32 %v2642, 2147483648
        %v2644 = vsel %vm2561, %v2643, %v2642
        %v2645 = vsub.s32 4, %v2621
        %v2646 = vsel %vm2561, %v2645, %v2621
        %v2647 = vsel %vm2560, %v2440, %v2644
        %v2648 = vsel %vm2560, 0, %v2646
        %v2649 = vcosq.f32.pop %v2647
        %v2650 = vsinq.f32.pop %v2647
        %vm2651 = vweird.f32 %v2440
        %v2652 = vadd.s32 %v2648, 3
        %v2653 = vand.u32 %v2652, 3
        %vm2654 = vcmp.lt.s32.totalorder %v2653, 2
        %vm2655 = vcmp.eq.s32.totalorder %v2653, 0
        %v2656 = vxor.u32 %v2650, 2147483648
        %v2657 = vsel %vm2655, %v2649, %v2656
        %vm2658 = vcmp.eq.s32.totalorder %v2653, 2
        %v2659 = vxor.u32 %v2649, 2147483648
        %v2660 = vsel %vm2658, %v2659, %v2650
        %v2661 = vsel %vm2654, %v2657, %v2660
        %v2662 = vsel %vm2651, nan, %v2661
        %v2663 = vand.u32 2147483647, %v2446
        %vm2664 = vcmp.le.f32.partialorder %v2663, 0.7853982
        %vm2665 = vcmp.lt.s32.totalorder %v2446, 0
        %v2666 = vand.u32 %v2446, 2139095040
        %v2667 = vshrl.u32 %v2666, 23
        %v2668 = vsub.s32 %v2667, 127
        %v2669 = vand.u32 2147483647, %v2446
        %v2670 = vand.u32 %v2669, 8388607
        %v2671 = vor.u32 %v2670, 8388608
        %v2672 = vsub.s32 0, %v2671
        %v2673 = vadd.s32 %v2668, 1
        %vm2674 = vcmp.gt.s32.totalorder %v2673, 0
        %v2675 = vsel %vm2674, %v2673, 0
        %v2676 = vshrl.u32 %v2675, 5
        %v2677 = vand.u32 %v2675, 31
        %v2678 = vsub.s32 32, %v2677
        %v2679 = vshrl.u32 683565275, %v2678
        %v2680 = vshll.u32 683565275, %v2677
        %v2681 = vshrl.u32 2475754826, %v2678
        %v2682 = vor.u32 %v2680, %v2681
        %v2683 = vshll.u32 2475754826, %v2677
        %v2684 = vshrl.u32 2131351028, %v2678
        %v2685 = vor.u32 %v2683, %v2684
        %v2686 = vshll.u32 2131351028, %v2677
        %v2687 = vshrl.u32 2102212464, %v2678
        %v2688 = vor.u32 %v2686, %v2687
        %v2689 = vshll.u32 2102212464, %v2677
        %v2690 = vshrl.u32 920167782, %v2678
        %v2691 = vor.u32 %v2689, %v2690
        %v2692 = vshll.u32 920167782, %v2677
        %v2693 = vshrl.u32 1326507024, %v2678
        %v2694 = vor.u32 %v2692, %v2693
        %vm2695 = vcmp.lt.s32.totalorder %v2676, 1
        %vm2696 = vcmp.lt.s32.totalorder %v2676, 2
        %vm2697 = vcmp.lt.s32.totalorder %v2676, 3
        %vm2698 = vcmp.lt.s32.totalorder %v2676, 4
        %v2699 = vsel %vm2695, %v2679, %v2682
        %v2700 = vsel %vm2698, %v2688, 2102212464
        %v2701 = vsel %vm2697, %v2685, %v2700
        %v2702 = vsel %vm2696, %v2699, %v2701
        %v2703 = vsel %vm2695, %v2682, %v2685
        %v2704 = vsel %vm2698, %v2691, 920167782
        %v2705 = vsel %vm2697, %v2688, %v2704
        %v2706 = vsel %vm2696, %v2703, %v2705
        %v2707 = vsel %vm2695, %v2685, %v2688
        %v2708 = vsel %vm2698, %v2694, 1326507024
        %v2709 = vsel %vm2697, %v2691, %v2708
        %v2710 = vsel %vm2696, %v2707, %v2709
        %v2711 = vshll.u32 %v2671, 8
        %v2712 = vmul.u32.u64.compose %v2711, %v2710
        %v2713 = vextract.low.u32 %v2712
        %v2714 = vextract.high.u32 %v2712
        %v2715 = vmul.u32.u64.compose %v2711, %v2706
        %v2716 = vextract.low.u32 %v2715
        %v2717 = vextract.high.u32 %v2715
        %v2718 = vmul.u32 %v2711, %v2702
        %v2719 = vadd.s32 %v2714, %v2716
        %vm2720 = vc.u32 %v2714, %v2716
        %v2721 = vadd.s32 %v2717, 1
        %v2722 = vsel %vm2720, %v2721, %v2717
        %v2723 = vadd.s32 %v2718, %v2722
        %v2724 = vadd.s32 %v2723, 536870912
        %v2725 = vshrl.u32 %v2724, 30
        %v2726 = vshll.u32 %v2725, 30
        %v2727 = vsub.s32 %v2723, %v2726
        %vm2728 = vcmp.lt.s32.totalorder %v2727, 0
        %v2729 = vsub.s32 0, %v2727
        %v2730 = vsel %vm2728, %v2729, %v2727
        %v2731 = vclz %v2730
        %v2732 = vsub.s32 %v2731, 2
        %vm2733 = vcmp.gt.s32.totalorder 0, %v2732
        %v2734 = vsel %vm2733, 0, %v2732
        %v2735 = vsub.s32 32, %v2734
        %v2736 = vshll.u32 %v2727, %v2734
        %v2737 = vshrl.u32 %v2719, %v2735
        %v2738 = vor.u32 %v2736, %v2737
        %v2739 = vsub.s32 4294967266, %v2734
        %v2740 = vadd.s32 %v2739, 127
        %v2741 = vshll.u32 %v2740, 23
        %v2742 = vor.u32 4788187, %v2741
        %v2743 = vand.u32 2147483647, %v2742
        %v2745 = vcvt.s32.f32 %v2738
        %v2746 = vmul.f32 %v2745, %v2743
        %v2747 = vxor.u32 %v2746, 2147483648
        %v2748 = vsel %vm2665, %v2747, %v2746
        %v2749 = vsub.s32 4, %v2725
        %v2750 = vsel %vm2665, %v2749, %v2725
        %v2751 = vsel %vm2664, %v2446, %v2748
        %v2752 = vsel %vm2664, 0, %v2750
        %v2753 = vcosq.f32.pop %v2751
        %v2754 = vsinq.f32.pop %v2751
        %vm2755 = vweird.f32 %v2446
        %v2756 = vadd.s32 %v2752, 3
        %v2757 = vand.u32 %v2756, 3
        %vm2758 = vcmp.lt.s32.totalorder %v2757, 2
        %vm2759 = vcmp.eq.s32.totalorder %v2757, 0
        %v2760 = vxor.u32 %v2754, 2147483648
        %v2761 = vsel %vm2759, %v2753, %v2760
        %vm2762 = vcmp.eq.s32.totalorder %v2757, 2
        %v2763 = vxor.u32 %v2753, 2147483648
        %v2764 = vsel %vm2762, %v2763, %v2754
        %v2765 = vsel %vm2758, %v2761, %v2764
        %v2766 = vsel %vm2755, nan, %v2765
        %v2767 = vand.u32 2147483647, %v2452
        %vm2768 = vcmp.le.f32.partialorder %v2767, 0.7853982
        %vm2769 = vcmp.lt.s32.totalorder %v2452, 0
        %v2770 = vand.u32 %v2452, 2139095040
        %v2771 = vshrl.u32 %v2770, 23
        %v2772 = vsub.s32 %v2771, 127
        %v2773 = vand.u32 2147483647, %v2452
        %v2774 = vand.u32 %v2773, 8388607
        %v2775 = vor.u32 %v2774, 8388608
        %v2776 = vsub.s32 0, %v2775
        %v2777 = vadd.s32 %v2772, 1
        %vm2778 = vcmp.gt.s32.totalorder %v2777, 0
        %v2779 = vsel %vm2778, %v2777, 0
        %v2780 = vshrl.u32 %v2779, 5
        %v2781 = vand.u32 %v2779, 31
        %v2782 = vsub.s32 32, %v2781
        %v2783 = vshrl.u32 683565275, %v2782
        %v2784 = vshll.u32 683565275, %v2781
        %v2785 = vshrl.u32 2475754826, %v2782
        %v2786 = vor.u32 %v2784, %v2785
        %v2787 = vshll.u32 2475754826, %v2781
        %v2788 = vshrl.u32 2131351028, %v2782
        %v2789 = vor.u32 %v2787, %v2788
        %v2790 = vshll.u32 2131351028, %v2781
        %v2791 = vshrl.u32 2102212464, %v2782
        %v2792 = vor.u32 %v2790, %v2791
        %v2793 = vshll.u32 2102212464, %v2781
        %v2794 = vshrl.u32 920167782, %v2782
        %v2795 = vor.u32 %v2793, %v2794
        %v2796 = vshll.u32 920167782, %v2781
        %v2797 = vshrl.u32 1326507024, %v2782
        %v2798 = vor.u32 %v2796, %v2797
        %vm2799 = vcmp.lt.s32.totalorder %v2780, 1
        %vm2800 = vcmp.lt.s32.totalorder %v2780, 2
        %vm2801 = vcmp.lt.s32.totalorder %v2780, 3
        %vm2802 = vcmp.lt.s32.totalorder %v2780, 4
        %v2803 = vsel %vm2799, %v2783, %v2786
        %v2804 = vsel %vm2802, %v2792, 2102212464
        %v2805 = vsel %vm2801, %v2789, %v2804
        %v2806 = vsel %vm2800, %v2803, %v2805
        %v2807 = vsel %vm2799, %v2786, %v2789
        %v2808 = vsel %vm2802, %v2795, 920167782
        %v2809 = vsel %vm2801, %v2792, %v2808
        %v2810 = vsel %vm2800, %v2807, %v2809
        %v2811 = vsel %vm2799, %v2789, %v2792
        %v2812 = vsel %vm2802, %v2798, 1326507024
        %v2813 = vsel %vm2801, %v2795, %v2812
        %v2814 = vsel %vm2800, %v2811, %v2813
        %v2815 = vshll.u32 %v2775, 8
        %v2816 = vmul.u32.u64.compose %v2815, %v2814
        %v2817 = vextract.low.u32 %v2816
        %v2818 = vextract.high.u32 %v2816
        %v2819 = vmul.u32.u64.compose %v2815, %v2810
        %v2820 = vextract.low.u32 %v2819
        %v2821 = vextract.high.u32 %v2819
        %v2822 = vmul.u32 %v2815, %v2806
        %v2823 = vadd.s32 %v2818, %v2820
        %vm2824 = vc.u32 %v2818, %v2820
        %v2825 = vadd.s32 %v2821, 1
        %v2826 = vsel %vm2824, %v2825, %v2821
        %v2827 = vadd.s32 %v2822, %v2826
        %v2828 = vadd.s32 %v2827, 536870912
        %v2829 = vshrl.u32 %v2828, 30
        %v2830 = vshll.u32 %v2829, 30
        %v2831 = vsub.s32 %v2827, %v2830
        %vm2832 = vcmp.lt.s32.totalorder %v2831, 0
        %v2833 = vsub.s32 0, %v2831
        %v2834 = vsel %vm2832, %v2833, %v2831
        %v2835 = vclz %v2834
        %v2836 = vsub.s32 %v2835, 2
        %vm2837 = vcmp.gt.s32.totalorder 0, %v2836
        %v2838 = vsel %vm2837, 0, %v2836
        %v2839 = vsub.s32 32, %v2838
        %v2840 = vshll.u32 %v2831, %v2838
        %v2841 = vshrl.u32 %v2823, %v2839
        %v2842 = vor.u32 %v2840, %v2841
        %v2843 = vsub.s32 4294967266, %v2838
        %v2844 = vadd.s32 %v2843, 127
        %v2845 = vshll.u32 %v2844, 23
        %v2846 = vor.u32 4788187, %v2845
        %v2847 = vand.u32 2147483647, %v2846
        %v2849 = vcvt.s32.f32 %v2842
        %v2850 = vmul.f32 %v2849, %v2847
        %v2851 = vxor.u32 %v2850, 2147483648
        %v2852 = vsel %vm2769, %v2851, %v2850
        %v2853 = vsub.s32 4, %v2829
        %v2854 = vsel %vm2769, %v2853, %v2829
        %v2855 = vsel %vm2768, %v2452, %v2852
        %v2856 = vsel %vm2768, 0, %v2854
        %v2857 = vcosq.f32.pop %v2855
        %v2858 = vsinq.f32.pop %v2855
        %vm2859 = vweird.f32 %v2452
        %v2860 = vadd.s32 %v2856, 3
        %v2861 = vand.u32 %v2860, 3
        %vm2862 = vcmp.lt.s32.totalorder %v2861, 2
        %vm2863 = vcmp.eq.s32.totalorder %v2861, 0
        %v2864 = vxor.u32 %v2858, 2147483648
        %v2865 = vsel %vm2863, %v2857, %v2864
        %vm2866 = vcmp.eq.s32.totalorder %v2861, 2
        %v2867 = vxor.u32 %v2857, 2147483648
        %v2868 = vsel %vm2866, %v2867, %v2858
        %v2869 = vsel %vm2862, %v2865, %v2868
        %v2870 = vsel %vm2859, nan, %v2869
        %2872 = vset.pattern.permute.xlu0 0
        %2873 = vperm.xlu0 %2872, %v301
        %v2874 = vpop.permute.xlu0 %2873
        %v2877 = vsel %vm766, %v299, 0
        %2879 = vmatprep.subr.mxu0 0.0
        %2880 = vmatpush1.msra.mxu0 0.0
        %2881 = vmatprep.subr.mxu0 0.0
        %2882 = vmatpush1.msra.mxu0 0.0
        %2883 = vmatprep.subr.mxu0 0.0
        %2884 = vmatpush1.msra.mxu0 0.0
        %2885 = vmatprep.subr.mxu0 0.0
        %2886 = vmatpush1.msra.mxu0 0.0
        %2887 = vmatprep.subr.mxu0 0.0
        %2888 = vmatpush1.msra.mxu0 0.0
        %2889 = vmatprep.subr.mxu0 0.0
        %2890 = vmatpush1.msra.mxu0 0.0
        %2891 = vmatprep.subr.mxu0 0.0
        %2892 = vmatpush1.msra.mxu0 0.0
        %2893 = vmatprep.subr.mxu0 0.0
        %2894 = vmatpush1.msra.mxu0 0.0
        %2895 = vmatprep.subr.mxu0 0.0
        %2896 = vmatpush1.msra.mxu0 0.0
        %2897 = vmatprep.subr.mxu0 0.0
        %2898 = vmatpush1.msra.mxu0 0.0
        %2899 = vmatprep.subr.mxu0 0.0
        %2900 = vmatpush1.msra.mxu0 0.0
        %2901 = vmatprep.subr.mxu0 0.0
        %2902 = vmatpush1.msra.mxu0 0.0
        %2903 = vmatprep.subr.mxu0 0.0
        %v2904 = vand.u32 %v2870, 4294901760
        %2905 = vmatpush1.msra.mxu0 %v2904
        %2906 = vmatprep.subr.mxu0 0.0
        %v2907 = vand.u32 %v2766, 4294901760
        %2908 = vmatpush1.msra.mxu0 %v2907
        %2909 = vmatprep.subr.mxu0 0.0
        %v2910 = vand.u32 %v2662, 4294901760
        %2911 = vmatpush1.msra.mxu0 %v2910
        %2912 = vmatprep.subr.mxu0 0.0
        %v2913 = vand.u32 %v2558, 4294901760
        %2914 = vmatpush1.msra.mxu0 %v2913
        %2915 = vmatprep.subr.mxu0 0.0
        %2916 = vmatpush2.msra.mxu0 0.0
        %2917 = vmatprep.subr.mxu0 0.0
        %2918 = vmatpush2.msra.mxu0 0.0
        %2919 = vmatprep.subr.mxu0 0.0
        %2920 = vmatpush2.msra.mxu0 0.0
        %2921 = vmatprep.subr.mxu0 0.0
        %2922 = vmatpush2.msra.mxu0 0.0
        %2923 = vmatprep.subr.mxu0 0.0
        %2924 = vmatpush2.msra.mxu0 0.0
        %2925 = vmatprep.subr.mxu0 0.0
        %2926 = vmatpush2.msra.mxu0 0.0
        %2927 = vmatprep.subr.mxu0 0.0
        %2928 = vmatpush2.msra.mxu0 0.0
        %2929 = vmatprep.subr.mxu0 0.0
        %2930 = vmatpush2.msra.mxu0 0.0
        %2931 = vmatprep.subr.mxu0 0.0
        %2932 = vmatpush2.msra.mxu0 0.0
        %2933 = vmatprep.subr.mxu0 0.0
        %2934 = vmatpush2.msra.mxu0 0.0
        %2935 = vmatprep.subr.mxu0 0.0
        %2936 = vmatpush2.msra.mxu0 0.0
        %2937 = vmatprep.subr.mxu0 0.0
        %2938 = vmatpush2.msra.mxu0 0.0
        %2939 = vmatprep.subr.mxu0 0.0
        %2940 = vmatpush2.msra.mxu0 0.0
        %2941 = vmatprep.subr.mxu0 0.0
        %2942 = vmatpush2.msra.mxu0 0.0
        %2943 = vmatprep.subr.mxu0 0.0
        %2944 = vmatpush2.msra.mxu0 0.0
        %2945 = vmatprep.subr.mxu0 0.0
        %2946 = vmatpush2.msra.mxu0 0.0
        %2947 = vmatprep.mubr.f32.mxu0 0.0
        %v2948 = vand.u32 %v2877, 4294901760
        %v2949 = vsub.f32 %v2877, %v2948
        %v2950 = vand.u32 %v2949, 4294901760
        %v2951 = vsub.f32 %v2949, %v2950
        %v2952 = vand.u32 %v2951, 4294901760
        %2953 = vmatmul.mubr.f32.gmra.mxu0 %v2952
        %v2954 = vpop.f32.mrf.mxu0
        %v2955 = vadd.f32 %v2874, %v2954
        %v2956 = vpop.f32.mrf.mxu0
        %2957 = vdwg.mxu0
        %2958 = vmatprep.subr.mxu0 0.0
        %2959 = vmatpush1.msra.mxu0 0.0
        %2960 = vmatprep.subr.mxu0 0.0
        %2961 = vmatpush1.msra.mxu0 0.0
        %2962 = vmatprep.subr.mxu0 0.0
        %2963 = vmatpush1.msra.mxu0 0.0
        %2964 = vmatprep.subr.mxu0 0.0
        %2965 = vmatpush1.msra.mxu0 0.0
        %2966 = vmatprep.subr.mxu0 0.0
        %2967 = vmatpush1.msra.mxu0 0.0
        %2968 = vmatprep.subr.mxu0 0.0
        %2969 = vmatpush1.msra.mxu0 0.0
        %2970 = vmatprep.subr.mxu0 0.0
        %2971 = vmatpush1.msra.mxu0 0.0
        %2972 = vmatprep.subr.mxu0 0.0
        %2973 = vmatpush1.msra.mxu0 0.0
        %2974 = vmatprep.subr.mxu0 0.0
        %2975 = vmatpush1.msra.mxu0 0.0
        %2976 = vmatprep.subr.mxu0 0.0
        %2977 = vmatpush1.msra.mxu0 0.0
        %2978 = vmatprep.subr.mxu0 0.0
        %2979 = vmatpush1.msra.mxu0 0.0
        %2980 = vmatprep.subr.mxu0 0.0
        %2981 = vmatpush1.msra.mxu0 0.0
        %2982 = vmatprep.subr.mxu0 0.0
        %v2983 = vand.u32 %v2870, 4294901760
        %v2984 = vsub.f32 %v2870, %v2983
        %v2985 = vand.u32 %v2984, 4294901760
        %v2986 = vsub.f32 %v2984, %v2985
        %v2987 = vand.u32 %v2986, 4294901760
        %2988 = vmatpush1.msra.mxu0 %v2987
        %2989 = vmatprep.subr.mxu0 0.0
        %v2990 = vand.u32 %v2766, 4294901760
        %v2991 = vsub.f32 %v2766, %v2990
        %v2992 = vand.u32 %v2991, 4294901760
        %v2993 = vsub.f32 %v2991, %v2992
        %v2994 = vand.u32 %v2993, 4294901760
        %2995 = vmatpush1.msra.mxu0 %v2994
        %2996 = vmatprep.subr.mxu0 0.0
        %v2997 = vand.u32 %v2662, 4294901760
        %v2998 = vsub.f32 %v2662, %v2997
        %v2999 = vand.u32 %v2998, 4294901760
        %v3000 = vsub.f32 %v2998, %v2999
        %v3001 = vand.u32 %v3000, 4294901760
        %3002 = vmatpush1.msra.mxu0 %v3001
        %3003 = vmatprep.subr.mxu0 0.0
        %v3004 = vand.u32 %v2558, 4294901760
        %v3005 = vsub.f32 %v2558, %v3004
        %v3006 = vand.u32 %v3005, 4294901760
        %v3007 = vsub.f32 %v3005, %v3006
        %v3008 = vand.u32 %v3007, 4294901760
        %3009 = vmatpush1.msra.mxu0 %v3008
        %3010 = vmatprep.subr.mxu0 0.0
        %3011 = vmatpush2.msra.mxu0 0.0
        %3012 = vmatprep.subr.mxu0 0.0
        %3013 = vmatpush2.msra.mxu0 0.0
        %3014 = vmatprep.subr.mxu0 0.0
        %3015 = vmatpush2.msra.mxu0 0.0
        %3016 = vmatprep.subr.mxu0 0.0
        %3017 = vmatpush2.msra.mxu0 0.0
        %3018 = vmatprep.subr.mxu0 0.0
        %3019 = vmatpush2.msra.mxu0 0.0
        %3020 = vmatprep.subr.mxu0 0.0
        %3021 = vmatpush2.msra.mxu0 0.0
        %3022 = vmatprep.subr.mxu0 0.0
        %3023 = vmatpush2.msra.mxu0 0.0
        %3024 = vmatprep.subr.mxu0 0.0
        %3025 = vmatpush2.msra.mxu0 0.0
        %3026 = vmatprep.subr.mxu0 0.0
        %3027 = vmatpush2.msra.mxu0 0.0
        %3028 = vmatprep.subr.mxu0 0.0
        %3029 = vmatpush2.msra.mxu0 0.0
        %3030 = vmatprep.subr.mxu0 0.0
        %3031 = vmatpush2.msra.mxu0 0.0
        %3032 = vmatprep.subr.mxu0 0.0
        %3033 = vmatpush2.msra.mxu0 0.0
        %3034 = vmatprep.subr.mxu0 0.0
        %3035 = vmatpush2.msra.mxu0 0.0
        %3036 = vmatprep.subr.mxu0 0.0
        %3037 = vmatpush2.msra.mxu0 0.0
        %3038 = vmatprep.subr.mxu0 0.0
        %3039 = vmatpush2.msra.mxu0 0.0
        %3040 = vmatprep.subr.mxu0 0.0
        %3041 = vmatpush2.msra.mxu0 0.0
        %3042 = vmatprep.mubr.f32.mxu0 0.0
        %v3043 = vand.u32 %v2877, 4294901760
        %3044 = vmatmul.mubr.f32.gmra.mxu0 %v3043
        %v3045 = vpop.f32.mrf.mxu0
        %v3046 = vadd.f32 %v2955, %v3045
        %v3047 = vpop.f32.mrf.mxu0
        %3048 = vdwg.mxu0
        %3049 = vmatprep.subr.mxu0 0.0
        %3050 = vmatpush1.msra.mxu0 0.0
        %3051 = vmatprep.subr.mxu0 0.0
        %3052 = vmatpush1.msra.mxu0 0.0
        %3053 = vmatprep.subr.mxu0 0.0
        %3054 = vmatpush1.msra.mxu0 0.0
        %3055 = vmatprep.subr.mxu0 0.0
        %3056 = vmatpush1.msra.mxu0 0.0
        %3057 = vmatprep.subr.mxu0 0.0
        %3058 = vmatpush1.msra.mxu0 0.0
        %3059 = vmatprep.subr.mxu0 0.0
        %3060 = vmatpush1.msra.mxu0 0.0
        %3061 = vmatprep.subr.mxu0 0.0
        %3062 = vmatpush1.msra.mxu0 0.0
        %3063 = vmatprep.subr.mxu0 0.0
        %3064 = vmatpush1.msra.mxu0 0.0
        %3065 = vmatprep.subr.mxu0 0.0
        %3066 = vmatpush1.msra.mxu0 0.0
        %3067 = vmatprep.subr.mxu0 0.0
        %3068 = vmatpush1.msra.mxu0 0.0
        %3069 = vmatprep.subr.mxu0 0.0
        %3070 = vmatpush1.msra.mxu0 0.0
        %3071 = vmatprep.subr.mxu0 0.0
        %3072 = vmatpush1.msra.mxu0 0.0
        %3073 = vmatprep.subr.mxu0 0.0
        %v3074 = vand.u32 %v2870, 4294901760
        %v3075 = vsub.f32 %v2870, %v3074
        %3076 = vmatpush1.msra.mxu0 %v3075
        %3077 = vmatprep.subr.mxu0 0.0
        %v3078 = vand.u32 %v2766, 4294901760
        %v3079 = vsub.f32 %v2766, %v3078
        %3080 = vmatpush1.msra.mxu0 %v3079
        %3081 = vmatprep.subr.mxu0 0.0
        %v3082 = vand.u32 %v2662, 4294901760
        %v3083 = vsub.f32 %v2662, %v3082
        %3084 = vmatpush1.msra.mxu0 %v3083
        %3085 = vmatprep.subr.mxu0 0.0
        %v3086 = vand.u32 %v2558, 4294901760
        %v3087 = vsub.f32 %v2558, %v3086
        %3088 = vmatpush1.msra.mxu0 %v3087
        %3089 = vmatprep.subr.mxu0 0.0
        %3090 = vmatpush2.msra.mxu0 0.0
        %3091 = vmatprep.subr.mxu0 0.0
        %3092 = vmatpush2.msra.mxu0 0.0
        %3093 = vmatprep.subr.mxu0 0.0
        %3094 = vmatpush2.msra.mxu0 0.0
        %3095 = vmatprep.subr.mxu0 0.0
        %3096 = vmatpush2.msra.mxu0 0.0
        %3097 = vmatprep.subr.mxu0 0.0
        %3098 = vmatpush2.msra.mxu0 0.0
        %3099 = vmatprep.subr.mxu0 0.0
        %3100 = vmatpush2.msra.mxu0 0.0
        %3101 = vmatprep.subr.mxu0 0.0
        %3102 = vmatpush2.msra.mxu0 0.0
        %3103 = vmatprep.subr.mxu0 0.0
        %3104 = vmatpush2.msra.mxu0 0.0
        %3105 = vmatprep.subr.mxu0 0.0
        %3106 = vmatpush2.msra.mxu0 0.0
        %3107 = vmatprep.subr.mxu0 0.0
        %3108 = vmatpush2.msra.mxu0 0.0
        %3109 = vmatprep.subr.mxu0 0.0
        %3110 = vmatpush2.msra.mxu0 0.0
        %3111 = vmatprep.subr.mxu0 0.0
        %3112 = vmatpush2.msra.mxu0 0.0
        %3113 = vmatprep.subr.mxu0 0.0
        %3114 = vmatpush2.msra.mxu0 0.0
        %3115 = vmatprep.subr.mxu0 0.0
        %3116 = vmatpush2.msra.mxu0 0.0
        %3117 = vmatprep.subr.mxu0 0.0
        %3118 = vmatpush2.msra.mxu0 0.0
        %3119 = vmatprep.subr.mxu0 0.0
        %3120 = vmatpush2.msra.mxu0 0.0
        %3121 = vmatprep.mubr.f32.mxu0 0.0
        %v3122 = vand.u32 %v2877, 4294901760
        %v3123 = vsub.f32 %v2877, %v3122
        %3124 = vmatmul.mubr.f32.gmra.mxu0 %v3123
        %v3125 = vpop.f32.mrf.mxu0
        %v3126 = vadd.f32 %v3046, %v3125
        %v3127 = vpop.f32.mrf.mxu0
        %3128 = vdwg.mxu0
        %3129 = vmatprep.subr.mxu0 0.0
        %3130 = vmatpush1.msra.mxu0 0.0
        %3131 = vmatprep.subr.mxu0 0.0
        %3132 = vmatpush1.msra.mxu0 0.0
        %3133 = vmatprep.subr.mxu0 0.0
        %3134 = vmatpush1.msra.mxu0 0.0
        %3135 = vmatprep.subr.mxu0 0.0
        %3136 = vmatpush1.msra.mxu0 0.0
        %3137 = vmatprep.subr.mxu0 0.0
        %3138 = vmatpush1.msra.mxu0 0.0
        %3139 = vmatprep.subr.mxu0 0.0
        %3140 = vmatpush1.msra.mxu0 0.0
        %3141 = vmatprep.subr.mxu0 0.0
        %3142 = vmatpush1.msra.mxu0 0.0
        %3143 = vmatprep.subr.mxu0 0.0
        %3144 = vmatpush1.msra.mxu0 0.0
        %3145 = vmatprep.subr.mxu0 0.0
        %3146 = vmatpush1.msra.mxu0 0.0
        %3147 = vmatprep.subr.mxu0 0.0
        %3148 = vmatpush1.msra.mxu0 0.0
        %3149 = vmatprep.subr.mxu0 0.0
        %3150 = vmatpush1.msra.mxu0 0.0
        %3151 = vmatprep.subr.mxu0 0.0
        %3152 = vmatpush1.msra.mxu0 0.0
        %3153 = vmatprep.subr.mxu0 0.0
        %v3154 = vand.u32 %v2870, 4294901760
        %3155 = vmatpush1.msra.mxu0 %v3154
        %3156 = vmatprep.subr.mxu0 0.0
        %v3157 = vand.u32 %v2766, 4294901760
        %3158 = vmatpush1.msra.mxu0 %v3157
        %3159 = vmatprep.subr.mxu0 0.0
        %v3160 = vand.u32 %v2662, 4294901760
        %3161 = vmatpush1.msra.mxu0 %v3160
        %3162 = vmatprep.subr.mxu0 0.0
        %v3163 = vand.u32 %v2558, 4294901760
        %3164 = vmatpush1.msra.mxu0 %v3163
        %3165 = vmatprep.subr.mxu0 0.0
        %3166 = vmatpush2.msra.mxu0 0.0
        %3167 = vmatprep.subr.mxu0 0.0
        %3168 = vmatpush2.msra.mxu0 0.0
        %3169 = vmatprep.subr.mxu0 0.0
        %3170 = vmatpush2.msra.mxu0 0.0
        %3171 = vmatprep.subr.mxu0 0.0
        %3172 = vmatpush2.msra.mxu0 0.0
        %3173 = vmatprep.subr.mxu0 0.0
        %3174 = vmatpush2.msra.mxu0 0.0
        %3175 = vmatprep.subr.mxu0 0.0
        %3176 = vmatpush2.msra.mxu0 0.0
        %3177 = vmatprep.subr.mxu0 0.0
        %3178 = vmatpush2.msra.mxu0 0.0
        %3179 = vmatprep.subr.mxu0 0.0
        %3180 = vmatpush2.msra.mxu0 0.0
        %3181 = vmatprep.subr.mxu0 0.0
        %3182 = vmatpush2.msra.mxu0 0.0
        %3183 = vmatprep.subr.mxu0 0.0
        %3184 = vmatpush2.msra.mxu0 0.0
        %3185 = vmatprep.subr.mxu0 0.0
        %3186 = vmatpush2.msra.mxu0 0.0
        %3187 = vmatprep.subr.mxu0 0.0
        %3188 = vmatpush2.msra.mxu0 0.0
        %3189 = vmatprep.subr.mxu0 0.0
        %3190 = vmatpush2.msra.mxu0 0.0
        %3191 = vmatprep.subr.mxu0 0.0
        %3192 = vmatpush2.msra.mxu0 0.0
        %3193 = vmatprep.subr.mxu0 0.0
        %3194 = vmatpush2.msra.mxu0 0.0
        %3195 = vmatprep.subr.mxu0 0.0
        %3196 = vmatpush2.msra.mxu0 0.0
        %3197 = vmatprep.mubr.f32.mxu0 0.0
        %v3198 = vand.u32 %v2877, 4294901760
        %v3199 = vsub.f32 %v2877, %v3198
        %v3200 = vand.u32 %v3199, 4294901760
        %3201 = vmatmul.mubr.f32.gmra.mxu0 %v3200
        %v3202 = vpop.f32.mrf.mxu0
        %v3203 = vadd.f32 %v3126, %v3202
        %v3204 = vpop.f32.mrf.mxu0
        %3205 = vdwg.mxu0
        %3206 = vmatprep.subr.mxu0 0.0
        %3207 = vmatpush1.msra.mxu0 0.0
        %3208 = vmatprep.subr.mxu0 0.0
        %3209 = vmatpush1.msra.mxu0 0.0
        %3210 = vmatprep.subr.mxu0 0.0
        %3211 = vmatpush1.msra.mxu0 0.0
        %3212 = vmatprep.subr.mxu0 0.0
        %3213 = vmatpush1.msra.mxu0 0.0
        %3214 = vmatprep.subr.mxu0 0.0
        %3215 = vmatpush1.msra.mxu0 0.0
        %3216 = vmatprep.subr.mxu0 0.0
        %3217 = vmatpush1.msra.mxu0 0.0
        %3218 = vmatprep.subr.mxu0 0.0
        %3219 = vmatpush1.msra.mxu0 0.0
        %3220 = vmatprep.subr.mxu0 0.0
        %3221 = vmatpush1.msra.mxu0 0.0
        %3222 = vmatprep.subr.mxu0 0.0
        %3223 = vmatpush1.msra.mxu0 0.0
        %3224 = vmatprep.subr.mxu0 0.0
        %3225 = vmatpush1.msra.mxu0 0.0
        %3226 = vmatprep.subr.mxu0 0.0
        %3227 = vmatpush1.msra.mxu0 0.0
        %3228 = vmatprep.subr.mxu0 0.0
        %3229 = vmatpush1.msra.mxu0 0.0
        %3230 = vmatprep.subr.mxu0 0.0
        %v3231 = vand.u32 %v2870, 4294901760
        %v3232 = vsub.f32 %v2870, %v3231
        %v3233 = vand.u32 %v3232, 4294901760
        %3234 = vmatpush1.msra.mxu0 %v3233
        %3235 = vmatprep.subr.mxu0 0.0
        %v3236 = vand.u32 %v2766, 4294901760
        %v3237 = vsub.f32 %v2766, %v3236
        %v3238 = vand.u32 %v3237, 4294901760
        %3239 = vmatpush1.msra.mxu0 %v3238
        %3240 = vmatprep.subr.mxu0 0.0
        %v3241 = vand.u32 %v2662, 4294901760
        %v3242 = vsub.f32 %v2662, %v3241
        %v3243 = vand.u32 %v3242, 4294901760
        %3244 = vmatpush1.msra.mxu0 %v3243
        %3245 = vmatprep.subr.mxu0 0.0
        %v3246 = vand.u32 %v2558, 4294901760
        %v3247 = vsub.f32 %v2558, %v3246
        %v3248 = vand.u32 %v3247, 4294901760
        %3249 = vmatpush1.msra.mxu0 %v3248
        %3250 = vmatprep.subr.mxu0 0.0
        %3251 = vmatpush2.msra.mxu0 0.0
        %3252 = vmatprep.subr.mxu0 0.0
        %3253 = vmatpush2.msra.mxu0 0.0
        %3254 = vmatprep.subr.mxu0 0.0
        %3255 = vmatpush2.msra.mxu0 0.0
        %3256 = vmatprep.subr.mxu0 0.0
        %3257 = vmatpush2.msra.mxu0 0.0
        %3258 = vmatprep.subr.mxu0 0.0
        %3259 = vmatpush2.msra.mxu0 0.0
        %3260 = vmatprep.subr.mxu0 0.0
        %3261 = vmatpush2.msra.mxu0 0.0
        %3262 = vmatprep.subr.mxu0 0.0
        %3263 = vmatpush2.msra.mxu0 0.0
        %3264 = vmatprep.subr.mxu0 0.0
        %3265 = vmatpush2.msra.mxu0 0.0
        %3266 = vmatprep.subr.mxu0 0.0
        %3267 = vmatpush2.msra.mxu0 0.0
        %3268 = vmatprep.subr.mxu0 0.0
        %3269 = vmatpush2.msra.mxu0 0.0
        %3270 = vmatprep.subr.mxu0 0.0
        %3271 = vmatpush2.msra.mxu0 0.0
        %3272 = vmatprep.subr.mxu0 0.0
        %3273 = vmatpush2.msra.mxu0 0.0
        %3274 = vmatprep.subr.mxu0 0.0
        %3275 = vmatpush2.msra.mxu0 0.0
        %3276 = vmatprep.subr.mxu0 0.0
        %3277 = vmatpush2.msra.mxu0 0.0
        %3278 = vmatprep.subr.mxu0 0.0
        %3279 = vmatpush2.msra.mxu0 0.0
        %3280 = vmatprep.subr.mxu0 0.0
        %3281 = vmatpush2.msra.mxu0 0.0
        %3282 = vmatprep.mubr.f32.mxu0 0.0
        %v3283 = vand.u32 %v2877, 4294901760
        %3284 = vmatmul.mubr.f32.gmra.mxu0 %v3283
        %v3285 = vpop.f32.mrf.mxu0
        %v3286 = vadd.f32 %v3203, %v3285
        %v3287 = vpop.f32.mrf.mxu0
        %3288 = vdwg.mxu0
        %3289 = vmatprep.subr.mxu0 0.0
        %3290 = vmatpush1.msra.mxu0 0.0
        %3291 = vmatprep.subr.mxu0 0.0
        %3292 = vmatpush1.msra.mxu0 0.0
        %3293 = vmatprep.subr.mxu0 0.0
        %3294 = vmatpush1.msra.mxu0 0.0
        %3295 = vmatprep.subr.mxu0 0.0
        %3296 = vmatpush1.msra.mxu0 0.0
        %3297 = vmatprep.subr.mxu0 0.0
        %3298 = vmatpush1.msra.mxu0 0.0
        %3299 = vmatprep.subr.mxu0 0.0
        %3300 = vmatpush1.msra.mxu0 0.0
        %3301 = vmatprep.subr.mxu0 0.0
        %3302 = vmatpush1.msra.mxu0 0.0
        %3303 = vmatprep.subr.mxu0 0.0
        %3304 = vmatpush1.msra.mxu0 0.0
        %3305 = vmatprep.subr.mxu0 0.0
        %3306 = vmatpush1.msra.mxu0 0.0
        %3307 = vmatprep.subr.mxu0 0.0
        %3308 = vmatpush1.msra.mxu0 0.0
        %3309 = vmatprep.subr.mxu0 0.0
        %3310 = vmatpush1.msra.mxu0 0.0
        %3311 = vmatprep.subr.mxu0 0.0
        %3312 = vmatpush1.msra.mxu0 0.0
        %3313 = vmatprep.subr.mxu0 0.0
        %v3314 = vand.u32 %v2870, 4294901760
        %3315 = vmatpush1.msra.mxu0 %v3314
        %3316 = vmatprep.subr.mxu0 0.0
        %v3317 = vand.u32 %v2766, 4294901760
        %3318 = vmatpush1.msra.mxu0 %v3317
        %3319 = vmatprep.subr.mxu0 0.0
        %v3320 = vand.u32 %v2662, 4294901760
        %3321 = vmatpush1.msra.mxu0 %v3320
        %3322 = vmatprep.subr.mxu0 0.0
        %v3323 = vand.u32 %v2558, 4294901760
        %3324 = vmatpush1.msra.mxu0 %v3323
        %3325 = vmatprep.subr.mxu0 0.0
        %3326 = vmatpush2.msra.mxu0 0.0
        %3327 = vmatprep.subr.mxu0 0.0
        %3328 = vmatpush2.msra.mxu0 0.0
        %3329 = vmatprep.subr.mxu0 0.0
        %3330 = vmatpush2.msra.mxu0 0.0
        %3331 = vmatprep.subr.mxu0 0.0
        %3332 = vmatpush2.msra.mxu0 0.0
        %3333 = vmatprep.subr.mxu0 0.0
        %3334 = vmatpush2.msra.mxu0 0.0
        %3335 = vmatprep.subr.mxu0 0.0
        %3336 = vmatpush2.msra.mxu0 0.0
        %3337 = vmatprep.subr.mxu0 0.0
        %3338 = vmatpush2.msra.mxu0 0.0
        %3339 = vmatprep.subr.mxu0 0.0
        %3340 = vmatpush2.msra.mxu0 0.0
        %3341 = vmatprep.subr.mxu0 0.0
        %3342 = vmatpush2.msra.mxu0 0.0
        %3343 = vmatprep.subr.mxu0 0.0
        %3344 = vmatpush2.msra.mxu0 0.0
        %3345 = vmatprep.subr.mxu0 0.0
        %3346 = vmatpush2.msra.mxu0 0.0
        %3347 = vmatprep.subr.mxu0 0.0
        %3348 = vmatpush2.msra.mxu0 0.0
        %3349 = vmatprep.subr.mxu0 0.0
        %3350 = vmatpush2.msra.mxu0 0.0
        %3351 = vmatprep.subr.mxu0 0.0
        %3352 = vmatpush2.msra.mxu0 0.0
        %3353 = vmatprep.subr.mxu0 0.0
        %3354 = vmatpush2.msra.mxu0 0.0
        %3355 = vmatprep.subr.mxu0 0.0
        %3356 = vmatpush2.msra.mxu0 0.0
        %3357 = vmatprep.mubr.f32.mxu0 0.0
        %v3358 = vand.u32 %v2877, 4294901760
        %3359 = vmatmul.mubr.f32.gmra.mxu0 %v3358
        %v3360 = vpop.f32.mrf.mxu0
        %v3361 = vadd.f32 %v3286, %v3360
        %v3362 = vpop.f32.mrf.mxu0
        %3363 = vdwg.mxu0
        %3364 = vst [vmem:[%s207] sm:$0xf] %v3361
        %s3365 = scalar_lea.vmem %s213, 32
        %v3366 = vld [vmem:[%s3365] sm:$0xff]
        %v3367 = vld [vmem:[%s3365 + $0x8] sm:$0xff]
        %v3368 = vld [vmem:[%s3365 + $0x10] sm:$0xff]
        %v3369 = vld [vmem:[%s3365 + $0x18] sm:$0xff]
        %3371 = vset.pattern.permute.xlu0 0
        %3372 = vperm.xlu0 %3371, %v3366
        %v3373 = vpop.permute.xlu0 %3372
        %3376 = vset.pattern.permute.xlu0 0
        %3377 = vperm.xlu0 %3376, %v3367
        %v3378 = vpop.permute.xlu0 %3377
        %3381 = vset.pattern.permute.xlu0 0
        %3382 = vperm.xlu0 %3381, %v3368
        %v3383 = vpop.permute.xlu0 %3382
        %3386 = vset.pattern.permute.xlu0 0
        %3387 = vperm.xlu0 %3386, %v3369
        %v3388 = vpop.permute.xlu0 %3387
        %v3390 = vadd.f32 %v276, %v3373
        %v3391 = vadd.f32 %v277, %v3378
        %v3392 = vadd.f32 %v278, %v3383
        %v3393 = vadd.f32 %v279, %v3388
        %v3394 = vand.u32 2147483647, %v3390
        %vm3395 = vcmp.le.f32.partialorder %v3394, 0.7853982
        %vm3396 = vcmp.lt.s32.totalorder %v3390, 0
        %v3397 = vand.u32 %v3390, 2139095040
        %v3398 = vshrl.u32 %v3397, 23
        %v3399 = vsub.s32 %v3398, 127
        %v3400 = vand.u32 2147483647, %v3390
        %v3401 = vand.u32 %v3400, 8388607
        %v3402 = vor.u32 %v3401, 8388608
        %v3403 = vsub.s32 0, %v3402
        %v3404 = vadd.s32 %v3399, 1
        %vm3405 = vcmp.gt.s32.totalorder %v3404, 0
        %v3406 = vsel %vm3405, %v3404, 0
        %v3407 = vshrl.u32 %v3406, 5
        %v3408 = vand.u32 %v3406, 31
        %v3409 = vsub.s32 32, %v3408
        %v3410 = vshrl.u32 683565275, %v3409
        %v3411 = vshll.u32 683565275, %v3408
        %v3412 = vshrl.u32 2475754826, %v3409
        %v3413 = vor.u32 %v3411, %v3412
        %v3414 = vshll.u32 2475754826, %v3408
        %v3415 = vshrl.u32 2131351028, %v3409
        %v3416 = vor.u32 %v3414, %v3415
        %v3417 = vshll.u32 2131351028, %v3408
        %v3418 = vshrl.u32 2102212464, %v3409
        %v3419 = vor.u32 %v3417, %v3418
        %v3420 = vshll.u32 2102212464, %v3408
        %v3421 = vshrl.u32 920167782, %v3409
        %v3422 = vor.u32 %v3420, %v3421
        %v3423 = vshll.u32 920167782, %v3408
        %v3424 = vshrl.u32 1326507024, %v3409
        %v3425 = vor.u32 %v3423, %v3424
        %vm3426 = vcmp.lt.s32.totalorder %v3407, 1
        %vm3427 = vcmp.lt.s32.totalorder %v3407, 2
        %vm3428 = vcmp.lt.s32.totalorder %v3407, 3
        %vm3429 = vcmp.lt.s32.totalorder %v3407, 4
        %v3430 = vsel %vm3426, %v3410, %v3413
        %v3431 = vsel %vm3429, %v3419, 2102212464
        %v3432 = vsel %vm3428, %v3416, %v3431
        %v3433 = vsel %vm3427, %v3430, %v3432
        %v3434 = vsel %vm3426, %v3413, %v3416
        %v3435 = vsel %vm3429, %v3422, 920167782
        %v3436 = vsel %vm3428, %v3419, %v3435
        %v3437 = vsel %vm3427, %v3434, %v3436
        %v3438 = vsel %vm3426, %v3416, %v3419
        %v3439 = vsel %vm3429, %v3425, 1326507024
        %v3440 = vsel %vm3428, %v3422, %v3439
        %v3441 = vsel %vm3427, %v3438, %v3440
        %v3442 = vshll.u32 %v3402, 8
        %v3443 = vmul.u32.u64.compose %v3442, %v3441
        %v3444 = vextract.low.u32 %v3443
        %v3445 = vextract.high.u32 %v3443
        %v3446 = vmul.u32.u64.compose %v3442, %v3437
        %v3447 = vextract.low.u32 %v3446
        %v3448 = vextract.high.u32 %v3446
        %v3449 = vmul.u32 %v3442, %v3433
        %v3450 = vadd.s32 %v3445, %v3447
        %vm3451 = vc.u32 %v3445, %v3447
        %v3452 = vadd.s32 %v3448, 1
        %v3453 = vsel %vm3451, %v3452, %v3448
        %v3454 = vadd.s32 %v3449, %v3453
        %v3455 = vadd.s32 %v3454, 536870912
        %v3456 = vshrl.u32 %v3455, 30
        %v3457 = vshll.u32 %v3456, 30
        %v3458 = vsub.s32 %v3454, %v3457
        %vm3459 = vcmp.lt.s32.totalorder %v3458, 0
        %v3460 = vsub.s32 0, %v3458
        %v3461 = vsel %vm3459, %v3460, %v3458
        %v3462 = vclz %v3461
        %v3463 = vsub.s32 %v3462, 2
        %vm3464 = vcmp.gt.s32.totalorder 0, %v3463
        %v3465 = vsel %vm3464, 0, %v3463
        %v3466 = vsub.s32 32, %v3465
        %v3467 = vshll.u32 %v3458, %v3465
        %v3468 = vshrl.u32 %v3450, %v3466
        %v3469 = vor.u32 %v3467, %v3468
        %v3470 = vsub.s32 4294967266, %v3465
        %v3471 = vadd.s32 %v3470, 127
        %v3472 = vshll.u32 %v3471, 23
        %v3473 = vor.u32 4788187, %v3472
        %v3474 = vand.u32 2147483647, %v3473
        %v3476 = vcvt.s32.f32 %v3469
        %v3477 = vmul.f32 %v3476, %v3474
        %v3478 = vxor.u32 %v3477, 2147483648
        %v3479 = vsel %vm3396, %v3478, %v3477
        %v3480 = vsub.s32 4, %v3456
        %v3481 = vsel %vm3396, %v3480, %v3456
        %v3482 = vsel %vm3395, %v3390, %v3479
        %v3483 = vsel %vm3395, 0, %v3481
        %v3484 = vcosq.f32.pop %v3482
        %v3485 = vsinq.f32.pop %v3482
        %vm3486 = vweird.f32 %v3390
        %v3487 = vadd.s32 %v3483, 3
        %v3488 = vand.u32 %v3487, 3
        %vm3489 = vcmp.lt.s32.totalorder %v3488, 2
        %vm3490 = vcmp.eq.s32.totalorder %v3488, 0
        %v3491 = vxor.u32 %v3485, 2147483648
        %v3492 = vsel %vm3490, %v3484, %v3491
        %vm3493 = vcmp.eq.s32.totalorder %v3488, 2
        %v3494 = vxor.u32 %v3484, 2147483648
        %v3495 = vsel %vm3493, %v3494, %v3485
        %v3496 = vsel %vm3489, %v3492, %v3495
        %v3497 = vsel %vm3486, nan, %v3496
        %v3498 = vand.u32 2147483647, %v3391
        %vm3499 = vcmp.le.f32.partialorder %v3498, 0.7853982
        %vm3500 = vcmp.lt.s32.totalorder %v3391, 0
        %v3501 = vand.u32 %v3391, 2139095040
        %v3502 = vshrl.u32 %v3501, 23
        %v3503 = vsub.s32 %v3502, 127
        %v3504 = vand.u32 2147483647, %v3391
        %v3505 = vand.u32 %v3504, 8388607
        %v3506 = vor.u32 %v3505, 8388608
        %v3507 = vsub.s32 0, %v3506
        %v3508 = vadd.s32 %v3503, 1
        %vm3509 = vcmp.gt.s32.totalorder %v3508, 0
        %v3510 = vsel %vm3509, %v3508, 0
        %v3511 = vshrl.u32 %v3510, 5
        %v3512 = vand.u32 %v3510, 31
        %v3513 = vsub.s32 32, %v3512
        %v3514 = vshrl.u32 683565275, %v3513
        %v3515 = vshll.u32 683565275, %v3512
        %v3516 = vshrl.u32 2475754826, %v3513
        %v3517 = vor.u32 %v3515, %v3516
        %v3518 = vshll.u32 2475754826, %v3512
        %v3519 = vshrl.u32 2131351028, %v3513
        %v3520 = vor.u32 %v3518, %v3519
        %v3521 = vshll.u32 2131351028, %v3512
        %v3522 = vshrl.u32 2102212464, %v3513
        %v3523 = vor.u32 %v3521, %v3522
        %v3524 = vshll.u32 2102212464, %v3512
        %v3525 = vshrl.u32 920167782, %v3513
        %v3526 = vor.u32 %v3524, %v3525
        %v3527 = vshll.u32 920167782, %v3512
        %v3528 = vshrl.u32 1326507024, %v3513
        %v3529 = vor.u32 %v3527, %v3528
        %vm3530 = vcmp.lt.s32.totalorder %v3511, 1
        %vm3531 = vcmp.lt.s32.totalorder %v3511, 2
        %vm3532 = vcmp.lt.s32.totalorder %v3511, 3
        %vm3533 = vcmp.lt.s32.totalorder %v3511, 4
        %v3534 = vsel %vm3530, %v3514, %v3517
        %v3535 = vsel %vm3533, %v3523, 2102212464
        %v3536 = vsel %vm3532, %v3520, %v3535
        %v3537 = vsel %vm3531, %v3534, %v3536
        %v3538 = vsel %vm3530, %v3517, %v3520
        %v3539 = vsel %vm3533, %v3526, 920167782
        %v3540 = vsel %vm3532, %v3523, %v3539
        %v3541 = vsel %vm3531, %v3538, %v3540
        %v3542 = vsel %vm3530, %v3520, %v3523
        %v3543 = vsel %vm3533, %v3529, 1326507024
        %v3544 = vsel %vm3532, %v3526, %v3543
        %v3545 = vsel %vm3531, %v3542, %v3544
        %v3546 = vshll.u32 %v3506, 8
        %v3547 = vmul.u32.u64.compose %v3546, %v3545
        %v3548 = vextract.low.u32 %v3547
        %v3549 = vextract.high.u32 %v3547
        %v3550 = vmul.u32.u64.compose %v3546, %v3541
        %v3551 = vextract.low.u32 %v3550
        %v3552 = vextract.high.u32 %v3550
        %v3553 = vmul.u32 %v3546, %v3537
        %v3554 = vadd.s32 %v3549, %v3551
        %vm3555 = vc.u32 %v3549, %v3551
        %v3556 = vadd.s32 %v3552, 1
        %v3557 = vsel %vm3555, %v3556, %v3552
        %v3558 = vadd.s32 %v3553, %v3557
        %v3559 = vadd.s32 %v3558, 536870912
        %v3560 = vshrl.u32 %v3559, 30
        %v3561 = vshll.u32 %v3560, 30
        %v3562 = vsub.s32 %v3558, %v3561
        %vm3563 = vcmp.lt.s32.totalorder %v3562, 0
        %v3564 = vsub.s32 0, %v3562
        %v3565 = vsel %vm3563, %v3564, %v3562
        %v3566 = vclz %v3565
        %v3567 = vsub.s32 %v3566, 2
        %vm3568 = vcmp.gt.s32.totalorder 0, %v3567
        %v3569 = vsel %vm3568, 0, %v3567
        %v3570 = vsub.s32 32, %v3569
        %v3571 = vshll.u32 %v3562, %v3569
        %v3572 = vshrl.u32 %v3554, %v3570
        %v3573 = vor.u32 %v3571, %v3572
        %v3574 = vsub.s32 4294967266, %v3569
        %v3575 = vadd.s32 %v3574, 127
        %v3576 = vshll.u32 %v3575, 23
        %v3577 = vor.u32 4788187, %v3576
        %v3578 = vand.u32 2147483647, %v3577
        %v3580 = vcvt.s32.f32 %v3573
        %v3581 = vmul.f32 %v3580, %v3578
        %v3582 = vxor.u32 %v3581, 2147483648
        %v3583 = vsel %vm3500, %v3582, %v3581
        %v3584 = vsub.s32 4, %v3560
        %v3585 = vsel %vm3500, %v3584, %v3560
        %v3586 = vsel %vm3499, %v3391, %v3583
        %v3587 = vsel %vm3499, 0, %v3585
        %v3588 = vcosq.f32.pop %v3586
        %v3589 = vsinq.f32.pop %v3586
        %vm3590 = vweird.f32 %v3391
        %v3591 = vadd.s32 %v3587, 3
        %v3592 = vand.u32 %v3591, 3
        %vm3593 = vcmp.lt.s32.totalorder %v3592, 2
        %vm3594 = vcmp.eq.s32.totalorder %v3592, 0
        %v3595 = vxor.u32 %v3589, 2147483648
        %v3596 = vsel %vm3594, %v3588, %v3595
        %vm3597 = vcmp.eq.s32.totalorder %v3592, 2
        %v3598 = vxor.u32 %v3588, 2147483648
        %v3599 = vsel %vm3597, %v3598, %v3589
        %v3600 = vsel %vm3593, %v3596, %v3599
        %v3601 = vsel %vm3590, nan, %v3600
        %v3602 = vand.u32 2147483647, %v3392
        %vm3603 = vcmp.le.f32.partialorder %v3602, 0.7853982
        %vm3604 = vcmp.lt.s32.totalorder %v3392, 0
        %v3605 = vand.u32 %v3392, 2139095040
        %v3606 = vshrl.u32 %v3605, 23
        %v3607 = vsub.s32 %v3606, 127
        %v3608 = vand.u32 2147483647, %v3392
        %v3609 = vand.u32 %v3608, 8388607
        %v3610 = vor.u32 %v3609, 8388608
        %v3611 = vsub.s32 0, %v3610
        %v3612 = vadd.s32 %v3607, 1
        %vm3613 = vcmp.gt.s32.totalorder %v3612, 0
        %v3614 = vsel %vm3613, %v3612, 0
        %v3615 = vshrl.u32 %v3614, 5
        %v3616 = vand.u32 %v3614, 31
        %v3617 = vsub.s32 32, %v3616
        %v3618 = vshrl.u32 683565275, %v3617
        %v3619 = vshll.u32 683565275, %v3616
        %v3620 = vshrl.u32 2475754826, %v3617
        %v3621 = vor.u32 %v3619, %v3620
        %v3622 = vshll.u32 2475754826, %v3616
        %v3623 = vshrl.u32 2131351028, %v3617
        %v3624 = vor.u32 %v3622, %v3623
        %v3625 = vshll.u32 2131351028, %v3616
        %v3626 = vshrl.u32 2102212464, %v3617
        %v3627 = vor.u32 %v3625, %v3626
        %v3628 = vshll.u32 2102212464, %v3616
        %v3629 = vshrl.u32 920167782, %v3617
        %v3630 = vor.u32 %v3628, %v3629
        %v3631 = vshll.u32 920167782, %v3616
        %v3632 = vshrl.u32 1326507024, %v3617
        %v3633 = vor.u32 %v3631, %v3632
        %vm3634 = vcmp.lt.s32.totalorder %v3615, 1
        %vm3635 = vcmp.lt.s32.totalorder %v3615, 2
        %vm3636 = vcmp.lt.s32.totalorder %v3615, 3
        %vm3637 = vcmp.lt.s32.totalorder %v3615, 4
        %v3638 = vsel %vm3634, %v3618, %v3621
        %v3639 = vsel %vm3637, %v3627, 2102212464
        %v3640 = vsel %vm3636, %v3624, %v3639
        %v3641 = vsel %vm3635, %v3638, %v3640
        %v3642 = vsel %vm3634, %v3621, %v3624
        %v3643 = vsel %vm3637, %v3630, 920167782
        %v3644 = vsel %vm3636, %v3627, %v3643
        %v3645 = vsel %vm3635, %v3642, %v3644
        %v3646 = vsel %vm3634, %v3624, %v3627
        %v3647 = vsel %vm3637, %v3633, 1326507024
        %v3648 = vsel %vm3636, %v3630, %v3647
        %v3649 = vsel %vm3635, %v3646, %v3648
        %v3650 = vshll.u32 %v3610, 8
        %v3651 = vmul.u32.u64.compose %v3650, %v3649
        %v3652 = vextract.low.u32 %v3651
        %v3653 = vextract.high.u32 %v3651
        %v3654 = vmul.u32.u64.compose %v3650, %v3645
        %v3655 = vextract.low.u32 %v3654
        %v3656 = vextract.high.u32 %v3654
        %v3657 = vmul.u32 %v3650, %v3641
        %v3658 = vadd.s32 %v3653, %v3655
        %vm3659 = vc.u32 %v3653, %v3655
        %v3660 = vadd.s32 %v3656, 1
        %v3661 = vsel %vm3659, %v3660, %v3656
        %v3662 = vadd.s32 %v3657, %v3661
        %v3663 = vadd.s32 %v3662, 536870912
        %v3664 = vshrl.u32 %v3663, 30
        %v3665 = vshll.u32 %v3664, 30
        %v3666 = vsub.s32 %v3662, %v3665
        %vm3667 = vcmp.lt.s32.totalorder %v3666, 0
        %v3668 = vsub.s32 0, %v3666
        %v3669 = vsel %vm3667, %v3668, %v3666
        %v3670 = vclz %v3669
        %v3671 = vsub.s32 %v3670, 2
        %vm3672 = vcmp.gt.s32.totalorder 0, %v3671
        %v3673 = vsel %vm3672, 0, %v3671
        %v3674 = vsub.s32 32, %v3673
        %v3675 = vshll.u32 %v3666, %v3673
        %v3676 = vshrl.u32 %v3658, %v3674
        %v3677 = vor.u32 %v3675, %v3676
        %v3678 = vsub.s32 4294967266, %v3673
        %v3679 = vadd.s32 %v3678, 127
        %v3680 = vshll.u32 %v3679, 23
        %v3681 = vor.u32 4788187, %v3680
        %v3682 = vand.u32 2147483647, %v3681
        %v3684 = vcvt.s32.f32 %v3677
        %v3685 = vmul.f32 %v3684, %v3682
        %v3686 = vxor.u32 %v3685, 2147483648
        %v3687 = vsel %vm3604, %v3686, %v3685
        %v3688 = vsub.s32 4, %v3664
        %v3689 = vsel %vm3604, %v3688, %v3664
        %v3690 = vsel %vm3603, %v3392, %v3687
        %v3691 = vsel %vm3603, 0, %v3689
        %v3692 = vcosq.f32.pop %v3690
        %v3693 = vsinq.f32.pop %v3690
        %vm3694 = vweird.f32 %v3392
        %v3695 = vadd.s32 %v3691, 3
        %v3696 = vand.u32 %v3695, 3
        %vm3697 = vcmp.lt.s32.totalorder %v3696, 2
        %vm3698 = vcmp.eq.s32.totalorder %v3696, 0
        %v3699 = vxor.u32 %v3693, 2147483648
        %v3700 = vsel %vm3698, %v3692, %v3699
        %vm3701 = vcmp.eq.s32.totalorder %v3696, 2
        %v3702 = vxor.u32 %v3692, 2147483648
        %v3703 = vsel %vm3701, %v3702, %v3693
        %v3704 = vsel %vm3697, %v3700, %v3703
        %v3705 = vsel %vm3694, nan, %v3704
        %v3706 = vand.u32 2147483647, %v3393
        %vm3707 = vcmp.le.f32.partialorder %v3706, 0.7853982
        %vm3708 = vcmp.lt.s32.totalorder %v3393, 0
        %v3709 = vand.u32 %v3393, 2139095040
        %v3710 = vshrl.u32 %v3709, 23
        %v3711 = vsub.s32 %v3710, 127
        %v3712 = vand.u32 2147483647, %v3393
        %v3713 = vand.u32 %v3712, 8388607
        %v3714 = vor.u32 %v3713, 8388608
        %v3715 = vsub.s32 0, %v3714
        %v3716 = vadd.s32 %v3711, 1
        %vm3717 = vcmp.gt.s32.totalorder %v3716, 0
        %v3718 = vsel %vm3717, %v3716, 0
        %v3719 = vshrl.u32 %v3718, 5
        %v3720 = vand.u32 %v3718, 31
        %v3721 = vsub.s32 32, %v3720
        %v3722 = vshrl.u32 683565275, %v3721
        %v3723 = vshll.u32 683565275, %v3720
        %v3724 = vshrl.u32 2475754826, %v3721
        %v3725 = vor.u32 %v3723, %v3724
        %v3726 = vshll.u32 2475754826, %v3720
        %v3727 = vshrl.u32 2131351028, %v3721
        %v3728 = vor.u32 %v3726, %v3727
        %v3729 = vshll.u32 2131351028, %v3720
        %v3730 = vshrl.u32 2102212464, %v3721
        %v3731 = vor.u32 %v3729, %v3730
        %v3732 = vshll.u32 2102212464, %v3720
        %v3733 = vshrl.u32 920167782, %v3721
        %v3734 = vor.u32 %v3732, %v3733
        %v3735 = vshll.u32 920167782, %v3720
        %v3736 = vshrl.u32 1326507024, %v3721
        %v3737 = vor.u32 %v3735, %v3736
        %vm3738 = vcmp.lt.s32.totalorder %v3719, 1
        %vm3739 = vcmp.lt.s32.totalorder %v3719, 2
        %vm3740 = vcmp.lt.s32.totalorder %v3719, 3
        %vm3741 = vcmp.lt.s32.totalorder %v3719, 4
        %v3742 = vsel %vm3738, %v3722, %v3725
        %v3743 = vsel %vm3741, %v3731, 2102212464
        %v3744 = vsel %vm3740, %v3728, %v3743
        %v3745 = vsel %vm3739, %v3742, %v3744
        %v3746 = vsel %vm3738, %v3725, %v3728
        %v3747 = vsel %vm3741, %v3734, 920167782
        %v3748 = vsel %vm3740, %v3731, %v3747
        %v3749 = vsel %vm3739, %v3746, %v3748
        %v3750 = vsel %vm3738, %v3728, %v3731
        %v3751 = vsel %vm3741, %v3737, 1326507024
        %v3752 = vsel %vm3740, %v3734, %v3751
        %v3753 = vsel %vm3739, %v3750, %v3752
        %v3754 = vshll.u32 %v3714, 8
        %v3755 = vmul.u32.u64.compose %v3754, %v3753
        %v3756 = vextract.low.u32 %v3755
        %v3757 = vextract.high.u32 %v3755
        %v3758 = vmul.u32.u64.compose %v3754, %v3749
        %v3759 = vextract.low.u32 %v3758
        %v3760 = vextract.high.u32 %v3758
        %v3761 = vmul.u32 %v3754, %v3745
        %v3762 = vadd.s32 %v3757, %v3759
        %vm3763 = vc.u32 %v3757, %v3759
        %v3764 = vadd.s32 %v3760, 1
        %v3765 = vsel %vm3763, %v3764, %v3760
        %v3766 = vadd.s32 %v3761, %v3765
        %v3767 = vadd.s32 %v3766, 536870912
        %v3768 = vshrl.u32 %v3767, 30
        %v3769 = vshll.u32 %v3768, 30
        %v3770 = vsub.s32 %v3766, %v3769
        %vm3771 = vcmp.lt.s32.totalorder %v3770, 0
        %v3772 = vsub.s32 0, %v3770
        %v3773 = vsel %vm3771, %v3772, %v3770
        %v3774 = vclz %v3773
        %v3775 = vsub.s32 %v3774, 2
        %vm3776 = vcmp.gt.s32.totalorder 0, %v3775
        %v3777 = vsel %vm3776, 0, %v3775
        %v3778 = vsub.s32 32, %v3777
        %v3779 = vshll.u32 %v3770, %v3777
        %v3780 = vshrl.u32 %v3762, %v3778
        %v3781 = vor.u32 %v3779, %v3780
        %v3782 = vsub.s32 4294967266, %v3777
        %v3783 = vadd.s32 %v3782, 127
        %v3784 = vshll.u32 %v3783, 23
        %v3785 = vor.u32 4788187, %v3784
        %v3786 = vand.u32 2147483647, %v3785
        %v3788 = vcvt.s32.f32 %v3781
        %v3789 = vmul.f32 %v3788, %v3786
        %v3790 = vxor.u32 %v3789, 2147483648
        %v3791 = vsel %vm3708, %v3790, %v3789
        %v3792 = vsub.s32 4, %v3768
        %v3793 = vsel %vm3708, %v3792, %v3768
        %v3794 = vsel %vm3707, %v3393, %v3791
        %v3795 = vsel %vm3707, 0, %v3793
        %v3796 = vcosq.f32.pop %v3794
        %v3797 = vsinq.f32.pop %v3794
        %vm3798 = vweird.f32 %v3393
        %v3799 = vadd.s32 %v3795, 3
        %v3800 = vand.u32 %v3799, 3
        %vm3801 = vcmp.lt.s32.totalorder %v3800, 2
        %vm3802 = vcmp.eq.s32.totalorder %v3800, 0
        %v3803 = vxor.u32 %v3797, 2147483648
        %v3804 = vsel %vm3802, %v3796, %v3803
        %vm3805 = vcmp.eq.s32.totalorder %v3800, 2
        %v3806 = vxor.u32 %v3796, 2147483648
        %v3807 = vsel %vm3805, %v3806, %v3797
        %v3808 = vsel %vm3801, %v3804, %v3807
        %v3809 = vsel %vm3798, nan, %v3808
        %3810 = vmatprep.subr.mxu0 0.0
        %3811 = vmatpush1.msra.mxu0 0.0
        %3812 = vmatprep.subr.mxu0 0.0
        %3813 = vmatpush1.msra.mxu0 0.0
        %3814 = vmatprep.subr.mxu0 0.0
        %3815 = vmatpush1.msra.mxu0 0.0
        %3816 = vmatprep.subr.mxu0 0.0
        %3817 = vmatpush1.msra.mxu0 0.0
        %3818 = vmatprep.subr.mxu0 0.0
        %3819 = vmatpush1.msra.mxu0 0.0
        %3820 = vmatprep.subr.mxu0 0.0
        %3821 = vmatpush1.msra.mxu0 0.0
        %3822 = vmatprep.subr.mxu0 0.0
        %3823 = vmatpush1.msra.mxu0 0.0
        %3824 = vmatprep.subr.mxu0 0.0
        %3825 = vmatpush1.msra.mxu0 0.0
        %3826 = vmatprep.subr.mxu0 0.0
        %3827 = vmatpush1.msra.mxu0 0.0
        %3828 = vmatprep.subr.mxu0 0.0
        %3829 = vmatpush1.msra.mxu0 0.0
        %3830 = vmatprep.subr.mxu0 0.0
        %3831 = vmatpush1.msra.mxu0 0.0
        %3832 = vmatprep.subr.mxu0 0.0
        %3833 = vmatpush1.msra.mxu0 0.0
        %3834 = vmatprep.subr.mxu0 0.0
        %v3835 = vand.u32 %v3809, 4294901760
        %3836 = vmatpush1.msra.mxu0 %v3835
        %3837 = vmatprep.subr.mxu0 0.0
        %v3838 = vand.u32 %v3705, 4294901760
        %3839 = vmatpush1.msra.mxu0 %v3838
        %3840 = vmatprep.subr.mxu0 0.0
        %v3841 = vand.u32 %v3601, 4294901760
        %3842 = vmatpush1.msra.mxu0 %v3841
        %3843 = vmatprep.subr.mxu0 0.0
        %v3844 = vand.u32 %v3497, 4294901760
        %3845 = vmatpush1.msra.mxu0 %v3844
        %3846 = vmatprep.subr.mxu0 0.0
        %3847 = vmatpush2.msra.mxu0 0.0
        %3848 = vmatprep.subr.mxu0 0.0
        %3849 = vmatpush2.msra.mxu0 0.0
        %3850 = vmatprep.subr.mxu0 0.0
        %3851 = vmatpush2.msra.mxu0 0.0
        %3852 = vmatprep.subr.mxu0 0.0
        %3853 = vmatpush2.msra.mxu0 0.0
        %3854 = vmatprep.subr.mxu0 0.0
        %3855 = vmatpush2.msra.mxu0 0.0
        %3856 = vmatprep.subr.mxu0 0.0
        %3857 = vmatpush2.msra.mxu0 0.0
        %3858 = vmatprep.subr.mxu0 0.0
        %3859 = vmatpush2.msra.mxu0 0.0
        %3860 = vmatprep.subr.mxu0 0.0
        %3861 = vmatpush2.msra.mxu0 0.0
        %3862 = vmatprep.subr.mxu0 0.0
        %3863 = vmatpush2.msra.mxu0 0.0
        %3864 = vmatprep.subr.mxu0 0.0
        %3865 = vmatpush2.msra.mxu0 0.0
        %3866 = vmatprep.subr.mxu0 0.0
        %3867 = vmatpush2.msra.mxu0 0.0
        %3868 = vmatprep.subr.mxu0 0.0
        %3869 = vmatpush2.msra.mxu0 0.0
        %3870 = vmatprep.subr.mxu0 0.0
        %3871 = vmatpush2.msra.mxu0 0.0
        %3872 = vmatprep.subr.mxu0 0.0
        %3873 = vmatpush2.msra.mxu0 0.0
        %3874 = vmatprep.subr.mxu0 0.0
        %3875 = vmatpush2.msra.mxu0 0.0
        %3876 = vmatprep.subr.mxu0 0.0
        %3877 = vmatpush2.msra.mxu0 0.0
        %3878 = vmatprep.mubr.f32.mxu0 0.0
        %v3879 = vand.u32 %v768, 4294901760
        %v3880 = vsub.f32 %v768, %v3879
        %v3881 = vand.u32 %v3880, 4294901760
        %v3882 = vsub.f32 %v3880, %v3881
        %v3883 = vand.u32 %v3882, 4294901760
        %3884 = vmatmul.mubr.f32.gmra.mxu0 %v3883
        %v3885 = vpop.f32.mrf.mxu0
        %v3886 = vadd.f32 %v749, %v3885
        %v3887 = vpop.f32.mrf.mxu0
        %3888 = vmatprep.mubr.f32.mxu0 0.0
        %v3889 = vand.u32 %v771, 4294901760
        %v3890 = vsub.f32 %v771, %v3889
        %v3891 = vand.u32 %v3890, 4294901760
        %v3892 = vsub.f32 %v3890, %v3891
        %v3893 = vand.u32 %v3892, 4294901760
        %3894 = vmatmul.mubr.f32.gmra.mxu0 %v3893
        %v3895 = vpop.f32.mrf.mxu0
        %v3896 = vadd.f32 %v754, %v3895
        %v3897 = vpop.f32.mrf.mxu0
        %3898 = vmatprep.mubr.f32.mxu0 0.0
        %v3899 = vand.u32 %v774, 4294901760
        %v3900 = vsub.f32 %v774, %v3899
        %v3901 = vand.u32 %v3900, 4294901760
        %v3902 = vsub.f32 %v3900, %v3901
        %v3903 = vand.u32 %v3902, 4294901760
        %3904 = vmatmul.mubr.f32.gmra.mxu0 %v3903
        %v3905 = vpop.f32.mrf.mxu0
        %v3906 = vadd.f32 %v759, %v3905
        %v3907 = vpop.f32.mrf.mxu0
        %3908 = vmatprep.mubr.f32.mxu0 0.0
        %v3909 = vand.u32 %v777, 4294901760
        %v3910 = vsub.f32 %v777, %v3909
        %v3911 = vand.u32 %v3910, 4294901760
        %v3912 = vsub.f32 %v3910, %v3911
        %v3913 = vand.u32 %v3912, 4294901760
        %3914 = vmatmul.mubr.f32.gmra.mxu0 %v3913
        %v3915 = vpop.f32.mrf.mxu0
        %v3916 = vadd.f32 %v764, %v3915
        %v3917 = vpop.f32.mrf.mxu0
        %3918 = vdwg.mxu0
        %3919 = vmatprep.subr.mxu0 0.0
        %3920 = vmatpush1.msra.mxu0 0.0
        %3921 = vmatprep.subr.mxu0 0.0
        %3922 = vmatpush1.msra.mxu0 0.0
        %3923 = vmatprep.subr.mxu0 0.0
        %3924 = vmatpush1.msra.mxu0 0.0
        %3925 = vmatprep.subr.mxu0 0.0
        %3926 = vmatpush1.msra.mxu0 0.0
        %3927 = vmatprep.subr.mxu0 0.0
        %3928 = vmatpush1.msra.mxu0 0.0
        %3929 = vmatprep.subr.mxu0 0.0
        %3930 = vmatpush1.msra.mxu0 0.0
        %3931 = vmatprep.subr.mxu0 0.0
        %3932 = vmatpush1.msra.mxu0 0.0
        %3933 = vmatprep.subr.mxu0 0.0
        %3934 = vmatpush1.msra.mxu0 0.0
        %3935 = vmatprep.subr.mxu0 0.0
        %3936 = vmatpush1.msra.mxu0 0.0
        %3937 = vmatprep.subr.mxu0 0.0
        %3938 = vmatpush1.msra.mxu0 0.0
        %3939 = vmatprep.subr.mxu0 0.0
        %3940 = vmatpush1.msra.mxu0 0.0
        %3941 = vmatprep.subr.mxu0 0.0
        %3942 = vmatpush1.msra.mxu0 0.0
        %3943 = vmatprep.subr.mxu0 0.0
        %v3944 = vand.u32 %v3809, 4294901760
        %v3945 = vsub.f32 %v3809, %v3944
        %v3946 = vand.u32 %v3945, 4294901760
        %v3947 = vsub.f32 %v3945, %v3946
        %v3948 = vand.u32 %v3947, 4294901760
        %3949 = vmatpush1.msra.mxu0 %v3948
        %3950 = vmatprep.subr.mxu0 0.0
        %v3951 = vand.u32 %v3705, 4294901760
        %v3952 = vsub.f32 %v3705, %v3951
        %v3953 = vand.u32 %v3952, 4294901760
        %v3954 = vsub.f32 %v3952, %v3953
        %v3955 = vand.u32 %v3954, 4294901760
        %3956 = vmatpush1.msra.mxu0 %v3955
        %3957 = vmatprep.subr.mxu0 0.0
        %v3958 = vand.u32 %v3601, 4294901760
        %v3959 = vsub.f32 %v3601, %v3958
        %v3960 = vand.u32 %v3959, 4294901760
        %v3961 = vsub.f32 %v3959, %v3960
        %v3962 = vand.u32 %v3961, 4294901760
        %3963 = vmatpush1.msra.mxu0 %v3962
        %3964 = vmatprep.subr.mxu0 0.0
        %v3965 = vand.u32 %v3497, 4294901760
        %v3966 = vsub.f32 %v3497, %v3965
        %v3967 = vand.u32 %v3966, 4294901760
        %v3968 = vsub.f32 %v3966, %v3967
        %v3969 = vand.u32 %v3968, 4294901760
        %3970 = vmatpush1.msra.mxu0 %v3969
        %3971 = vmatprep.subr.mxu0 0.0
        %3972 = vmatpush2.msra.mxu0 0.0
        %3973 = vmatprep.subr.mxu0 0.0
        %3974 = vmatpush2.msra.mxu0 0.0
        %3975 = vmatprep.subr.mxu0 0.0
        %3976 = vmatpush2.msra.mxu0 0.0
        %3977 = vmatprep.subr.mxu0 0.0
        %3978 = vmatpush2.msra.mxu0 0.0
        %3979 = vmatprep.subr.mxu0 0.0
        %3980 = vmatpush2.msra.mxu0 0.0
        %3981 = vmatprep.subr.mxu0 0.0
        %3982 = vmatpush2.msra.mxu0 0.0
        %3983 = vmatprep.subr.mxu0 0.0
        %3984 = vmatpush2.msra.mxu0 0.0
        %3985 = vmatprep.subr.mxu0 0.0
        %3986 = vmatpush2.msra.mxu0 0.0
        %3987 = vmatprep.subr.mxu0 0.0
        %3988 = vmatpush2.msra.mxu0 0.0
        %3989 = vmatprep.subr.mxu0 0.0
        %3990 = vmatpush2.msra.mxu0 0.0
        %3991 = vmatprep.subr.mxu0 0.0
        %3992 = vmatpush2.msra.mxu0 0.0
        %3993 = vmatprep.subr.mxu0 0.0
        %3994 = vmatpush2.msra.mxu0 0.0
        %3995 = vmatprep.subr.mxu0 0.0
        %3996 = vmatpush2.msra.mxu0 0.0
        %3997 = vmatprep.subr.mxu0 0.0
        %3998 = vmatpush2.msra.mxu0 0.0
        %3999 = vmatprep.subr.mxu0 0.0
        %4000 = vmatpush2.msra.mxu0 0.0
        %4001 = vmatprep.subr.mxu0 0.0
        %4002 = vmatpush2.msra.mxu0 0.0
        %4003 = vmatprep.mubr.f32.mxu0 0.0
        %v4004 = vand.u32 %v768, 4294901760
        %4005 = vmatmul.mubr.f32.gmra.mxu0 %v4004
        %v4006 = vpop.f32.mrf.mxu0
        %v4007 = vadd.f32 %v3886, %v4006
        %v4008 = vpop.f32.mrf.mxu0
        %4009 = vmatprep.mubr.f32.mxu0 0.0
        %v4010 = vand.u32 %v771, 4294901760
        %4011 = vmatmul.mubr.f32.gmra.mxu0 %v4010
        %v4012 = vpop.f32.mrf.mxu0
        %v4013 = vadd.f32 %v3896, %v4012
        %v4014 = vpop.f32.mrf.mxu0
        %4015 = vmatprep.mubr.f32.mxu0 0.0
        %v4016 = vand.u32 %v774, 4294901760
        %4017 = vmatmul.mubr.f32.gmra.mxu0 %v4016
        %v4018 = vpop.f32.mrf.mxu0
        %v4019 = vadd.f32 %v3906, %v4018
        %v4020 = vpop.f32.mrf.mxu0
        %4021 = vmatprep.mubr.f32.mxu0 0.0
        %v4022 = vand.u32 %v777, 4294901760
        %4023 = vmatmul.mubr.f32.gmra.mxu0 %v4022
        %v4024 = vpop.f32.mrf.mxu0
        %v4025 = vadd.f32 %v3916, %v4024
        %v4026 = vpop.f32.mrf.mxu0
        %4027 = vdwg.mxu0
        %4028 = vmatprep.subr.mxu0 0.0
        %4029 = vmatpush1.msra.mxu0 0.0
        %4030 = vmatprep.subr.mxu0 0.0
        %4031 = vmatpush1.msra.mxu0 0.0
        %4032 = vmatprep.subr.mxu0 0.0
        %4033 = vmatpush1.msra.mxu0 0.0
        %4034 = vmatprep.subr.mxu0 0.0
        %4035 = vmatpush1.msra.mxu0 0.0
        %4036 = vmatprep.subr.mxu0 0.0
        %4037 = vmatpush1.msra.mxu0 0.0
        %4038 = vmatprep.subr.mxu0 0.0
        %4039 = vmatpush1.msra.mxu0 0.0
        %4040 = vmatprep.subr.mxu0 0.0
        %4041 = vmatpush1.msra.mxu0 0.0
        %4042 = vmatprep.subr.mxu0 0.0
        %4043 = vmatpush1.msra.mxu0 0.0
        %4044 = vmatprep.subr.mxu0 0.0
        %4045 = vmatpush1.msra.mxu0 0.0
        %4046 = vmatprep.subr.mxu0 0.0
        %4047 = vmatpush1.msra.mxu0 0.0
        %4048 = vmatprep.subr.mxu0 0.0
        %4049 = vmatpush1.msra.mxu0 0.0
        %4050 = vmatprep.subr.mxu0 0.0
        %4051 = vmatpush1.msra.mxu0 0.0
        %4052 = vmatprep.subr.mxu0 0.0
        %v4053 = vand.u32 %v3809, 4294901760
        %v4054 = vsub.f32 %v3809, %v4053
        %4055 = vmatpush1.msra.mxu0 %v4054
        %4056 = vmatprep.subr.mxu0 0.0
        %v4057 = vand.u32 %v3705, 4294901760
        %v4058 = vsub.f32 %v3705, %v4057
        %4059 = vmatpush1.msra.mxu0 %v4058
        %4060 = vmatprep.subr.mxu0 0.0
        %v4061 = vand.u32 %v3601, 4294901760
        %v4062 = vsub.f32 %v3601, %v4061
        %4063 = vmatpush1.msra.mxu0 %v4062
        %4064 = vmatprep.subr.mxu0 0.0
        %v4065 = vand.u32 %v3497, 4294901760
        %v4066 = vsub.f32 %v3497, %v4065
        %4067 = vmatpush1.msra.mxu0 %v4066
        %4068 = vmatprep.subr.mxu0 0.0
        %4069 = vmatpush2.msra.mxu0 0.0
        %4070 = vmatprep.subr.mxu0 0.0
        %4071 = vmatpush2.msra.mxu0 0.0
        %4072 = vmatprep.subr.mxu0 0.0
        %4073 = vmatpush2.msra.mxu0 0.0
        %4074 = vmatprep.subr.mxu0 0.0
        %4075 = vmatpush2.msra.mxu0 0.0
        %4076 = vmatprep.subr.mxu0 0.0
        %4077 = vmatpush2.msra.mxu0 0.0
        %4078 = vmatprep.subr.mxu0 0.0
        %4079 = vmatpush2.msra.mxu0 0.0
        %4080 = vmatprep.subr.mxu0 0.0
        %4081 = vmatpush2.msra.mxu0 0.0
        %4082 = vmatprep.subr.mxu0 0.0
        %4083 = vmatpush2.msra.mxu0 0.0
        %4084 = vmatprep.subr.mxu0 0.0
        %4085 = vmatpush2.msra.mxu0 0.0
        %4086 = vmatprep.subr.mxu0 0.0
        %4087 = vmatpush2.msra.mxu0 0.0
        %4088 = vmatprep.subr.mxu0 0.0
        %4089 = vmatpush2.msra.mxu0 0.0
        %4090 = vmatprep.subr.mxu0 0.0
        %4091 = vmatpush2.msra.mxu0 0.0
        %4092 = vmatprep.subr.mxu0 0.0
        %4093 = vmatpush2.msra.mxu0 0.0
        %4094 = vmatprep.subr.mxu0 0.0
        %4095 = vmatpush2.msra.mxu0 0.0
        %4096 = vmatprep.subr.mxu0 0.0
        %4097 = vmatpush2.msra.mxu0 0.0
        %4098 = vmatprep.subr.mxu0 0.0
        %4099 = vmatpush2.msra.mxu0 0.0
        %4100 = vmatprep.mubr.f32.mxu0 0.0
        %v4101 = vand.u32 %v768, 4294901760
        %v4102 = vsub.f32 %v768, %v4101
        %4103 = vmatmul.mubr.f32.gmra.mxu0 %v4102
        %v4104 = vpop.f32.mrf.mxu0
        %v4105 = vadd.f32 %v4007, %v4104
        %v4106 = vpop.f32.mrf.mxu0
        %4107 = vmatprep.mubr.f32.mxu0 0.0
        %v4108 = vand.u32 %v771, 4294901760
        %v4109 = vsub.f32 %v771, %v4108
        %4110 = vmatmul.mubr.f32.gmra.mxu0 %v4109
        %v4111 = vpop.f32.mrf.mxu0
        %v4112 = vadd.f32 %v4013, %v4111
        %v4113 = vpop.f32.mrf.mxu0
        %4114 = vmatprep.mubr.f32.mxu0 0.0
        %v4115 = vand.u32 %v774, 4294901760
        %v4116 = vsub.f32 %v774, %v4115
        %4117 = vmatmul.mubr.f32.gmra.mxu0 %v4116
        %v4118 = vpop.f32.mrf.mxu0
        %v4119 = vadd.f32 %v4019, %v4118
        %v4120 = vpop.f32.mrf.mxu0
        %4121 = vmatprep.mubr.f32.mxu0 0.0
        %v4122 = vand.u32 %v777, 4294901760
        %v4123 = vsub.f32 %v777, %v4122
        %4124 = vmatmul.mubr.f32.gmra.mxu0 %v4123
        %v4125 = vpop.f32.mrf.mxu0
        %v4126 = vadd.f32 %v4025, %v4125
        %v4127 = vpop.f32.mrf.mxu0
        %4128 = vdwg.mxu0
        %4129 = vmatprep.subr.mxu0 0.0
        %4130 = vmatpush1.msra.mxu0 0.0
        %4131 = vmatprep.subr.mxu0 0.0
        %4132 = vmatpush1.msra.mxu0 0.0
        %4133 = vmatprep.subr.mxu0 0.0
        %4134 = vmatpush1.msra.mxu0 0.0
        %4135 = vmatprep.subr.mxu0 0.0
        %4136 = vmatpush1.msra.mxu0 0.0
        %4137 = vmatprep.subr.mxu0 0.0
        %4138 = vmatpush1.msra.mxu0 0.0
        %4139 = vmatprep.subr.mxu0 0.0
        %4140 = vmatpush1.msra.mxu0 0.0
        %4141 = vmatprep.subr.mxu0 0.0
        %4142 = vmatpush1.msra.mxu0 0.0
        %4143 = vmatprep.subr.mxu0 0.0
        %4144 = vmatpush1.msra.mxu0 0.0
        %4145 = vmatprep.subr.mxu0 0.0
        %4146 = vmatpush1.msra.mxu0 0.0
        %4147 = vmatprep.subr.mxu0 0.0
        %4148 = vmatpush1.msra.mxu0 0.0
        %4149 = vmatprep.subr.mxu0 0.0
        %4150 = vmatpush1.msra.mxu0 0.0
        %4151 = vmatprep.subr.mxu0 0.0
        %4152 = vmatpush1.msra.mxu0 0.0
        %4153 = vmatprep.subr.mxu0 0.0
        %v4154 = vand.u32 %v3809, 4294901760
        %4155 = vmatpush1.msra.mxu0 %v4154
        %4156 = vmatprep.subr.mxu0 0.0
        %v4157 = vand.u32 %v3705, 4294901760
        %4158 = vmatpush1.msra.mxu0 %v4157
        %4159 = vmatprep.subr.mxu0 0.0
        %v4160 = vand.u32 %v3601, 4294901760
        %4161 = vmatpush1.msra.mxu0 %v4160
        %4162 = vmatprep.subr.mxu0 0.0
        %v4163 = vand.u32 %v3497, 4294901760
        %4164 = vmatpush1.msra.mxu0 %v4163
        %4165 = vmatprep.subr.mxu0 0.0
        %4166 = vmatpush2.msra.mxu0 0.0
        %4167 = vmatprep.subr.mxu0 0.0
        %4168 = vmatpush2.msra.mxu0 0.0
        %4169 = vmatprep.subr.mxu0 0.0
        %4170 = vmatpush2.msra.mxu0 0.0
        %4171 = vmatprep.subr.mxu0 0.0
        %4172 = vmatpush2.msra.mxu0 0.0
        %4173 = vmatprep.subr.mxu0 0.0
        %4174 = vmatpush2.msra.mxu0 0.0
        %4175 = vmatprep.subr.mxu0 0.0
        %4176 = vmatpush2.msra.mxu0 0.0
        %4177 = vmatprep.subr.mxu0 0.0
        %4178 = vmatpush2.msra.mxu0 0.0
        %4179 = vmatprep.subr.mxu0 0.0
        %4180 = vmatpush2.msra.mxu0 0.0
        %4181 = vmatprep.subr.mxu0 0.0
        %4182 = vmatpush2.msra.mxu0 0.0
        %4183 = vmatprep.subr.mxu0 0.0
        %4184 = vmatpush2.msra.mxu0 0.0
        %4185 = vmatprep.subr.mxu0 0.0
        %4186 = vmatpush2.msra.mxu0 0.0
        %4187 = vmatprep.subr.mxu0 0.0
        %4188 = vmatpush2.msra.mxu0 0.0
        %4189 = vmatprep.subr.mxu0 0.0
        %4190 = vmatpush2.msra.mxu0 0.0
        %4191 = vmatprep.subr.mxu0 0.0
        %4192 = vmatpush2.msra.mxu0 0.0
        %4193 = vmatprep.subr.mxu0 0.0
        %4194 = vmatpush2.msra.mxu0 0.0
        %4195 = vmatprep.subr.mxu0 0.0
        %4196 = vmatpush2.msra.mxu0 0.0
        %4197 = vmatprep.mubr.f32.mxu0 0.0
        %v4198 = vand.u32 %v768, 4294901760
        %v4199 = vsub.f32 %v768, %v4198
        %v4200 = vand.u32 %v4199, 4294901760
        %4201 = vmatmul.mubr.f32.gmra.mxu0 %v4200
        %v4202 = vpop.f32.mrf.mxu0
        %v4203 = vadd.f32 %v4105, %v4202
        %v4204 = vpop.f32.mrf.mxu0
        %4205 = vmatprep.mubr.f32.mxu0 0.0
        %v4206 = vand.u32 %v771, 4294901760
        %v4207 = vsub.f32 %v771, %v4206
        %v4208 = vand.u32 %v4207, 4294901760
        %4209 = vmatmul.mubr.f32.gmra.mxu0 %v4208
        %v4210 = vpop.f32.mrf.mxu0
        %v4211 = vadd.f32 %v4112, %v4210
        %v4212 = vpop.f32.mrf.mxu0
        %4213 = vmatprep.mubr.f32.mxu0 0.0
        %v4214 = vand.u32 %v774, 4294901760
        %v4215 = vsub.f32 %v774, %v4214
        %v4216 = vand.u32 %v4215, 4294901760
        %4217 = vmatmul.mubr.f32.gmra.mxu0 %v4216
        %v4218 = vpop.f32.mrf.mxu0
        %v4219 = vadd.f32 %v4119, %v4218
        %v4220 = vpop.f32.mrf.mxu0
        %4221 = vmatprep.mubr.f32.mxu0 0.0
        %v4222 = vand.u32 %v777, 4294901760
        %v4223 = vsub.f32 %v777, %v4222
        %v4224 = vand.u32 %v4223, 4294901760
        %4225 = vmatmul.mubr.f32.gmra.mxu0 %v4224
        %v4226 = vpop.f32.mrf.mxu0
        %v4227 = vadd.f32 %v4126, %v4226
        %v4228 = vpop.f32.mrf.mxu0
        %4229 = vdwg.mxu0
        %4230 = vmatprep.subr.mxu0 0.0
        %4231 = vmatpush1.msra.mxu0 0.0
        %4232 = vmatprep.subr.mxu0 0.0
        %4233 = vmatpush1.msra.mxu0 0.0
        %4234 = vmatprep.subr.mxu0 0.0
        %4235 = vmatpush1.msra.mxu0 0.0
        %4236 = vmatprep.subr.mxu0 0.0
        %4237 = vmatpush1.msra.mxu0 0.0
        %4238 = vmatprep.subr.mxu0 0.0
        %4239 = vmatpush1.msra.mxu0 0.0
        %4240 = vmatprep.subr.mxu0 0.0
        %4241 = vmatpush1.msra.mxu0 0.0
        %4242 = vmatprep.subr.mxu0 0.0
        %4243 = vmatpush1.msra.mxu0 0.0
        %4244 = vmatprep.subr.mxu0 0.0
        %4245 = vmatpush1.msra.mxu0 0.0
        %4246 = vmatprep.subr.mxu0 0.0
        %4247 = vmatpush1.msra.mxu0 0.0
        %4248 = vmatprep.subr.mxu0 0.0
        %4249 = vmatpush1.msra.mxu0 0.0
        %4250 = vmatprep.subr.mxu0 0.0
        %4251 = vmatpush1.msra.mxu0 0.0
        %4252 = vmatprep.subr.mxu0 0.0
        %4253 = vmatpush1.msra.mxu0 0.0
        %4254 = vmatprep.subr.mxu0 0.0
        %v4255 = vand.u32 %v3809, 4294901760
        %v4256 = vsub.f32 %v3809, %v4255
        %v4257 = vand.u32 %v4256, 4294901760
        %4258 = vmatpush1.msra.mxu0 %v4257
        %4259 = vmatprep.subr.mxu0 0.0
        %v4260 = vand.u32 %v3705, 4294901760
        %v4261 = vsub.f32 %v3705, %v4260
        %v4262 = vand.u32 %v4261, 4294901760
        %4263 = vmatpush1.msra.mxu0 %v4262
        %4264 = vmatprep.subr.mxu0 0.0
        %v4265 = vand.u32 %v3601, 4294901760
        %v4266 = vsub.f32 %v3601, %v4265
        %v4267 = vand.u32 %v4266, 4294901760
        %4268 = vmatpush1.msra.mxu0 %v4267
        %4269 = vmatprep.subr.mxu0 0.0
        %v4270 = vand.u32 %v3497, 4294901760
        %v4271 = vsub.f32 %v3497, %v4270
        %v4272 = vand.u32 %v4271, 4294901760
        %4273 = vmatpush1.msra.mxu0 %v4272
        %4274 = vmatprep.subr.mxu0 0.0
        %4275 = vmatpush2.msra.mxu0 0.0
        %4276 = vmatprep.subr.mxu0 0.0
        %4277 = vmatpush2.msra.mxu0 0.0
        %4278 = vmatprep.subr.mxu0 0.0
        %4279 = vmatpush2.msra.mxu0 0.0
        %4280 = vmatprep.subr.mxu0 0.0
        %4281 = vmatpush2.msra.mxu0 0.0
        %4282 = vmatprep.subr.mxu0 0.0
        %4283 = vmatpush2.msra.mxu0 0.0
        %4284 = vmatprep.subr.mxu0 0.0
        %4285 = vmatpush2.msra.mxu0 0.0
        %4286 = vmatprep.subr.mxu0 0.0
        %4287 = vmatpush2.msra.mxu0 0.0
        %4288 = vmatprep.subr.mxu0 0.0
        %4289 = vmatpush2.msra.mxu0 0.0
        %4290 = vmatprep.subr.mxu0 0.0
        %4291 = vmatpush2.msra.mxu0 0.0
        %4292 = vmatprep.subr.mxu0 0.0
        %4293 = vmatpush2.msra.mxu0 0.0
        %4294 = vmatprep.subr.mxu0 0.0
        %4295 = vmatpush2.msra.mxu0 0.0
        %4296 = vmatprep.subr.mxu0 0.0
        %4297 = vmatpush2.msra.mxu0 0.0
        %4298 = vmatprep.subr.mxu0 0.0
        %4299 = vmatpush2.msra.mxu0 0.0
        %4300 = vmatprep.subr.mxu0 0.0
        %4301 = vmatpush2.msra.mxu0 0.0
        %4302 = vmatprep.subr.mxu0 0.0
        %4303 = vmatpush2.msra.mxu0 0.0
        %4304 = vmatprep.subr.mxu0 0.0
        %4305 = vmatpush2.msra.mxu0 0.0
        %4306 = vmatprep.mubr.f32.mxu0 0.0
        %v4307 = vand.u32 %v768, 4294901760
        %4308 = vmatmul.mubr.f32.gmra.mxu0 %v4307
        %v4309 = vpop.f32.mrf.mxu0
        %v4310 = vadd.f32 %v4203, %v4309
        %v4311 = vpop.f32.mrf.mxu0
        %4312 = vmatprep.mubr.f32.mxu0 0.0
        %v4313 = vand.u32 %v771, 4294901760
        %4314 = vmatmul.mubr.f32.gmra.mxu0 %v4313
        %v4315 = vpop.f32.mrf.mxu0
        %v4316 = vadd.f32 %v4211, %v4315
        %v4317 = vpop.f32.mrf.mxu0
        %4318 = vmatprep.mubr.f32.mxu0 0.0
        %v4319 = vand.u32 %v774, 4294901760
        %4320 = vmatmul.mubr.f32.gmra.mxu0 %v4319
        %v4321 = vpop.f32.mrf.mxu0
        %v4322 = vadd.f32 %v4219, %v4321
        %v4323 = vpop.f32.mrf.mxu0
        %4324 = vmatprep.mubr.f32.mxu0 0.0
        %v4325 = vand.u32 %v777, 4294901760
        %4326 = vmatmul.mubr.f32.gmra.mxu0 %v4325
        %v4327 = vpop.f32.mrf.mxu0
        %v4328 = vadd.f32 %v4227, %v4327
        %v4329 = vpop.f32.mrf.mxu0
        %4330 = vdwg.mxu0
        %4331 = vmatprep.subr.mxu0 0.0
        %4332 = vmatpush1.msra.mxu0 0.0
        %4333 = vmatprep.subr.mxu0 0.0
        %4334 = vmatpush1.msra.mxu0 0.0
        %4335 = vmatprep.subr.mxu0 0.0
        %4336 = vmatpush1.msra.mxu0 0.0
        %4337 = vmatprep.subr.mxu0 0.0
        %4338 = vmatpush1.msra.mxu0 0.0
        %4339 = vmatprep.subr.mxu0 0.0
        %4340 = vmatpush1.msra.mxu0 0.0
        %4341 = vmatprep.subr.mxu0 0.0
        %4342 = vmatpush1.msra.mxu0 0.0
        %4343 = vmatprep.subr.mxu0 0.0
        %4344 = vmatpush1.msra.mxu0 0.0
        %4345 = vmatprep.subr.mxu0 0.0
        %4346 = vmatpush1.msra.mxu0 0.0
        %4347 = vmatprep.subr.mxu0 0.0
        %4348 = vmatpush1.msra.mxu0 0.0
        %4349 = vmatprep.subr.mxu0 0.0
        %4350 = vmatpush1.msra.mxu0 0.0
        %4351 = vmatprep.subr.mxu0 0.0
        %4352 = vmatpush1.msra.mxu0 0.0
        %4353 = vmatprep.subr.mxu0 0.0
        %4354 = vmatpush1.msra.mxu0 0.0
        %4355 = vmatprep.subr.mxu0 0.0
        %v4356 = vand.u32 %v3809, 4294901760
        %4357 = vmatpush1.msra.mxu0 %v4356
        %4358 = vmatprep.subr.mxu0 0.0
        %v4359 = vand.u32 %v3705, 4294901760
        %4360 = vmatpush1.msra.mxu0 %v4359
        %4361 = vmatprep.subr.mxu0 0.0
        %v4362 = vand.u32 %v3601, 4294901760
        %4363 = vmatpush1.msra.mxu0 %v4362
        %4364 = vmatprep.subr.mxu0 0.0
        %v4365 = vand.u32 %v3497, 4294901760
        %4366 = vmatpush1.msra.mxu0 %v4365
        %4367 = vmatprep.subr.mxu0 0.0
        %4368 = vmatpush2.msra.mxu0 0.0
        %4369 = vmatprep.subr.mxu0 0.0
        %4370 = vmatpush2.msra.mxu0 0.0
        %4371 = vmatprep.subr.mxu0 0.0
        %4372 = vmatpush2.msra.mxu0 0.0
        %4373 = vmatprep.subr.mxu0 0.0
        %4374 = vmatpush2.msra.mxu0 0.0
        %4375 = vmatprep.subr.mxu0 0.0
        %4376 = vmatpush2.msra.mxu0 0.0
        %4377 = vmatprep.subr.mxu0 0.0
        %4378 = vmatpush2.msra.mxu0 0.0
        %4379 = vmatprep.subr.mxu0 0.0
        %4380 = vmatpush2.msra.mxu0 0.0
        %4381 = vmatprep.subr.mxu0 0.0
        %4382 = vmatpush2.msra.mxu0 0.0
        %4383 = vmatprep.subr.mxu0 0.0
        %4384 = vmatpush2.msra.mxu0 0.0
        %4385 = vmatprep.subr.mxu0 0.0
        %4386 = vmatpush2.msra.mxu0 0.0
        %4387 = vmatprep.subr.mxu0 0.0
        %4388 = vmatpush2.msra.mxu0 0.0
        %4389 = vmatprep.subr.mxu0 0.0
        %4390 = vmatpush2.msra.mxu0 0.0
        %4391 = vmatprep.subr.mxu0 0.0
        %4392 = vmatpush2.msra.mxu0 0.0
        %4393 = vmatprep.subr.mxu0 0.0
        %4394 = vmatpush2.msra.mxu0 0.0
        %4395 = vmatprep.subr.mxu0 0.0
        %4396 = vmatpush2.msra.mxu0 0.0
        %4397 = vmatprep.subr.mxu0 0.0
        %4398 = vmatpush2.msra.mxu0 0.0
        %4399 = vmatprep.mubr.f32.mxu0 0.0
        %v4400 = vand.u32 %v768, 4294901760
        %4401 = vmatmul.mubr.f32.gmra.mxu0 %v4400
        %v4402 = vpop.f32.mrf.mxu0
        %v4403 = vadd.f32 %v4310, %v4402
        %v4404 = vpop.f32.mrf.mxu0
        %4405 = vmatprep.mubr.f32.mxu0 0.0
        %v4406 = vand.u32 %v771, 4294901760
        %4407 = vmatmul.mubr.f32.gmra.mxu0 %v4406
        %v4408 = vpop.f32.mrf.mxu0
        %v4409 = vadd.f32 %v4316, %v4408
        %v4410 = vpop.f32.mrf.mxu0
        %4411 = vmatprep.mubr.f32.mxu0 0.0
        %v4412 = vand.u32 %v774, 4294901760
        %4413 = vmatmul.mubr.f32.gmra.mxu0 %v4412
        %v4414 = vpop.f32.mrf.mxu0
        %v4415 = vadd.f32 %v4322, %v4414
        %v4416 = vpop.f32.mrf.mxu0
        %4417 = vmatprep.mubr.f32.mxu0 0.0
        %v4418 = vand.u32 %v777, 4294901760
        %4419 = vmatmul.mubr.f32.gmra.mxu0 %v4418
        %v4420 = vpop.f32.mrf.mxu0
        %v4421 = vadd.f32 %v4328, %v4420
        %v4422 = vpop.f32.mrf.mxu0
        %4423 = vdwg.mxu0
        %v4424 = vand.u32 2147483647, %v4403
        %vm4425 = vcmp.le.f32.partialorder %v4424, 0.7853982
        %vm4426 = vcmp.lt.s32.totalorder %v4403, 0
        %v4427 = vand.u32 %v4403, 2139095040
        %v4428 = vshrl.u32 %v4427, 23
        %v4429 = vsub.s32 %v4428, 127
        %v4430 = vand.u32 2147483647, %v4403
        %v4431 = vand.u32 %v4430, 8388607
        %v4432 = vor.u32 %v4431, 8388608
        %v4433 = vsub.s32 0, %v4432
        %v4434 = vadd.s32 %v4429, 1
        %vm4435 = vcmp.gt.s32.totalorder %v4434, 0
        %v4436 = vsel %vm4435, %v4434, 0
        %v4437 = vshrl.u32 %v4436, 5
        %v4438 = vand.u32 %v4436, 31
        %v4439 = vsub.s32 32, %v4438
        %v4440 = vshrl.u32 683565275, %v4439
        %v4441 = vshll.u32 683565275, %v4438
        %v4442 = vshrl.u32 2475754826, %v4439
        %v4443 = vor.u32 %v4441, %v4442
        %v4444 = vshll.u32 2475754826, %v4438
        %v4445 = vshrl.u32 2131351028, %v4439
        %v4446 = vor.u32 %v4444, %v4445
        %v4447 = vshll.u32 2131351028, %v4438
        %v4448 = vshrl.u32 2102212464, %v4439
        %v4449 = vor.u32 %v4447, %v4448
        %v4450 = vshll.u32 2102212464, %v4438
        %v4451 = vshrl.u32 920167782, %v4439
        %v4452 = vor.u32 %v4450, %v4451
        %v4453 = vshll.u32 920167782, %v4438
        %v4454 = vshrl.u32 1326507024, %v4439
        %v4455 = vor.u32 %v4453, %v4454
        %vm4456 = vcmp.lt.s32.totalorder %v4437, 1
        %vm4457 = vcmp.lt.s32.totalorder %v4437, 2
        %vm4458 = vcmp.lt.s32.totalorder %v4437, 3
        %vm4459 = vcmp.lt.s32.totalorder %v4437, 4
        %v4460 = vsel %vm4456, %v4440, %v4443
        %v4461 = vsel %vm4459, %v4449, 2102212464
        %v4462 = vsel %vm4458, %v4446, %v4461
        %v4463 = vsel %vm4457, %v4460, %v4462
        %v4464 = vsel %vm4456, %v4443, %v4446
        %v4465 = vsel %vm4459, %v4452, 920167782
        %v4466 = vsel %vm4458, %v4449, %v4465
        %v4467 = vsel %vm4457, %v4464, %v4466
        %v4468 = vsel %vm4456, %v4446, %v4449
        %v4469 = vsel %vm4459, %v4455, 1326507024
        %v4470 = vsel %vm4458, %v4452, %v4469
        %v4471 = vsel %vm4457, %v4468, %v4470
        %v4472 = vshll.u32 %v4432, 8
        %v4473 = vmul.u32.u64.compose %v4472, %v4471
        %v4474 = vextract.low.u32 %v4473
        %v4475 = vextract.high.u32 %v4473
        %v4476 = vmul.u32.u64.compose %v4472, %v4467
        %v4477 = vextract.low.u32 %v4476
        %v4478 = vextract.high.u32 %v4476
        %v4479 = vmul.u32 %v4472, %v4463
        %v4480 = vadd.s32 %v4475, %v4477
        %vm4481 = vc.u32 %v4475, %v4477
        %v4482 = vadd.s32 %v4478, 1
        %v4483 = vsel %vm4481, %v4482, %v4478
        %v4484 = vadd.s32 %v4479, %v4483
        %v4485 = vadd.s32 %v4484, 536870912
        %v4486 = vshrl.u32 %v4485, 30
        %v4487 = vshll.u32 %v4486, 30
        %v4488 = vsub.s32 %v4484, %v4487
        %vm4489 = vcmp.lt.s32.totalorder %v4488, 0
        %v4490 = vsub.s32 0, %v4488
        %v4491 = vsel %vm4489, %v4490, %v4488
        %v4492 = vclz %v4491
        %v4493 = vsub.s32 %v4492, 2
        %vm4494 = vcmp.gt.s32.totalorder 0, %v4493
        %v4495 = vsel %vm4494, 0, %v4493
        %v4496 = vsub.s32 32, %v4495
        %v4497 = vshll.u32 %v4488, %v4495
        %v4498 = vshrl.u32 %v4480, %v4496
        %v4499 = vor.u32 %v4497, %v4498
        %v4500 = vsub.s32 4294967266, %v4495
        %v4501 = vadd.s32 %v4500, 127
        %v4502 = vshll.u32 %v4501, 23
        %v4503 = vor.u32 4788187, %v4502
        %v4504 = vand.u32 2147483647, %v4503
        %v4506 = vcvt.s32.f32 %v4499
        %v4507 = vmul.f32 %v4506, %v4504
        %v4508 = vxor.u32 %v4507, 2147483648
        %v4509 = vsel %vm4426, %v4508, %v4507
        %v4510 = vsub.s32 4, %v4486
        %v4511 = vsel %vm4426, %v4510, %v4486
        %v4512 = vsel %vm4425, %v4403, %v4509
        %v4513 = vsel %vm4425, 0, %v4511
        %v4514 = vcosq.f32.pop %v4512
        %v4515 = vsinq.f32.pop %v4512
        %vm4516 = vweird.f32 %v4403
        %v4517 = vadd.s32 %v4513, 3
        %v4518 = vand.u32 %v4517, 3
        %vm4519 = vcmp.lt.s32.totalorder %v4518, 2
        %vm4520 = vcmp.eq.s32.totalorder %v4518, 0
        %v4521 = vxor.u32 %v4515, 2147483648
        %v4522 = vsel %vm4520, %v4514, %v4521
        %vm4523 = vcmp.eq.s32.totalorder %v4518, 2
        %v4524 = vxor.u32 %v4514, 2147483648
        %v4525 = vsel %vm4523, %v4524, %v4515
        %v4526 = vsel %vm4519, %v4522, %v4525
        %v4527 = vsel %vm4516, nan, %v4526
        %v4528 = vand.u32 2147483647, %v4409
        %vm4529 = vcmp.le.f32.partialorder %v4528, 0.7853982
        %vm4530 = vcmp.lt.s32.totalorder %v4409, 0
        %v4531 = vand.u32 %v4409, 2139095040
        %v4532 = vshrl.u32 %v4531, 23
        %v4533 = vsub.s32 %v4532, 127
        %v4534 = vand.u32 2147483647, %v4409
        %v4535 = vand.u32 %v4534, 8388607
        %v4536 = vor.u32 %v4535, 8388608
        %v4537 = vsub.s32 0, %v4536
        %v4538 = vadd.s32 %v4533, 1
        %vm4539 = vcmp.gt.s32.totalorder %v4538, 0
        %v4540 = vsel %vm4539, %v4538, 0
        %v4541 = vshrl.u32 %v4540, 5
        %v4542 = vand.u32 %v4540, 31
        %v4543 = vsub.s32 32, %v4542
        %v4544 = vshrl.u32 683565275, %v4543
        %v4545 = vshll.u32 683565275, %v4542
        %v4546 = vshrl.u32 2475754826, %v4543
        %v4547 = vor.u32 %v4545, %v4546
        %v4548 = vshll.u32 2475754826, %v4542
        %v4549 = vshrl.u32 2131351028, %v4543
        %v4550 = vor.u32 %v4548, %v4549
        %v4551 = vshll.u32 2131351028, %v4542
        %v4552 = vshrl.u32 2102212464, %v4543
        %v4553 = vor.u32 %v4551, %v4552
        %v4554 = vshll.u32 2102212464, %v4542
        %v4555 = vshrl.u32 920167782, %v4543
        %v4556 = vor.u32 %v4554, %v4555
        %v4557 = vshll.u32 920167782, %v4542
        %v4558 = vshrl.u32 1326507024, %v4543
        %v4559 = vor.u32 %v4557, %v4558
        %vm4560 = vcmp.lt.s32.totalorder %v4541, 1
        %vm4561 = vcmp.lt.s32.totalorder %v4541, 2
        %vm4562 = vcmp.lt.s32.totalorder %v4541, 3
        %vm4563 = vcmp.lt.s32.totalorder %v4541, 4
        %v4564 = vsel %vm4560, %v4544, %v4547
        %v4565 = vsel %vm4563, %v4553, 2102212464
        %v4566 = vsel %vm4562, %v4550, %v4565
        %v4567 = vsel %vm4561, %v4564, %v4566
        %v4568 = vsel %vm4560, %v4547, %v4550
        %v4569 = vsel %vm4563, %v4556, 920167782
        %v4570 = vsel %vm4562, %v4553, %v4569
        %v4571 = vsel %vm4561, %v4568, %v4570
        %v4572 = vsel %vm4560, %v4550, %v4553
        %v4573 = vsel %vm4563, %v4559, 1326507024
        %v4574 = vsel %vm4562, %v4556, %v4573
        %v4575 = vsel %vm4561, %v4572, %v4574
        %v4576 = vshll.u32 %v4536, 8
        %v4577 = vmul.u32.u64.compose %v4576, %v4575
        %v4578 = vextract.low.u32 %v4577
        %v4579 = vextract.high.u32 %v4577
        %v4580 = vmul.u32.u64.compose %v4576, %v4571
        %v4581 = vextract.low.u32 %v4580
        %v4582 = vextract.high.u32 %v4580
        %v4583 = vmul.u32 %v4576, %v4567
        %v4584 = vadd.s32 %v4579, %v4581
        %vm4585 = vc.u32 %v4579, %v4581
        %v4586 = vadd.s32 %v4582, 1
        %v4587 = vsel %vm4585, %v4586, %v4582
        %v4588 = vadd.s32 %v4583, %v4587
        %v4589 = vadd.s32 %v4588, 536870912
        %v4590 = vshrl.u32 %v4589, 30
        %v4591 = vshll.u32 %v4590, 30
        %v4592 = vsub.s32 %v4588, %v4591
        %vm4593 = vcmp.lt.s32.totalorder %v4592, 0
        %v4594 = vsub.s32 0, %v4592
        %v4595 = vsel %vm4593, %v4594, %v4592
        %v4596 = vclz %v4595
        %v4597 = vsub.s32 %v4596, 2
        %vm4598 = vcmp.gt.s32.totalorder 0, %v4597
        %v4599 = vsel %vm4598, 0, %v4597
        %v4600 = vsub.s32 32, %v4599
        %v4601 = vshll.u32 %v4592, %v4599
        %v4602 = vshrl.u32 %v4584, %v4600
        %v4603 = vor.u32 %v4601, %v4602
        %v4604 = vsub.s32 4294967266, %v4599
        %v4605 = vadd.s32 %v4604, 127
        %v4606 = vshll.u32 %v4605, 23
        %v4607 = vor.u32 4788187, %v4606
        %v4608 = vand.u32 2147483647, %v4607
        %v4610 = vcvt.s32.f32 %v4603
        %v4611 = vmul.f32 %v4610, %v4608
        %v4612 = vxor.u32 %v4611, 2147483648
        %v4613 = vsel %vm4530, %v4612, %v4611
        %v4614 = vsub.s32 4, %v4590
        %v4615 = vsel %vm4530, %v4614, %v4590
        %v4616 = vsel %vm4529, %v4409, %v4613
        %v4617 = vsel %vm4529, 0, %v4615
        %v4618 = vcosq.f32.pop %v4616
        %v4619 = vsinq.f32.pop %v4616
        %vm4620 = vweird.f32 %v4409
        %v4621 = vadd.s32 %v4617, 3
        %v4622 = vand.u32 %v4621, 3
        %vm4623 = vcmp.lt.s32.totalorder %v4622, 2
        %vm4624 = vcmp.eq.s32.totalorder %v4622, 0
        %v4625 = vxor.u32 %v4619, 2147483648
        %v4626 = vsel %vm4624, %v4618, %v4625
        %vm4627 = vcmp.eq.s32.totalorder %v4622, 2
        %v4628 = vxor.u32 %v4618, 2147483648
        %v4629 = vsel %vm4627, %v4628, %v4619
        %v4630 = vsel %vm4623, %v4626, %v4629
        %v4631 = vsel %vm4620, nan, %v4630
        %v4632 = vand.u32 2147483647, %v4415
        %vm4633 = vcmp.le.f32.partialorder %v4632, 0.7853982
        %vm4634 = vcmp.lt.s32.totalorder %v4415, 0
        %v4635 = vand.u32 %v4415, 2139095040
        %v4636 = vshrl.u32 %v4635, 23
        %v4637 = vsub.s32 %v4636, 127
        %v4638 = vand.u32 2147483647, %v4415
        %v4639 = vand.u32 %v4638, 8388607
        %v4640 = vor.u32 %v4639, 8388608
        %v4641 = vsub.s32 0, %v4640
        %v4642 = vadd.s32 %v4637, 1
        %vm4643 = vcmp.gt.s32.totalorder %v4642, 0
        %v4644 = vsel %vm4643, %v4642, 0
        %v4645 = vshrl.u32 %v4644, 5
        %v4646 = vand.u32 %v4644, 31
        %v4647 = vsub.s32 32, %v4646
        %v4648 = vshrl.u32 683565275, %v4647
        %v4649 = vshll.u32 683565275, %v4646
        %v4650 = vshrl.u32 2475754826, %v4647
        %v4651 = vor.u32 %v4649, %v4650
        %v4652 = vshll.u32 2475754826, %v4646
        %v4653 = vshrl.u32 2131351028, %v4647
        %v4654 = vor.u32 %v4652, %v4653
        %v4655 = vshll.u32 2131351028, %v4646
        %v4656 = vshrl.u32 2102212464, %v4647
        %v4657 = vor.u32 %v4655, %v4656
        %v4658 = vshll.u32 2102212464, %v4646
        %v4659 = vshrl.u32 920167782, %v4647
        %v4660 = vor.u32 %v4658, %v4659
        %v4661 = vshll.u32 920167782, %v4646
        %v4662 = vshrl.u32 1326507024, %v4647
        %v4663 = vor.u32 %v4661, %v4662
        %vm4664 = vcmp.lt.s32.totalorder %v4645, 1
        %vm4665 = vcmp.lt.s32.totalorder %v4645, 2
        %vm4666 = vcmp.lt.s32.totalorder %v4645, 3
        %vm4667 = vcmp.lt.s32.totalorder %v4645, 4
        %v4668 = vsel %vm4664, %v4648, %v4651
        %v4669 = vsel %vm4667, %v4657, 2102212464
        %v4670 = vsel %vm4666, %v4654, %v4669
        %v4671 = vsel %vm4665, %v4668, %v4670
        %v4672 = vsel %vm4664, %v4651, %v4654
        %v4673 = vsel %vm4667, %v4660, 920167782
        %v4674 = vsel %vm4666, %v4657, %v4673
        %v4675 = vsel %vm4665, %v4672, %v4674
        %v4676 = vsel %vm4664, %v4654, %v4657
        %v4677 = vsel %vm4667, %v4663, 1326507024
        %v4678 = vsel %vm4666, %v4660, %v4677
        %v4679 = vsel %vm4665, %v4676, %v4678
        %v4680 = vshll.u32 %v4640, 8
        %v4681 = vmul.u32.u64.compose %v4680, %v4679
        %v4682 = vextract.low.u32 %v4681
        %v4683 = vextract.high.u32 %v4681
        %v4684 = vmul.u32.u64.compose %v4680, %v4675
        %v4685 = vextract.low.u32 %v4684
        %v4686 = vextract.high.u32 %v4684
        %v4687 = vmul.u32 %v4680, %v4671
        %v4688 = vadd.s32 %v4683, %v4685
        %vm4689 = vc.u32 %v4683, %v4685
        %v4690 = vadd.s32 %v4686, 1
        %v4691 = vsel %vm4689, %v4690, %v4686
        %v4692 = vadd.s32 %v4687, %v4691
        %v4693 = vadd.s32 %v4692, 536870912
        %v4694 = vshrl.u32 %v4693, 30
        %v4695 = vshll.u32 %v4694, 30
        %v4696 = vsub.s32 %v4692, %v4695
        %vm4697 = vcmp.lt.s32.totalorder %v4696, 0
        %v4698 = vsub.s32 0, %v4696
        %v4699 = vsel %vm4697, %v4698, %v4696
        %v4700 = vclz %v4699
        %v4701 = vsub.s32 %v4700, 2
        %vm4702 = vcmp.gt.s32.totalorder 0, %v4701
        %v4703 = vsel %vm4702, 0, %v4701
        %v4704 = vsub.s32 32, %v4703
        %v4705 = vshll.u32 %v4696, %v4703
        %v4706 = vshrl.u32 %v4688, %v4704
        %v4707 = vor.u32 %v4705, %v4706
        %v4708 = vsub.s32 4294967266, %v4703
        %v4709 = vadd.s32 %v4708, 127
        %v4710 = vshll.u32 %v4709, 23
        %v4711 = vor.u32 4788187, %v4710
        %v4712 = vand.u32 2147483647, %v4711
        %v4714 = vcvt.s32.f32 %v4707
        %v4715 = vmul.f32 %v4714, %v4712
        %v4716 = vxor.u32 %v4715, 2147483648
        %v4717 = vsel %vm4634, %v4716, %v4715
        %v4718 = vsub.s32 4, %v4694
        %v4719 = vsel %vm4634, %v4718, %v4694
        %v4720 = vsel %vm4633, %v4415, %v4717
        %v4721 = vsel %vm4633, 0, %v4719
        %v4722 = vcosq.f32.pop %v4720
        %v4723 = vsinq.f32.pop %v4720
        %vm4724 = vweird.f32 %v4415
        %v4725 = vadd.s32 %v4721, 3
        %v4726 = vand.u32 %v4725, 3
        %vm4727 = vcmp.lt.s32.totalorder %v4726, 2
        %vm4728 = vcmp.eq.s32.totalorder %v4726, 0
        %v4729 = vxor.u32 %v4723, 2147483648
        %v4730 = vsel %vm4728, %v4722, %v4729
        %vm4731 = vcmp.eq.s32.totalorder %v4726, 2
        %v4732 = vxor.u32 %v4722, 2147483648
        %v4733 = vsel %vm4731, %v4732, %v4723
        %v4734 = vsel %vm4727, %v4730, %v4733
        %v4735 = vsel %vm4724, nan, %v4734
        %v4736 = vand.u32 2147483647, %v4421
        %vm4737 = vcmp.le.f32.partialorder %v4736, 0.7853982
        %vm4738 = vcmp.lt.s32.totalorder %v4421, 0
        %v4739 = vand.u32 %v4421, 2139095040
        %v4740 = vshrl.u32 %v4739, 23
        %v4741 = vsub.s32 %v4740, 127
        %v4742 = vand.u32 2147483647, %v4421
        %v4743 = vand.u32 %v4742, 8388607
        %v4744 = vor.u32 %v4743, 8388608
        %v4745 = vsub.s32 0, %v4744
        %v4746 = vadd.s32 %v4741, 1
        %vm4747 = vcmp.gt.s32.totalorder %v4746, 0
        %v4748 = vsel %vm4747, %v4746, 0
        %v4749 = vshrl.u32 %v4748, 5
        %v4750 = vand.u32 %v4748, 31
        %v4751 = vsub.s32 32, %v4750
        %v4752 = vshrl.u32 683565275, %v4751
        %v4753 = vshll.u32 683565275, %v4750
        %v4754 = vshrl.u32 2475754826, %v4751
        %v4755 = vor.u32 %v4753, %v4754
        %v4756 = vshll.u32 2475754826, %v4750
        %v4757 = vshrl.u32 2131351028, %v4751
        %v4758 = vor.u32 %v4756, %v4757
        %v4759 = vshll.u32 2131351028, %v4750
        %v4760 = vshrl.u32 2102212464, %v4751
        %v4761 = vor.u32 %v4759, %v4760
        %v4762 = vshll.u32 2102212464, %v4750
        %v4763 = vshrl.u32 920167782, %v4751
        %v4764 = vor.u32 %v4762, %v4763
        %v4765 = vshll.u32 920167782, %v4750
        %v4766 = vshrl.u32 1326507024, %v4751
        %v4767 = vor.u32 %v4765, %v4766
        %vm4768 = vcmp.lt.s32.totalorder %v4749, 1
        %vm4769 = vcmp.lt.s32.totalorder %v4749, 2
        %vm4770 = vcmp.lt.s32.totalorder %v4749, 3
        %vm4771 = vcmp.lt.s32.totalorder %v4749, 4
        %v4772 = vsel %vm4768, %v4752, %v4755
        %v4773 = vsel %vm4771, %v4761, 2102212464
        %v4774 = vsel %vm4770, %v4758, %v4773
        %v4775 = vsel %vm4769, %v4772, %v4774
        %v4776 = vsel %vm4768, %v4755, %v4758
        %v4777 = vsel %vm4771, %v4764, 920167782
        %v4778 = vsel %vm4770, %v4761, %v4777
        %v4779 = vsel %vm4769, %v4776, %v4778
        %v4780 = vsel %vm4768, %v4758, %v4761
        %v4781 = vsel %vm4771, %v4767, 1326507024
        %v4782 = vsel %vm4770, %v4764, %v4781
        %v4783 = vsel %vm4769, %v4780, %v4782
        %v4784 = vshll.u32 %v4744, 8
        %v4785 = vmul.u32.u64.compose %v4784, %v4783
        %v4786 = vextract.low.u32 %v4785
        %v4787 = vextract.high.u32 %v4785
        %v4788 = vmul.u32.u64.compose %v4784, %v4779
        %v4789 = vextract.low.u32 %v4788
        %v4790 = vextract.high.u32 %v4788
        %v4791 = vmul.u32 %v4784, %v4775
        %v4792 = vadd.s32 %v4787, %v4789
        %vm4793 = vc.u32 %v4787, %v4789
        %v4794 = vadd.s32 %v4790, 1
        %v4795 = vsel %vm4793, %v4794, %v4790
        %v4796 = vadd.s32 %v4791, %v4795
        %v4797 = vadd.s32 %v4796, 536870912
        %v4798 = vshrl.u32 %v4797, 30
        %v4799 = vshll.u32 %v4798, 30
        %v4800 = vsub.s32 %v4796, %v4799
        %vm4801 = vcmp.lt.s32.totalorder %v4800, 0
        %v4802 = vsub.s32 0, %v4800
        %v4803 = vsel %vm4801, %v4802, %v4800
        %v4804 = vclz %v4803
        %v4805 = vsub.s32 %v4804, 2
        %vm4806 = vcmp.gt.s32.totalorder 0, %v4805
        %v4807 = vsel %vm4806, 0, %v4805
        %v4808 = vsub.s32 32, %v4807
        %v4809 = vshll.u32 %v4800, %v4807
        %v4810 = vshrl.u32 %v4792, %v4808
        %v4811 = vor.u32 %v4809, %v4810
        %v4812 = vsub.s32 4294967266, %v4807
        %v4813 = vadd.s32 %v4812, 127
        %v4814 = vshll.u32 %v4813, 23
        %v4815 = vor.u32 4788187, %v4814
        %v4816 = vand.u32 2147483647, %v4815
        %v4818 = vcvt.s32.f32 %v4811
        %v4819 = vmul.f32 %v4818, %v4816
        %v4820 = vxor.u32 %v4819, 2147483648
        %v4821 = vsel %vm4738, %v4820, %v4819
        %v4822 = vsub.s32 4, %v4798
        %v4823 = vsel %vm4738, %v4822, %v4798
        %v4824 = vsel %vm4737, %v4421, %v4821
        %v4825 = vsel %vm4737, 0, %v4823
        %v4826 = vcosq.f32.pop %v4824
        %v4827 = vsinq.f32.pop %v4824
        %vm4828 = vweird.f32 %v4421
        %v4829 = vadd.s32 %v4825, 3
        %v4830 = vand.u32 %v4829, 3
        %vm4831 = vcmp.lt.s32.totalorder %v4830, 2
        %vm4832 = vcmp.eq.s32.totalorder %v4830, 0
        %v4833 = vxor.u32 %v4827, 2147483648
        %v4834 = vsel %vm4832, %v4826, %v4833
        %vm4835 = vcmp.eq.s32.totalorder %v4830, 2
        %v4836 = vxor.u32 %v4826, 2147483648
        %v4837 = vsel %vm4835, %v4836, %v4827
        %v4838 = vsel %vm4831, %v4834, %v4837
        %v4839 = vsel %vm4828, nan, %v4838
        %4840 = vmatprep.subr.mxu0 0.0
        %4841 = vmatpush1.msra.mxu0 0.0
        %4842 = vmatprep.subr.mxu0 0.0
        %4843 = vmatpush1.msra.mxu0 0.0
        %4844 = vmatprep.subr.mxu0 0.0
        %4845 = vmatpush1.msra.mxu0 0.0
        %4846 = vmatprep.subr.mxu0 0.0
        %4847 = vmatpush1.msra.mxu0 0.0
        %4848 = vmatprep.subr.mxu0 0.0
        %4849 = vmatpush1.msra.mxu0 0.0
        %4850 = vmatprep.subr.mxu0 0.0
        %4851 = vmatpush1.msra.mxu0 0.0
        %4852 = vmatprep.subr.mxu0 0.0
        %4853 = vmatpush1.msra.mxu0 0.0
        %4854 = vmatprep.subr.mxu0 0.0
        %4855 = vmatpush1.msra.mxu0 0.0
        %4856 = vmatprep.subr.mxu0 0.0
        %4857 = vmatpush1.msra.mxu0 0.0
        %4858 = vmatprep.subr.mxu0 0.0
        %4859 = vmatpush1.msra.mxu0 0.0
        %4860 = vmatprep.subr.mxu0 0.0
        %4861 = vmatpush1.msra.mxu0 0.0
        %4862 = vmatprep.subr.mxu0 0.0
        %4863 = vmatpush1.msra.mxu0 0.0
        %4864 = vmatprep.subr.mxu0 0.0
        %v4865 = vand.u32 %v4839, 4294901760
        %4866 = vmatpush1.msra.mxu0 %v4865
        %4867 = vmatprep.subr.mxu0 0.0
        %v4868 = vand.u32 %v4735, 4294901760
        %4869 = vmatpush1.msra.mxu0 %v4868
        %4870 = vmatprep.subr.mxu0 0.0
        %v4871 = vand.u32 %v4631, 4294901760
        %4872 = vmatpush1.msra.mxu0 %v4871
        %4873 = vmatprep.subr.mxu0 0.0
        %v4874 = vand.u32 %v4527, 4294901760
        %4875 = vmatpush1.msra.mxu0 %v4874
        %4876 = vmatprep.subr.mxu0 0.0
        %4877 = vmatpush2.msra.mxu0 0.0
        %4878 = vmatprep.subr.mxu0 0.0
        %4879 = vmatpush2.msra.mxu0 0.0
        %4880 = vmatprep.subr.mxu0 0.0
        %4881 = vmatpush2.msra.mxu0 0.0
        %4882 = vmatprep.subr.mxu0 0.0
        %4883 = vmatpush2.msra.mxu0 0.0
        %4884 = vmatprep.subr.mxu0 0.0
        %4885 = vmatpush2.msra.mxu0 0.0
        %4886 = vmatprep.subr.mxu0 0.0
        %4887 = vmatpush2.msra.mxu0 0.0
        %4888 = vmatprep.subr.mxu0 0.0
        %4889 = vmatpush2.msra.mxu0 0.0
        %4890 = vmatprep.subr.mxu0 0.0
        %4891 = vmatpush2.msra.mxu0 0.0
        %4892 = vmatprep.subr.mxu0 0.0
        %4893 = vmatpush2.msra.mxu0 0.0
        %4894 = vmatprep.subr.mxu0 0.0
        %4895 = vmatpush2.msra.mxu0 0.0
        %4896 = vmatprep.subr.mxu0 0.0
        %4897 = vmatpush2.msra.mxu0 0.0
        %4898 = vmatprep.subr.mxu0 0.0
        %4899 = vmatpush2.msra.mxu0 0.0
        %4900 = vmatprep.subr.mxu0 0.0
        %4901 = vmatpush2.msra.mxu0 0.0
        %4902 = vmatprep.subr.mxu0 0.0
        %4903 = vmatpush2.msra.mxu0 0.0
        %4904 = vmatprep.subr.mxu0 0.0
        %4905 = vmatpush2.msra.mxu0 0.0
        %4906 = vmatprep.subr.mxu0 0.0
        %4907 = vmatpush2.msra.mxu0 0.0
        %4908 = vmatprep.mubr.f32.mxu0 0.0
        %v4909 = vand.u32 %v1830, 4294901760
        %v4910 = vsub.f32 %v1830, %v4909
        %v4911 = vand.u32 %v4910, 4294901760
        %v4912 = vsub.f32 %v4910, %v4911
        %v4913 = vand.u32 %v4912, 4294901760
        %4914 = vmatmul.mubr.f32.gmra.mxu0 %v4913
        %v4915 = vpop.f32.mrf.mxu0
        %v4916 = vadd.f32 %v1812, %v4915
        %v4917 = vpop.f32.mrf.mxu0
        %4918 = vmatprep.mubr.f32.mxu0 0.0
        %v4919 = vand.u32 %v1833, 4294901760
        %v4920 = vsub.f32 %v1833, %v4919
        %v4921 = vand.u32 %v4920, 4294901760
        %v4922 = vsub.f32 %v4920, %v4921
        %v4923 = vand.u32 %v4922, 4294901760
        %4924 = vmatmul.mubr.f32.gmra.mxu0 %v4923
        %v4925 = vpop.f32.mrf.mxu0
        %v4926 = vadd.f32 %v1817, %v4925
        %v4927 = vpop.f32.mrf.mxu0
        %4928 = vmatprep.mubr.f32.mxu0 0.0
        %v4929 = vand.u32 %v1836, 4294901760
        %v4930 = vsub.f32 %v1836, %v4929
        %v4931 = vand.u32 %v4930, 4294901760
        %v4932 = vsub.f32 %v4930, %v4931
        %v4933 = vand.u32 %v4932, 4294901760
        %4934 = vmatmul.mubr.f32.gmra.mxu0 %v4933
        %v4935 = vpop.f32.mrf.mxu0
        %v4936 = vadd.f32 %v1822, %v4935
        %v4937 = vpop.f32.mrf.mxu0
        %4938 = vmatprep.mubr.f32.mxu0 0.0
        %v4939 = vand.u32 %v1839, 4294901760
        %v4940 = vsub.f32 %v1839, %v4939
        %v4941 = vand.u32 %v4940, 4294901760
        %v4942 = vsub.f32 %v4940, %v4941
        %v4943 = vand.u32 %v4942, 4294901760
        %4944 = vmatmul.mubr.f32.gmra.mxu0 %v4943
        %v4945 = vpop.f32.mrf.mxu0
        %v4946 = vadd.f32 %v1827, %v4945
        %v4947 = vpop.f32.mrf.mxu0
        %4948 = vdwg.mxu0
        %4949 = vmatprep.subr.mxu0 0.0
        %4950 = vmatpush1.msra.mxu0 0.0
        %4951 = vmatprep.subr.mxu0 0.0
        %4952 = vmatpush1.msra.mxu0 0.0
        %4953 = vmatprep.subr.mxu0 0.0
        %4954 = vmatpush1.msra.mxu0 0.0
        %4955 = vmatprep.subr.mxu0 0.0
        %4956 = vmatpush1.msra.mxu0 0.0
        %4957 = vmatprep.subr.mxu0 0.0
        %4958 = vmatpush1.msra.mxu0 0.0
        %4959 = vmatprep.subr.mxu0 0.0
        %4960 = vmatpush1.msra.mxu0 0.0
        %4961 = vmatprep.subr.mxu0 0.0
        %4962 = vmatpush1.msra.mxu0 0.0
        %4963 = vmatprep.subr.mxu0 0.0
        %4964 = vmatpush1.msra.mxu0 0.0
        %4965 = vmatprep.subr.mxu0 0.0
        %4966 = vmatpush1.msra.mxu0 0.0
        %4967 = vmatprep.subr.mxu0 0.0
        %4968 = vmatpush1.msra.mxu0 0.0
        %4969 = vmatprep.subr.mxu0 0.0
        %4970 = vmatpush1.msra.mxu0 0.0
        %4971 = vmatprep.subr.mxu0 0.0
        %4972 = vmatpush1.msra.mxu0 0.0
        %4973 = vmatprep.subr.mxu0 0.0
        %v4974 = vand.u32 %v4839, 4294901760
        %v4975 = vsub.f32 %v4839, %v4974
        %v4976 = vand.u32 %v4975, 4294901760
        %v4977 = vsub.f32 %v4975, %v4976
        %v4978 = vand.u32 %v4977, 4294901760
        %4979 = vmatpush1.msra.mxu0 %v4978
        %4980 = vmatprep.subr.mxu0 0.0
        %v4981 = vand.u32 %v4735, 4294901760
        %v4982 = vsub.f32 %v4735, %v4981
        %v4983 = vand.u32 %v4982, 4294901760
        %v4984 = vsub.f32 %v4982, %v4983
        %v4985 = vand.u32 %v4984, 4294901760
        %4986 = vmatpush1.msra.mxu0 %v4985
        %4987 = vmatprep.subr.mxu0 0.0
        %v4988 = vand.u32 %v4631, 4294901760
        %v4989 = vsub.f32 %v4631, %v4988
        %v4990 = vand.u32 %v4989, 4294901760
        %v4991 = vsub.f32 %v4989, %v4990
        %v4992 = vand.u32 %v4991, 4294901760
        %4993 = vmatpush1.msra.mxu0 %v4992
        %4994 = vmatprep.subr.mxu0 0.0
        %v4995 = vand.u32 %v4527, 4294901760
        %v4996 = vsub.f32 %v4527, %v4995
        %v4997 = vand.u32 %v4996, 4294901760
        %v4998 = vsub.f32 %v4996, %v4997
        %v4999 = vand.u32 %v4998, 4294901760
        %5000 = vmatpush1.msra.mxu0 %v4999
        %5001 = vmatprep.subr.mxu0 0.0
        %5002 = vmatpush2.msra.mxu0 0.0
        %5003 = vmatprep.subr.mxu0 0.0
        %5004 = vmatpush2.msra.mxu0 0.0
        %5005 = vmatprep.subr.mxu0 0.0
        %5006 = vmatpush2.msra.mxu0 0.0
        %5007 = vmatprep.subr.mxu0 0.0
        %5008 = vmatpush2.msra.mxu0 0.0
        %5009 = vmatprep.subr.mxu0 0.0
        %5010 = vmatpush2.msra.mxu0 0.0
        %5011 = vmatprep.subr.mxu0 0.0
        %5012 = vmatpush2.msra.mxu0 0.0
        %5013 = vmatprep.subr.mxu0 0.0
        %5014 = vmatpush2.msra.mxu0 0.0
        %5015 = vmatprep.subr.mxu0 0.0
        %5016 = vmatpush2.msra.mxu0 0.0
        %5017 = vmatprep.subr.mxu0 0.0
        %5018 = vmatpush2.msra.mxu0 0.0
        %5019 = vmatprep.subr.mxu0 0.0
        %5020 = vmatpush2.msra.mxu0 0.0
        %5021 = vmatprep.subr.mxu0 0.0
        %5022 = vmatpush2.msra.mxu0 0.0
        %5023 = vmatprep.subr.mxu0 0.0
        %5024 = vmatpush2.msra.mxu0 0.0
        %5025 = vmatprep.subr.mxu0 0.0
        %5026 = vmatpush2.msra.mxu0 0.0
        %5027 = vmatprep.subr.mxu0 0.0
        %5028 = vmatpush2.msra.mxu0 0.0
        %5029 = vmatprep.subr.mxu0 0.0
        %5030 = vmatpush2.msra.mxu0 0.0
        %5031 = vmatprep.subr.mxu0 0.0
        %5032 = vmatpush2.msra.mxu0 0.0
        %5033 = vmatprep.mubr.f32.mxu0 0.0
        %v5034 = vand.u32 %v1830, 4294901760
        %5035 = vmatmul.mubr.f32.gmra.mxu0 %v5034
        %v5036 = vpop.f32.mrf.mxu0
        %v5037 = vadd.f32 %v4916, %v5036
        %v5038 = vpop.f32.mrf.mxu0
        %5039 = vmatprep.mubr.f32.mxu0 0.0
        %v5040 = vand.u32 %v1833, 4294901760
        %5041 = vmatmul.mubr.f32.gmra.mxu0 %v5040
        %v5042 = vpop.f32.mrf.mxu0
        %v5043 = vadd.f32 %v4926, %v5042
        %v5044 = vpop.f32.mrf.mxu0
        %5045 = vmatprep.mubr.f32.mxu0 0.0
        %v5046 = vand.u32 %v1836, 4294901760
        %5047 = vmatmul.mubr.f32.gmra.mxu0 %v5046
        %v5048 = vpop.f32.mrf.mxu0
        %v5049 = vadd.f32 %v4936, %v5048
        %v5050 = vpop.f32.mrf.mxu0
        %5051 = vmatprep.mubr.f32.mxu0 0.0
        %v5052 = vand.u32 %v1839, 4294901760
        %5053 = vmatmul.mubr.f32.gmra.mxu0 %v5052
        %v5054 = vpop.f32.mrf.mxu0
        %v5055 = vadd.f32 %v4946, %v5054
        %v5056 = vpop.f32.mrf.mxu0
        %5057 = vdwg.mxu0
        %5058 = vmatprep.subr.mxu0 0.0
        %5059 = vmatpush1.msra.mxu0 0.0
        %5060 = vmatprep.subr.mxu0 0.0
        %5061 = vmatpush1.msra.mxu0 0.0
        %5062 = vmatprep.subr.mxu0 0.0
        %5063 = vmatpush1.msra.mxu0 0.0
        %5064 = vmatprep.subr.mxu0 0.0
        %5065 = vmatpush1.msra.mxu0 0.0
        %5066 = vmatprep.subr.mxu0 0.0
        %5067 = vmatpush1.msra.mxu0 0.0
        %5068 = vmatprep.subr.mxu0 0.0
        %5069 = vmatpush1.msra.mxu0 0.0
        %5070 = vmatprep.subr.mxu0 0.0
        %5071 = vmatpush1.msra.mxu0 0.0
        %5072 = vmatprep.subr.mxu0 0.0
        %5073 = vmatpush1.msra.mxu0 0.0
        %5074 = vmatprep.subr.mxu0 0.0
        %5075 = vmatpush1.msra.mxu0 0.0
        %5076 = vmatprep.subr.mxu0 0.0
        %5077 = vmatpush1.msra.mxu0 0.0
        %5078 = vmatprep.subr.mxu0 0.0
        %5079 = vmatpush1.msra.mxu0 0.0
        %5080 = vmatprep.subr.mxu0 0.0
        %5081 = vmatpush1.msra.mxu0 0.0
        %5082 = vmatprep.subr.mxu0 0.0
        %v5083 = vand.u32 %v4839, 4294901760
        %v5084 = vsub.f32 %v4839, %v5083
        %5085 = vmatpush1.msra.mxu0 %v5084
        %5086 = vmatprep.subr.mxu0 0.0
        %v5087 = vand.u32 %v4735, 4294901760
        %v5088 = vsub.f32 %v4735, %v5087
        %5089 = vmatpush1.msra.mxu0 %v5088
        %5090 = vmatprep.subr.mxu0 0.0
        %v5091 = vand.u32 %v4631, 4294901760
        %v5092 = vsub.f32 %v4631, %v5091
        %5093 = vmatpush1.msra.mxu0 %v5092
        %5094 = vmatprep.subr.mxu0 0.0
        %v5095 = vand.u32 %v4527, 4294901760
        %v5096 = vsub.f32 %v4527, %v5095
        %5097 = vmatpush1.msra.mxu0 %v5096
        %5098 = vmatprep.subr.mxu0 0.0
        %5099 = vmatpush2.msra.mxu0 0.0
        %5100 = vmatprep.subr.mxu0 0.0
        %5101 = vmatpush2.msra.mxu0 0.0
        %5102 = vmatprep.subr.mxu0 0.0
        %5103 = vmatpush2.msra.mxu0 0.0
        %5104 = vmatprep.subr.mxu0 0.0
        %5105 = vmatpush2.msra.mxu0 0.0
        %5106 = vmatprep.subr.mxu0 0.0
        %5107 = vmatpush2.msra.mxu0 0.0
        %5108 = vmatprep.subr.mxu0 0.0
        %5109 = vmatpush2.msra.mxu0 0.0
        %5110 = vmatprep.subr.mxu0 0.0
        %5111 = vmatpush2.msra.mxu0 0.0
        %5112 = vmatprep.subr.mxu0 0.0
        %5113 = vmatpush2.msra.mxu0 0.0
        %5114 = vmatprep.subr.mxu0 0.0
        %5115 = vmatpush2.msra.mxu0 0.0
        %5116 = vmatprep.subr.mxu0 0.0
        %5117 = vmatpush2.msra.mxu0 0.0
        %5118 = vmatprep.subr.mxu0 0.0
        %5119 = vmatpush2.msra.mxu0 0.0
        %5120 = vmatprep.subr.mxu0 0.0
        %5121 = vmatpush2.msra.mxu0 0.0
        %5122 = vmatprep.subr.mxu0 0.0
        %5123 = vmatpush2.msra.mxu0 0.0
        %5124 = vmatprep.subr.mxu0 0.0
        %5125 = vmatpush2.msra.mxu0 0.0
        %5126 = vmatprep.subr.mxu0 0.0
        %5127 = vmatpush2.msra.mxu0 0.0
        %5128 = vmatprep.subr.mxu0 0.0
        %5129 = vmatpush2.msra.mxu0 0.0
        %5130 = vmatprep.mubr.f32.mxu0 0.0
        %v5131 = vand.u32 %v1830, 4294901760
        %v5132 = vsub.f32 %v1830, %v5131
        %5133 = vmatmul.mubr.f32.gmra.mxu0 %v5132
        %v5134 = vpop.f32.mrf.mxu0
        %v5135 = vadd.f32 %v5037, %v5134
        %v5136 = vpop.f32.mrf.mxu0
        %5137 = vmatprep.mubr.f32.mxu0 0.0
        %v5138 = vand.u32 %v1833, 4294901760
        %v5139 = vsub.f32 %v1833, %v5138
        %5140 = vmatmul.mubr.f32.gmra.mxu0 %v5139
        %v5141 = vpop.f32.mrf.mxu0
        %v5142 = vadd.f32 %v5043, %v5141
        %v5143 = vpop.f32.mrf.mxu0
        %5144 = vmatprep.mubr.f32.mxu0 0.0
        %v5145 = vand.u32 %v1836, 4294901760
        %v5146 = vsub.f32 %v1836, %v5145
        %5147 = vmatmul.mubr.f32.gmra.mxu0 %v5146
        %v5148 = vpop.f32.mrf.mxu0
        %v5149 = vadd.f32 %v5049, %v5148
        %v5150 = vpop.f32.mrf.mxu0
        %5151 = vmatprep.mubr.f32.mxu0 0.0
        %v5152 = vand.u32 %v1839, 4294901760
        %v5153 = vsub.f32 %v1839, %v5152
        %5154 = vmatmul.mubr.f32.gmra.mxu0 %v5153
        %v5155 = vpop.f32.mrf.mxu0
        %v5156 = vadd.f32 %v5055, %v5155
        %v5157 = vpop.f32.mrf.mxu0
        %5158 = vdwg.mxu0
        %5159 = vmatprep.subr.mxu0 0.0
        %5160 = vmatpush1.msra.mxu0 0.0
        %5161 = vmatprep.subr.mxu0 0.0
        %5162 = vmatpush1.msra.mxu0 0.0
        %5163 = vmatprep.subr.mxu0 0.0
        %5164 = vmatpush1.msra.mxu0 0.0
        %5165 = vmatprep.subr.mxu0 0.0
        %5166 = vmatpush1.msra.mxu0 0.0
        %5167 = vmatprep.subr.mxu0 0.0
        %5168 = vmatpush1.msra.mxu0 0.0
        %5169 = vmatprep.subr.mxu0 0.0
        %5170 = vmatpush1.msra.mxu0 0.0
        %5171 = vmatprep.subr.mxu0 0.0
        %5172 = vmatpush1.msra.mxu0 0.0
        %5173 = vmatprep.subr.mxu0 0.0
        %5174 = vmatpush1.msra.mxu0 0.0
        %5175 = vmatprep.subr.mxu0 0.0
        %5176 = vmatpush1.msra.mxu0 0.0
        %5177 = vmatprep.subr.mxu0 0.0
        %5178 = vmatpush1.msra.mxu0 0.0
        %5179 = vmatprep.subr.mxu0 0.0
        %5180 = vmatpush1.msra.mxu0 0.0
        %5181 = vmatprep.subr.mxu0 0.0
        %5182 = vmatpush1.msra.mxu0 0.0
        %5183 = vmatprep.subr.mxu0 0.0
        %v5184 = vand.u32 %v4839, 4294901760
        %5185 = vmatpush1.msra.mxu0 %v5184
        %5186 = vmatprep.subr.mxu0 0.0
        %v5187 = vand.u32 %v4735, 4294901760
        %5188 = vmatpush1.msra.mxu0 %v5187
        %5189 = vmatprep.subr.mxu0 0.0
        %v5190 = vand.u32 %v4631, 4294901760
        %5191 = vmatpush1.msra.mxu0 %v5190
        %5192 = vmatprep.subr.mxu0 0.0
        %v5193 = vand.u32 %v4527, 4294901760
        %5194 = vmatpush1.msra.mxu0 %v5193
        %5195 = vmatprep.subr.mxu0 0.0
        %5196 = vmatpush2.msra.mxu0 0.0
        %5197 = vmatprep.subr.mxu0 0.0
        %5198 = vmatpush2.msra.mxu0 0.0
        %5199 = vmatprep.subr.mxu0 0.0
        %5200 = vmatpush2.msra.mxu0 0.0
        %5201 = vmatprep.subr.mxu0 0.0
        %5202 = vmatpush2.msra.mxu0 0.0
        %5203 = vmatprep.subr.mxu0 0.0
        %5204 = vmatpush2.msra.mxu0 0.0
        %5205 = vmatprep.subr.mxu0 0.0
        %5206 = vmatpush2.msra.mxu0 0.0
        %5207 = vmatprep.subr.mxu0 0.0
        %5208 = vmatpush2.msra.mxu0 0.0
        %5209 = vmatprep.subr.mxu0 0.0
        %5210 = vmatpush2.msra.mxu0 0.0
        %5211 = vmatprep.subr.mxu0 0.0
        %5212 = vmatpush2.msra.mxu0 0.0
        %5213 = vmatprep.subr.mxu0 0.0
        %5214 = vmatpush2.msra.mxu0 0.0
        %5215 = vmatprep.subr.mxu0 0.0
        %5216 = vmatpush2.msra.mxu0 0.0
        %5217 = vmatprep.subr.mxu0 0.0
        %5218 = vmatpush2.msra.mxu0 0.0
        %5219 = vmatprep.subr.mxu0 0.0
        %5220 = vmatpush2.msra.mxu0 0.0
        %5221 = vmatprep.subr.mxu0 0.0
        %5222 = vmatpush2.msra.mxu0 0.0
        %5223 = vmatprep.subr.mxu0 0.0
        %5224 = vmatpush2.msra.mxu0 0.0
        %5225 = vmatprep.subr.mxu0 0.0
        %5226 = vmatpush2.msra.mxu0 0.0
        %5227 = vmatprep.mubr.f32.mxu0 0.0
        %v5228 = vand.u32 %v1830, 4294901760
        %v5229 = vsub.f32 %v1830, %v5228
        %v5230 = vand.u32 %v5229, 4294901760
        %5231 = vmatmul.mubr.f32.gmra.mxu0 %v5230
        %v5232 = vpop.f32.mrf.mxu0
        %v5233 = vadd.f32 %v5135, %v5232
        %v5234 = vpop.f32.mrf.mxu0
        %5235 = vmatprep.mubr.f32.mxu0 0.0
        %v5236 = vand.u32 %v1833, 4294901760
        %v5237 = vsub.f32 %v1833, %v5236
        %v5238 = vand.u32 %v5237, 4294901760
        %5239 = vmatmul.mubr.f32.gmra.mxu0 %v5238
        %v5240 = vpop.f32.mrf.mxu0
        %v5241 = vadd.f32 %v5142, %v5240
        %v5242 = vpop.f32.mrf.mxu0
        %5243 = vmatprep.mubr.f32.mxu0 0.0
        %v5244 = vand.u32 %v1836, 4294901760
        %v5245 = vsub.f32 %v1836, %v5244
        %v5246 = vand.u32 %v5245, 4294901760
        %5247 = vmatmul.mubr.f32.gmra.mxu0 %v5246
        %v5248 = vpop.f32.mrf.mxu0
        %v5249 = vadd.f32 %v5149, %v5248
        %v5250 = vpop.f32.mrf.mxu0
        %5251 = vmatprep.mubr.f32.mxu0 0.0
        %v5252 = vand.u32 %v1839, 4294901760
        %v5253 = vsub.f32 %v1839, %v5252
        %v5254 = vand.u32 %v5253, 4294901760
        %5255 = vmatmul.mubr.f32.gmra.mxu0 %v5254
        %v5256 = vpop.f32.mrf.mxu0
        %v5257 = vadd.f32 %v5156, %v5256
        %v5258 = vpop.f32.mrf.mxu0
        %5259 = vdwg.mxu0
        %5260 = vmatprep.subr.mxu0 0.0
        %5261 = vmatpush1.msra.mxu0 0.0
        %5262 = vmatprep.subr.mxu0 0.0
        %5263 = vmatpush1.msra.mxu0 0.0
        %5264 = vmatprep.subr.mxu0 0.0
        %5265 = vmatpush1.msra.mxu0 0.0
        %5266 = vmatprep.subr.mxu0 0.0
        %5267 = vmatpush1.msra.mxu0 0.0
        %5268 = vmatprep.subr.mxu0 0.0
        %5269 = vmatpush1.msra.mxu0 0.0
        %5270 = vmatprep.subr.mxu0 0.0
        %5271 = vmatpush1.msra.mxu0 0.0
        %5272 = vmatprep.subr.mxu0 0.0
        %5273 = vmatpush1.msra.mxu0 0.0
        %5274 = vmatprep.subr.mxu0 0.0
        %5275 = vmatpush1.msra.mxu0 0.0
        %5276 = vmatprep.subr.mxu0 0.0
        %5277 = vmatpush1.msra.mxu0 0.0
        %5278 = vmatprep.subr.mxu0 0.0
        %5279 = vmatpush1.msra.mxu0 0.0
        %5280 = vmatprep.subr.mxu0 0.0
        %5281 = vmatpush1.msra.mxu0 0.0
        %5282 = vmatprep.subr.mxu0 0.0
        %5283 = vmatpush1.msra.mxu0 0.0
        %5284 = vmatprep.subr.mxu0 0.0
        %v5285 = vand.u32 %v4839, 4294901760
        %v5286 = vsub.f32 %v4839, %v5285
        %v5287 = vand.u32 %v5286, 4294901760
        %5288 = vmatpush1.msra.mxu0 %v5287
        %5289 = vmatprep.subr.mxu0 0.0
        %v5290 = vand.u32 %v4735, 4294901760
        %v5291 = vsub.f32 %v4735, %v5290
        %v5292 = vand.u32 %v5291, 4294901760
        %5293 = vmatpush1.msra.mxu0 %v5292
        %5294 = vmatprep.subr.mxu0 0.0
        %v5295 = vand.u32 %v4631, 4294901760
        %v5296 = vsub.f32 %v4631, %v5295
        %v5297 = vand.u32 %v5296, 4294901760
        %5298 = vmatpush1.msra.mxu0 %v5297
        %5299 = vmatprep.subr.mxu0 0.0
        %v5300 = vand.u32 %v4527, 4294901760
        %v5301 = vsub.f32 %v4527, %v5300
        %v5302 = vand.u32 %v5301, 4294901760
        %5303 = vmatpush1.msra.mxu0 %v5302
        %5304 = vmatprep.subr.mxu0 0.0
        %5305 = vmatpush2.msra.mxu0 0.0
        %5306 = vmatprep.subr.mxu0 0.0
        %5307 = vmatpush2.msra.mxu0 0.0
        %5308 = vmatprep.subr.mxu0 0.0
        %5309 = vmatpush2.msra.mxu0 0.0
        %5310 = vmatprep.subr.mxu0 0.0
        %5311 = vmatpush2.msra.mxu0 0.0
        %5312 = vmatprep.subr.mxu0 0.0
        %5313 = vmatpush2.msra.mxu0 0.0
        %5314 = vmatprep.subr.mxu0 0.0
        %5315 = vmatpush2.msra.mxu0 0.0
        %5316 = vmatprep.subr.mxu0 0.0
        %5317 = vmatpush2.msra.mxu0 0.0
        %5318 = vmatprep.subr.mxu0 0.0
        %5319 = vmatpush2.msra.mxu0 0.0
        %5320 = vmatprep.subr.mxu0 0.0
        %5321 = vmatpush2.msra.mxu0 0.0
        %5322 = vmatprep.subr.mxu0 0.0
        %5323 = vmatpush2.msra.mxu0 0.0
        %5324 = vmatprep.subr.mxu0 0.0
        %5325 = vmatpush2.msra.mxu0 0.0
        %5326 = vmatprep.subr.mxu0 0.0
        %5327 = vmatpush2.msra.mxu0 0.0
        %5328 = vmatprep.subr.mxu0 0.0
        %5329 = vmatpush2.msra.mxu0 0.0
        %5330 = vmatprep.subr.mxu0 0.0
        %5331 = vmatpush2.msra.mxu0 0.0
        %5332 = vmatprep.subr.mxu0 0.0
        %5333 = vmatpush2.msra.mxu0 0.0
        %5334 = vmatprep.subr.mxu0 0.0
        %5335 = vmatpush2.msra.mxu0 0.0
        %5336 = vmatprep.mubr.f32.mxu0 0.0
        %v5337 = vand.u32 %v1830, 4294901760
        %5338 = vmatmul.mubr.f32.gmra.mxu0 %v5337
        %v5339 = vpop.f32.mrf.mxu0
        %v5340 = vadd.f32 %v5233, %v5339
        %v5341 = vpop.f32.mrf.mxu0
        %5342 = vmatprep.mubr.f32.mxu0 0.0
        %v5343 = vand.u32 %v1833, 4294901760
        %5344 = vmatmul.mubr.f32.gmra.mxu0 %v5343
        %v5345 = vpop.f32.mrf.mxu0
        %v5346 = vadd.f32 %v5241, %v5345
        %v5347 = vpop.f32.mrf.mxu0
        %5348 = vmatprep.mubr.f32.mxu0 0.0
        %v5349 = vand.u32 %v1836, 4294901760
        %5350 = vmatmul.mubr.f32.gmra.mxu0 %v5349
        %v5351 = vpop.f32.mrf.mxu0
        %v5352 = vadd.f32 %v5249, %v5351
        %v5353 = vpop.f32.mrf.mxu0
        %5354 = vmatprep.mubr.f32.mxu0 0.0
        %v5355 = vand.u32 %v1839, 4294901760
        %5356 = vmatmul.mubr.f32.gmra.mxu0 %v5355
        %v5357 = vpop.f32.mrf.mxu0
        %v5358 = vadd.f32 %v5257, %v5357
        %v5359 = vpop.f32.mrf.mxu0
        %5360 = vdwg.mxu0
        %5361 = vmatprep.subr.mxu0 0.0
        %5362 = vmatpush1.msra.mxu0 0.0
        %5363 = vmatprep.subr.mxu0 0.0
        %5364 = vmatpush1.msra.mxu0 0.0
        %5365 = vmatprep.subr.mxu0 0.0
        %5366 = vmatpush1.msra.mxu0 0.0
        %5367 = vmatprep.subr.mxu0 0.0
        %5368 = vmatpush1.msra.mxu0 0.0
        %5369 = vmatprep.subr.mxu0 0.0
        %5370 = vmatpush1.msra.mxu0 0.0
        %5371 = vmatprep.subr.mxu0 0.0
        %5372 = vmatpush1.msra.mxu0 0.0
        %5373 = vmatprep.subr.mxu0 0.0
        %5374 = vmatpush1.msra.mxu0 0.0
        %5375 = vmatprep.subr.mxu0 0.0
        %5376 = vmatpush1.msra.mxu0 0.0
        %5377 = vmatprep.subr.mxu0 0.0
        %5378 = vmatpush1.msra.mxu0 0.0
        %5379 = vmatprep.subr.mxu0 0.0
        %5380 = vmatpush1.msra.mxu0 0.0
        %5381 = vmatprep.subr.mxu0 0.0
        %5382 = vmatpush1.msra.mxu0 0.0
        %5383 = vmatprep.subr.mxu0 0.0
        %5384 = vmatpush1.msra.mxu0 0.0
        %5385 = vmatprep.subr.mxu0 0.0
        %v5386 = vand.u32 %v4839, 4294901760
        %5387 = vmatpush1.msra.mxu0 %v5386
        %5388 = vmatprep.subr.mxu0 0.0
        %v5389 = vand.u32 %v4735, 4294901760
        %5390 = vmatpush1.msra.mxu0 %v5389
        %5391 = vmatprep.subr.mxu0 0.0
        %v5392 = vand.u32 %v4631, 4294901760
        %5393 = vmatpush1.msra.mxu0 %v5392
        %5394 = vmatprep.subr.mxu0 0.0
        %v5395 = vand.u32 %v4527, 4294901760
        %5396 = vmatpush1.msra.mxu0 %v5395
        %5397 = vmatprep.subr.mxu0 0.0
        %5398 = vmatpush2.msra.mxu0 0.0
        %5399 = vmatprep.subr.mxu0 0.0
        %5400 = vmatpush2.msra.mxu0 0.0
        %5401 = vmatprep.subr.mxu0 0.0
        %5402 = vmatpush2.msra.mxu0 0.0
        %5403 = vmatprep.subr.mxu0 0.0
        %5404 = vmatpush2.msra.mxu0 0.0
        %5405 = vmatprep.subr.mxu0 0.0
        %5406 = vmatpush2.msra.mxu0 0.0
        %5407 = vmatprep.subr.mxu0 0.0
        %5408 = vmatpush2.msra.mxu0 0.0
        %5409 = vmatprep.subr.mxu0 0.0
        %5410 = vmatpush2.msra.mxu0 0.0
        %5411 = vmatprep.subr.mxu0 0.0
        %5412 = vmatpush2.msra.mxu0 0.0
        %5413 = vmatprep.subr.mxu0 0.0
        %5414 = vmatpush2.msra.mxu0 0.0
        %5415 = vmatprep.subr.mxu0 0.0
        %5416 = vmatpush2.msra.mxu0 0.0
        %5417 = vmatprep.subr.mxu0 0.0
        %5418 = vmatpush2.msra.mxu0 0.0
        %5419 = vmatprep.subr.mxu0 0.0
        %5420 = vmatpush2.msra.mxu0 0.0
        %5421 = vmatprep.subr.mxu0 0.0
        %5422 = vmatpush2.msra.mxu0 0.0
        %5423 = vmatprep.subr.mxu0 0.0
        %5424 = vmatpush2.msra.mxu0 0.0
        %5425 = vmatprep.subr.mxu0 0.0
        %5426 = vmatpush2.msra.mxu0 0.0
        %5427 = vmatprep.subr.mxu0 0.0
        %5428 = vmatpush2.msra.mxu0 0.0
        %5429 = vmatprep.mubr.f32.mxu0 0.0
        %v5430 = vand.u32 %v1830, 4294901760
        %5431 = vmatmul.mubr.f32.gmra.mxu0 %v5430
        %v5432 = vpop.f32.mrf.mxu0
        %v5433 = vadd.f32 %v5340, %v5432
        %v5434 = vpop.f32.mrf.mxu0
        %5435 = vmatprep.mubr.f32.mxu0 0.0
        %v5436 = vand.u32 %v1833, 4294901760
        %5437 = vmatmul.mubr.f32.gmra.mxu0 %v5436
        %v5438 = vpop.f32.mrf.mxu0
        %v5439 = vadd.f32 %v5346, %v5438
        %v5440 = vpop.f32.mrf.mxu0
        %5441 = vmatprep.mubr.f32.mxu0 0.0
        %v5442 = vand.u32 %v1836, 4294901760
        %5443 = vmatmul.mubr.f32.gmra.mxu0 %v5442
        %v5444 = vpop.f32.mrf.mxu0
        %v5445 = vadd.f32 %v5352, %v5444
        %v5446 = vpop.f32.mrf.mxu0
        %5447 = vmatprep.mubr.f32.mxu0 0.0
        %v5448 = vand.u32 %v1839, 4294901760
        %5449 = vmatmul.mubr.f32.gmra.mxu0 %v5448
        %v5450 = vpop.f32.mrf.mxu0
        %v5451 = vadd.f32 %v5358, %v5450
        %v5452 = vpop.f32.mrf.mxu0
        %5453 = vdwg.mxu0
        %v5454 = vand.u32 2147483647, %v5433
        %vm5455 = vcmp.le.f32.partialorder %v5454, 0.7853982
        %vm5456 = vcmp.lt.s32.totalorder %v5433, 0
        %v5457 = vand.u32 %v5433, 2139095040
        %v5458 = vshrl.u32 %v5457, 23
        %v5459 = vsub.s32 %v5458, 127
        %v5460 = vand.u32 2147483647, %v5433
        %v5461 = vand.u32 %v5460, 8388607
        %v5462 = vor.u32 %v5461, 8388608
        %v5463 = vsub.s32 0, %v5462
        %v5464 = vadd.s32 %v5459, 1
        %vm5465 = vcmp.gt.s32.totalorder %v5464, 0
        %v5466 = vsel %vm5465, %v5464, 0
        %v5467 = vshrl.u32 %v5466, 5
        %v5468 = vand.u32 %v5466, 31
        %v5469 = vsub.s32 32, %v5468
        %v5470 = vshrl.u32 683565275, %v5469
        %v5471 = vshll.u32 683565275, %v5468
        %v5472 = vshrl.u32 2475754826, %v5469
        %v5473 = vor.u32 %v5471, %v5472
        %v5474 = vshll.u32 2475754826, %v5468
        %v5475 = vshrl.u32 2131351028, %v5469
        %v5476 = vor.u32 %v5474, %v5475
        %v5477 = vshll.u32 2131351028, %v5468
        %v5478 = vshrl.u32 2102212464, %v5469
        %v5479 = vor.u32 %v5477, %v5478
        %v5480 = vshll.u32 2102212464, %v5468
        %v5481 = vshrl.u32 920167782, %v5469
        %v5482 = vor.u32 %v5480, %v5481
        %v5483 = vshll.u32 920167782, %v5468
        %v5484 = vshrl.u32 1326507024, %v5469
        %v5485 = vor.u32 %v5483, %v5484
        %vm5486 = vcmp.lt.s32.totalorder %v5467, 1
        %vm5487 = vcmp.lt.s32.totalorder %v5467, 2
        %vm5488 = vcmp.lt.s32.totalorder %v5467, 3
        %vm5489 = vcmp.lt.s32.totalorder %v5467, 4
        %v5490 = vsel %vm5486, %v5470, %v5473
        %v5491 = vsel %vm5489, %v5479, 2102212464
        %v5492 = vsel %vm5488, %v5476, %v5491
        %v5493 = vsel %vm5487, %v5490, %v5492
        %v5494 = vsel %vm5486, %v5473, %v5476
        %v5495 = vsel %vm5489, %v5482, 920167782
        %v5496 = vsel %vm5488, %v5479, %v5495
        %v5497 = vsel %vm5487, %v5494, %v5496
        %v5498 = vsel %vm5486, %v5476, %v5479
        %v5499 = vsel %vm5489, %v5485, 1326507024
        %v5500 = vsel %vm5488, %v5482, %v5499
        %v5501 = vsel %vm5487, %v5498, %v5500
        %v5502 = vshll.u32 %v5462, 8
        %v5503 = vmul.u32.u64.compose %v5502, %v5501
        %v5504 = vextract.low.u32 %v5503
        %v5505 = vextract.high.u32 %v5503
        %v5506 = vmul.u32.u64.compose %v5502, %v5497
        %v5507 = vextract.low.u32 %v5506
        %v5508 = vextract.high.u32 %v5506
        %v5509 = vmul.u32 %v5502, %v5493
        %v5510 = vadd.s32 %v5505, %v5507
        %vm5511 = vc.u32 %v5505, %v5507
        %v5512 = vadd.s32 %v5508, 1
        %v5513 = vsel %vm5511, %v5512, %v5508
        %v5514 = vadd.s32 %v5509, %v5513
        %v5515 = vadd.s32 %v5514, 536870912
        %v5516 = vshrl.u32 %v5515, 30
        %v5517 = vshll.u32 %v5516, 30
        %v5518 = vsub.s32 %v5514, %v5517
        %vm5519 = vcmp.lt.s32.totalorder %v5518, 0
        %v5520 = vsub.s32 0, %v5518
        %v5521 = vsel %vm5519, %v5520, %v5518
        %v5522 = vclz %v5521
        %v5523 = vsub.s32 %v5522, 2
        %vm5524 = vcmp.gt.s32.totalorder 0, %v5523
        %v5525 = vsel %vm5524, 0, %v5523
        %v5526 = vsub.s32 32, %v5525
        %v5527 = vshll.u32 %v5518, %v5525
        %v5528 = vshrl.u32 %v5510, %v5526
        %v5529 = vor.u32 %v5527, %v5528
        %v5530 = vsub.s32 4294967266, %v5525
        %v5531 = vadd.s32 %v5530, 127
        %v5532 = vshll.u32 %v5531, 23
        %v5533 = vor.u32 4788187, %v5532
        %v5534 = vand.u32 2147483647, %v5533
        %v5536 = vcvt.s32.f32 %v5529
        %v5537 = vmul.f32 %v5536, %v5534
        %v5538 = vxor.u32 %v5537, 2147483648
        %v5539 = vsel %vm5456, %v5538, %v5537
        %v5540 = vsub.s32 4, %v5516
        %v5541 = vsel %vm5456, %v5540, %v5516
        %v5542 = vsel %vm5455, %v5433, %v5539
        %v5543 = vsel %vm5455, 0, %v5541
        %v5544 = vcosq.f32.pop %v5542
        %v5545 = vsinq.f32.pop %v5542
        %vm5546 = vweird.f32 %v5433
        %v5547 = vadd.s32 %v5543, 3
        %v5548 = vand.u32 %v5547, 3
        %vm5549 = vcmp.lt.s32.totalorder %v5548, 2
        %vm5550 = vcmp.eq.s32.totalorder %v5548, 0
        %v5551 = vxor.u32 %v5545, 2147483648
        %v5552 = vsel %vm5550, %v5544, %v5551
        %vm5553 = vcmp.eq.s32.totalorder %v5548, 2
        %v5554 = vxor.u32 %v5544, 2147483648
        %v5555 = vsel %vm5553, %v5554, %v5545
        %v5556 = vsel %vm5549, %v5552, %v5555
        %v5557 = vsel %vm5546, nan, %v5556
        %v5558 = vand.u32 2147483647, %v5439
        %vm5559 = vcmp.le.f32.partialorder %v5558, 0.7853982
        %vm5560 = vcmp.lt.s32.totalorder %v5439, 0
        %v5561 = vand.u32 %v5439, 2139095040
        %v5562 = vshrl.u32 %v5561, 23
        %v5563 = vsub.s32 %v5562, 127
        %v5564 = vand.u32 2147483647, %v5439
        %v5565 = vand.u32 %v5564, 8388607
        %v5566 = vor.u32 %v5565, 8388608
        %v5567 = vsub.s32 0, %v5566
        %v5568 = vadd.s32 %v5563, 1
        %vm5569 = vcmp.gt.s32.totalorder %v5568, 0
        %v5570 = vsel %vm5569, %v5568, 0
        %v5571 = vshrl.u32 %v5570, 5
        %v5572 = vand.u32 %v5570, 31
        %v5573 = vsub.s32 32, %v5572
        %v5574 = vshrl.u32 683565275, %v5573
        %v5575 = vshll.u32 683565275, %v5572
        %v5576 = vshrl.u32 2475754826, %v5573
        %v5577 = vor.u32 %v5575, %v5576
        %v5578 = vshll.u32 2475754826, %v5572
        %v5579 = vshrl.u32 2131351028, %v5573
        %v5580 = vor.u32 %v5578, %v5579
        %v5581 = vshll.u32 2131351028, %v5572
        %v5582 = vshrl.u32 2102212464, %v5573
        %v5583 = vor.u32 %v5581, %v5582
        %v5584 = vshll.u32 2102212464, %v5572
        %v5585 = vshrl.u32 920167782, %v5573
        %v5586 = vor.u32 %v5584, %v5585
        %v5587 = vshll.u32 920167782, %v5572
        %v5588 = vshrl.u32 1326507024, %v5573
        %v5589 = vor.u32 %v5587, %v5588
        %vm5590 = vcmp.lt.s32.totalorder %v5571, 1
        %vm5591 = vcmp.lt.s32.totalorder %v5571, 2
        %vm5592 = vcmp.lt.s32.totalorder %v5571, 3
        %vm5593 = vcmp.lt.s32.totalorder %v5571, 4
        %v5594 = vsel %vm5590, %v5574, %v5577
        %v5595 = vsel %vm5593, %v5583, 2102212464
        %v5596 = vsel %vm5592, %v5580, %v5595
        %v5597 = vsel %vm5591, %v5594, %v5596
        %v5598 = vsel %vm5590, %v5577, %v5580
        %v5599 = vsel %vm5593, %v5586, 920167782
        %v5600 = vsel %vm5592, %v5583, %v5599
        %v5601 = vsel %vm5591, %v5598, %v5600
        %v5602 = vsel %vm5590, %v5580, %v5583
        %v5603 = vsel %vm5593, %v5589, 1326507024
        %v5604 = vsel %vm5592, %v5586, %v5603
        %v5605 = vsel %vm5591, %v5602, %v5604
        %v5606 = vshll.u32 %v5566, 8
        %v5607 = vmul.u32.u64.compose %v5606, %v5605
        %v5608 = vextract.low.u32 %v5607
        %v5609 = vextract.high.u32 %v5607
        %v5610 = vmul.u32.u64.compose %v5606, %v5601
        %v5611 = vextract.low.u32 %v5610
        %v5612 = vextract.high.u32 %v5610
        %v5613 = vmul.u32 %v5606, %v5597
        %v5614 = vadd.s32 %v5609, %v5611
        %vm5615 = vc.u32 %v5609, %v5611
        %v5616 = vadd.s32 %v5612, 1
        %v5617 = vsel %vm5615, %v5616, %v5612
        %v5618 = vadd.s32 %v5613, %v5617
        %v5619 = vadd.s32 %v5618, 536870912
        %v5620 = vshrl.u32 %v5619, 30
        %v5621 = vshll.u32 %v5620, 30
        %v5622 = vsub.s32 %v5618, %v5621
        %vm5623 = vcmp.lt.s32.totalorder %v5622, 0
        %v5624 = vsub.s32 0, %v5622
        %v5625 = vsel %vm5623, %v5624, %v5622
        %v5626 = vclz %v5625
        %v5627 = vsub.s32 %v5626, 2
        %vm5628 = vcmp.gt.s32.totalorder 0, %v5627
        %v5629 = vsel %vm5628, 0, %v5627
        %v5630 = vsub.s32 32, %v5629
        %v5631 = vshll.u32 %v5622, %v5629
        %v5632 = vshrl.u32 %v5614, %v5630
        %v5633 = vor.u32 %v5631, %v5632
        %v5634 = vsub.s32 4294967266, %v5629
        %v5635 = vadd.s32 %v5634, 127
        %v5636 = vshll.u32 %v5635, 23
        %v5637 = vor.u32 4788187, %v5636
        %v5638 = vand.u32 2147483647, %v5637
        %v5640 = vcvt.s32.f32 %v5633
        %v5641 = vmul.f32 %v5640, %v5638
        %v5642 = vxor.u32 %v5641, 2147483648
        %v5643 = vsel %vm5560, %v5642, %v5641
        %v5644 = vsub.s32 4, %v5620
        %v5645 = vsel %vm5560, %v5644, %v5620
        %v5646 = vsel %vm5559, %v5439, %v5643
        %v5647 = vsel %vm5559, 0, %v5645
        %v5648 = vcosq.f32.pop %v5646
        %v5649 = vsinq.f32.pop %v5646
        %vm5650 = vweird.f32 %v5439
        %v5651 = vadd.s32 %v5647, 3
        %v5652 = vand.u32 %v5651, 3
        %vm5653 = vcmp.lt.s32.totalorder %v5652, 2
        %vm5654 = vcmp.eq.s32.totalorder %v5652, 0
        %v5655 = vxor.u32 %v5649, 2147483648
        %v5656 = vsel %vm5654, %v5648, %v5655
        %vm5657 = vcmp.eq.s32.totalorder %v5652, 2
        %v5658 = vxor.u32 %v5648, 2147483648
        %v5659 = vsel %vm5657, %v5658, %v5649
        %v5660 = vsel %vm5653, %v5656, %v5659
        %v5661 = vsel %vm5650, nan, %v5660
        %v5662 = vand.u32 2147483647, %v5445
        %vm5663 = vcmp.le.f32.partialorder %v5662, 0.7853982
        %vm5664 = vcmp.lt.s32.totalorder %v5445, 0
        %v5665 = vand.u32 %v5445, 2139095040
        %v5666 = vshrl.u32 %v5665, 23
        %v5667 = vsub.s32 %v5666, 127
        %v5668 = vand.u32 2147483647, %v5445
        %v5669 = vand.u32 %v5668, 8388607
        %v5670 = vor.u32 %v5669, 8388608
        %v5671 = vsub.s32 0, %v5670
        %v5672 = vadd.s32 %v5667, 1
        %vm5673 = vcmp.gt.s32.totalorder %v5672, 0
        %v5674 = vsel %vm5673, %v5672, 0
        %v5675 = vshrl.u32 %v5674, 5
        %v5676 = vand.u32 %v5674, 31
        %v5677 = vsub.s32 32, %v5676
        %v5678 = vshrl.u32 683565275, %v5677
        %v5679 = vshll.u32 683565275, %v5676
        %v5680 = vshrl.u32 2475754826, %v5677
        %v5681 = vor.u32 %v5679, %v5680
        %v5682 = vshll.u32 2475754826, %v5676
        %v5683 = vshrl.u32 2131351028, %v5677
        %v5684 = vor.u32 %v5682, %v5683
        %v5685 = vshll.u32 2131351028, %v5676
        %v5686 = vshrl.u32 2102212464, %v5677
        %v5687 = vor.u32 %v5685, %v5686
        %v5688 = vshll.u32 2102212464, %v5676
        %v5689 = vshrl.u32 920167782, %v5677
        %v5690 = vor.u32 %v5688, %v5689
        %v5691 = vshll.u32 920167782, %v5676
        %v5692 = vshrl.u32 1326507024, %v5677
        %v5693 = vor.u32 %v5691, %v5692
        %vm5694 = vcmp.lt.s32.totalorder %v5675, 1
        %vm5695 = vcmp.lt.s32.totalorder %v5675, 2
        %vm5696 = vcmp.lt.s32.totalorder %v5675, 3
        %vm5697 = vcmp.lt.s32.totalorder %v5675, 4
        %v5698 = vsel %vm5694, %v5678, %v5681
        %v5699 = vsel %vm5697, %v5687, 2102212464
        %v5700 = vsel %vm5696, %v5684, %v5699
        %v5701 = vsel %vm5695, %v5698, %v5700
        %v5702 = vsel %vm5694, %v5681, %v5684
        %v5703 = vsel %vm5697, %v5690, 920167782
        %v5704 = vsel %vm5696, %v5687, %v5703
        %v5705 = vsel %vm5695, %v5702, %v5704
        %v5706 = vsel %vm5694, %v5684, %v5687
        %v5707 = vsel %vm5697, %v5693, 1326507024
        %v5708 = vsel %vm5696, %v5690, %v5707
        %v5709 = vsel %vm5695, %v5706, %v5708
        %v5710 = vshll.u32 %v5670, 8
        %v5711 = vmul.u32.u64.compose %v5710, %v5709
        %v5712 = vextract.low.u32 %v5711
        %v5713 = vextract.high.u32 %v5711
        %v5714 = vmul.u32.u64.compose %v5710, %v5705
        %v5715 = vextract.low.u32 %v5714
        %v5716 = vextract.high.u32 %v5714
        %v5717 = vmul.u32 %v5710, %v5701
        %v5718 = vadd.s32 %v5713, %v5715
        %vm5719 = vc.u32 %v5713, %v5715
        %v5720 = vadd.s32 %v5716, 1
        %v5721 = vsel %vm5719, %v5720, %v5716
        %v5722 = vadd.s32 %v5717, %v5721
        %v5723 = vadd.s32 %v5722, 536870912
        %v5724 = vshrl.u32 %v5723, 30
        %v5725 = vshll.u32 %v5724, 30
        %v5726 = vsub.s32 %v5722, %v5725
        %vm5727 = vcmp.lt.s32.totalorder %v5726, 0
        %v5728 = vsub.s32 0, %v5726
        %v5729 = vsel %vm5727, %v5728, %v5726
        %v5730 = vclz %v5729
        %v5731 = vsub.s32 %v5730, 2
        %vm5732 = vcmp.gt.s32.totalorder 0, %v5731
        %v5733 = vsel %vm5732, 0, %v5731
        %v5734 = vsub.s32 32, %v5733
        %v5735 = vshll.u32 %v5726, %v5733
        %v5736 = vshrl.u32 %v5718, %v5734
        %v5737 = vor.u32 %v5735, %v5736
        %v5738 = vsub.s32 4294967266, %v5733
        %v5739 = vadd.s32 %v5738, 127
        %v5740 = vshll.u32 %v5739, 23
        %v5741 = vor.u32 4788187, %v5740
        %v5742 = vand.u32 2147483647, %v5741
        %v5744 = vcvt.s32.f32 %v5737
        %v5745 = vmul.f32 %v5744, %v5742
        %v5746 = vxor.u32 %v5745, 2147483648
        %v5747 = vsel %vm5664, %v5746, %v5745
        %v5748 = vsub.s32 4, %v5724
        %v5749 = vsel %vm5664, %v5748, %v5724
        %v5750 = vsel %vm5663, %v5445, %v5747
        %v5751 = vsel %vm5663, 0, %v5749
        %v5752 = vcosq.f32.pop %v5750
        %v5753 = vsinq.f32.pop %v5750
        %vm5754 = vweird.f32 %v5445
        %v5755 = vadd.s32 %v5751, 3
        %v5756 = vand.u32 %v5755, 3
        %vm5757 = vcmp.lt.s32.totalorder %v5756, 2
        %vm5758 = vcmp.eq.s32.totalorder %v5756, 0
        %v5759 = vxor.u32 %v5753, 2147483648
        %v5760 = vsel %vm5758, %v5752, %v5759
        %vm5761 = vcmp.eq.s32.totalorder %v5756, 2
        %v5762 = vxor.u32 %v5752, 2147483648
        %v5763 = vsel %vm5761, %v5762, %v5753
        %v5764 = vsel %vm5757, %v5760, %v5763
        %v5765 = vsel %vm5754, nan, %v5764
        %v5766 = vand.u32 2147483647, %v5451
        %vm5767 = vcmp.le.f32.partialorder %v5766, 0.7853982
        %vm5768 = vcmp.lt.s32.totalorder %v5451, 0
        %v5769 = vand.u32 %v5451, 2139095040
        %v5770 = vshrl.u32 %v5769, 23
        %v5771 = vsub.s32 %v5770, 127
        %v5772 = vand.u32 2147483647, %v5451
        %v5773 = vand.u32 %v5772, 8388607
        %v5774 = vor.u32 %v5773, 8388608
        %v5775 = vsub.s32 0, %v5774
        %v5776 = vadd.s32 %v5771, 1
        %vm5777 = vcmp.gt.s32.totalorder %v5776, 0
        %v5778 = vsel %vm5777, %v5776, 0
        %v5779 = vshrl.u32 %v5778, 5
        %v5780 = vand.u32 %v5778, 31
        %v5781 = vsub.s32 32, %v5780
        %v5782 = vshrl.u32 683565275, %v5781
        %v5783 = vshll.u32 683565275, %v5780
        %v5784 = vshrl.u32 2475754826, %v5781
        %v5785 = vor.u32 %v5783, %v5784
        %v5786 = vshll.u32 2475754826, %v5780
        %v5787 = vshrl.u32 2131351028, %v5781
        %v5788 = vor.u32 %v5786, %v5787
        %v5789 = vshll.u32 2131351028, %v5780
        %v5790 = vshrl.u32 2102212464, %v5781
        %v5791 = vor.u32 %v5789, %v5790
        %v5792 = vshll.u32 2102212464, %v5780
        %v5793 = vshrl.u32 920167782, %v5781
        %v5794 = vor.u32 %v5792, %v5793
        %v5795 = vshll.u32 920167782, %v5780
        %v5796 = vshrl.u32 1326507024, %v5781
        %v5797 = vor.u32 %v5795, %v5796
        %vm5798 = vcmp.lt.s32.totalorder %v5779, 1
        %vm5799 = vcmp.lt.s32.totalorder %v5779, 2
        %vm5800 = vcmp.lt.s32.totalorder %v5779, 3
        %vm5801 = vcmp.lt.s32.totalorder %v5779, 4
        %v5802 = vsel %vm5798, %v5782, %v5785
        %v5803 = vsel %vm5801, %v5791, 2102212464
        %v5804 = vsel %vm5800, %v5788, %v5803
        %v5805 = vsel %vm5799, %v5802, %v5804
        %v5806 = vsel %vm5798, %v5785, %v5788
        %v5807 = vsel %vm5801, %v5794, 920167782
        %v5808 = vsel %vm5800, %v5791, %v5807
        %v5809 = vsel %vm5799, %v5806, %v5808
        %v5810 = vsel %vm5798, %v5788, %v5791
        %v5811 = vsel %vm5801, %v5797, 1326507024
        %v5812 = vsel %vm5800, %v5794, %v5811
        %v5813 = vsel %vm5799, %v5810, %v5812
        %v5814 = vshll.u32 %v5774, 8
        %v5815 = vmul.u32.u64.compose %v5814, %v5813
        %v5816 = vextract.low.u32 %v5815
        %v5817 = vextract.high.u32 %v5815
        %v5818 = vmul.u32.u64.compose %v5814, %v5809
        %v5819 = vextract.low.u32 %v5818
        %v5820 = vextract.high.u32 %v5818
        %v5821 = vmul.u32 %v5814, %v5805
        %v5822 = vadd.s32 %v5817, %v5819
        %vm5823 = vc.u32 %v5817, %v5819
        %v5824 = vadd.s32 %v5820, 1
        %v5825 = vsel %vm5823, %v5824, %v5820
        %v5826 = vadd.s32 %v5821, %v5825
        %v5827 = vadd.s32 %v5826, 536870912
        %v5828 = vshrl.u32 %v5827, 30
        %v5829 = vshll.u32 %v5828, 30
        %v5830 = vsub.s32 %v5826, %v5829
        %vm5831 = vcmp.lt.s32.totalorder %v5830, 0
        %v5832 = vsub.s32 0, %v5830
        %v5833 = vsel %vm5831, %v5832, %v5830
        %v5834 = vclz %v5833
        %v5835 = vsub.s32 %v5834, 2
        %vm5836 = vcmp.gt.s32.totalorder 0, %v5835
        %v5837 = vsel %vm5836, 0, %v5835
        %v5838 = vsub.s32 32, %v5837
        %v5839 = vshll.u32 %v5830, %v5837
        %v5840 = vshrl.u32 %v5822, %v5838
        %v5841 = vor.u32 %v5839, %v5840
        %v5842 = vsub.s32 4294967266, %v5837
        %v5843 = vadd.s32 %v5842, 127
        %v5844 = vshll.u32 %v5843, 23
        %v5845 = vor.u32 4788187, %v5844
        %v5846 = vand.u32 2147483647, %v5845
        %v5848 = vcvt.s32.f32 %v5841
        %v5849 = vmul.f32 %v5848, %v5846
        %v5850 = vxor.u32 %v5849, 2147483648
        %v5851 = vsel %vm5768, %v5850, %v5849
        %v5852 = vsub.s32 4, %v5828
        %v5853 = vsel %vm5768, %v5852, %v5828
        %v5854 = vsel %vm5767, %v5451, %v5851
        %v5855 = vsel %vm5767, 0, %v5853
        %v5856 = vcosq.f32.pop %v5854
        %v5857 = vsinq.f32.pop %v5854
        %vm5858 = vweird.f32 %v5451
        %v5859 = vadd.s32 %v5855, 3
        %v5860 = vand.u32 %v5859, 3
        %vm5861 = vcmp.lt.s32.totalorder %v5860, 2
        %vm5862 = vcmp.eq.s32.totalorder %v5860, 0
        %v5863 = vxor.u32 %v5857, 2147483648
        %v5864 = vsel %vm5862, %v5856, %v5863
        %vm5865 = vcmp.eq.s32.totalorder %v5860, 2
        %v5866 = vxor.u32 %v5856, 2147483648
        %v5867 = vsel %vm5865, %v5866, %v5857
        %v5868 = vsel %vm5861, %v5864, %v5867
        %v5869 = vsel %vm5858, nan, %v5868
        %5870 = vmatprep.subr.mxu0 0.0
        %5871 = vmatpush1.msra.mxu0 0.0
        %5872 = vmatprep.subr.mxu0 0.0
        %5873 = vmatpush1.msra.mxu0 0.0
        %5874 = vmatprep.subr.mxu0 0.0
        %5875 = vmatpush1.msra.mxu0 0.0
        %5876 = vmatprep.subr.mxu0 0.0
        %5877 = vmatpush1.msra.mxu0 0.0
        %5878 = vmatprep.subr.mxu0 0.0
        %5879 = vmatpush1.msra.mxu0 0.0
        %5880 = vmatprep.subr.mxu0 0.0
        %5881 = vmatpush1.msra.mxu0 0.0
        %5882 = vmatprep.subr.mxu0 0.0
        %5883 = vmatpush1.msra.mxu0 0.0
        %5884 = vmatprep.subr.mxu0 0.0
        %5885 = vmatpush1.msra.mxu0 0.0
        %5886 = vmatprep.subr.mxu0 0.0
        %5887 = vmatpush1.msra.mxu0 0.0
        %5888 = vmatprep.subr.mxu0 0.0
        %5889 = vmatpush1.msra.mxu0 0.0
        %5890 = vmatprep.subr.mxu0 0.0
        %5891 = vmatpush1.msra.mxu0 0.0
        %5892 = vmatprep.subr.mxu0 0.0
        %5893 = vmatpush1.msra.mxu0 0.0
        %5894 = vmatprep.subr.mxu0 0.0
        %v5895 = vand.u32 %v5869, 4294901760
        %5896 = vmatpush1.msra.mxu0 %v5895
        %5897 = vmatprep.subr.mxu0 0.0
        %v5898 = vand.u32 %v5765, 4294901760
        %5899 = vmatpush1.msra.mxu0 %v5898
        %5900 = vmatprep.subr.mxu0 0.0
        %v5901 = vand.u32 %v5661, 4294901760
        %5902 = vmatpush1.msra.mxu0 %v5901
        %5903 = vmatprep.subr.mxu0 0.0
        %v5904 = vand.u32 %v5557, 4294901760
        %5905 = vmatpush1.msra.mxu0 %v5904
        %5906 = vmatprep.subr.mxu0 0.0
        %5907 = vmatpush2.msra.mxu0 0.0
        %5908 = vmatprep.subr.mxu0 0.0
        %5909 = vmatpush2.msra.mxu0 0.0
        %5910 = vmatprep.subr.mxu0 0.0
        %5911 = vmatpush2.msra.mxu0 0.0
        %5912 = vmatprep.subr.mxu0 0.0
        %5913 = vmatpush2.msra.mxu0 0.0
        %5914 = vmatprep.subr.mxu0 0.0
        %5915 = vmatpush2.msra.mxu0 0.0
        %5916 = vmatprep.subr.mxu0 0.0
        %5917 = vmatpush2.msra.mxu0 0.0
        %5918 = vmatprep.subr.mxu0 0.0
        %5919 = vmatpush2.msra.mxu0 0.0
        %5920 = vmatprep.subr.mxu0 0.0
        %5921 = vmatpush2.msra.mxu0 0.0
        %5922 = vmatprep.subr.mxu0 0.0
        %5923 = vmatpush2.msra.mxu0 0.0
        %5924 = vmatprep.subr.mxu0 0.0
        %5925 = vmatpush2.msra.mxu0 0.0
        %5926 = vmatprep.subr.mxu0 0.0
        %5927 = vmatpush2.msra.mxu0 0.0
        %5928 = vmatprep.subr.mxu0 0.0
        %5929 = vmatpush2.msra.mxu0 0.0
        %5930 = vmatprep.subr.mxu0 0.0
        %5931 = vmatpush2.msra.mxu0 0.0
        %5932 = vmatprep.subr.mxu0 0.0
        %5933 = vmatpush2.msra.mxu0 0.0
        %5934 = vmatprep.subr.mxu0 0.0
        %5935 = vmatpush2.msra.mxu0 0.0
        %5936 = vmatprep.subr.mxu0 0.0
        %5937 = vmatpush2.msra.mxu0 0.0
        %5938 = vmatprep.mubr.f32.mxu0 0.0
        %v5939 = vand.u32 %v2877, 4294901760
        %v5940 = vsub.f32 %v2877, %v5939
        %v5941 = vand.u32 %v5940, 4294901760
        %v5942 = vsub.f32 %v5940, %v5941
        %v5943 = vand.u32 %v5942, 4294901760
        %5944 = vmatmul.mubr.f32.gmra.mxu0 %v5943
        %v5945 = vpop.f32.mrf.mxu0
        %v5946 = vadd.f32 %v2874, %v5945
        %v5947 = vpop.f32.mrf.mxu0
        %5948 = vdwg.mxu0
        %5949 = vmatprep.subr.mxu0 0.0
        %5950 = vmatpush1.msra.mxu0 0.0
        %5951 = vmatprep.subr.mxu0 0.0
        %5952 = vmatpush1.msra.mxu0 0.0
        %5953 = vmatprep.subr.mxu0 0.0
        %5954 = vmatpush1.msra.mxu0 0.0
        %5955 = vmatprep.subr.mxu0 0.0
        %5956 = vmatpush1.msra.mxu0 0.0
        %5957 = vmatprep.subr.mxu0 0.0
        %5958 = vmatpush1.msra.mxu0 0.0
        %5959 = vmatprep.subr.mxu0 0.0
        %5960 = vmatpush1.msra.mxu0 0.0
        %5961 = vmatprep.subr.mxu0 0.0
        %5962 = vmatpush1.msra.mxu0 0.0
        %5963 = vmatprep.subr.mxu0 0.0
        %5964 = vmatpush1.msra.mxu0 0.0
        %5965 = vmatprep.subr.mxu0 0.0
        %5966 = vmatpush1.msra.mxu0 0.0
        %5967 = vmatprep.subr.mxu0 0.0
        %5968 = vmatpush1.msra.mxu0 0.0
        %5969 = vmatprep.subr.mxu0 0.0
        %5970 = vmatpush1.msra.mxu0 0.0
        %5971 = vmatprep.subr.mxu0 0.0
        %5972 = vmatpush1.msra.mxu0 0.0
        %5973 = vmatprep.subr.mxu0 0.0
        %v5974 = vand.u32 %v5869, 4294901760
        %v5975 = vsub.f32 %v5869, %v5974
        %v5976 = vand.u32 %v5975, 4294901760
        %v5977 = vsub.f32 %v5975, %v5976
        %v5978 = vand.u32 %v5977, 4294901760
        %5979 = vmatpush1.msra.mxu0 %v5978
        %5980 = vmatprep.subr.mxu0 0.0
        %v5981 = vand.u32 %v5765, 4294901760
        %v5982 = vsub.f32 %v5765, %v5981
        %v5983 = vand.u32 %v5982, 4294901760
        %v5984 = vsub.f32 %v5982, %v5983
        %v5985 = vand.u32 %v5984, 4294901760
        %5986 = vmatpush1.msra.mxu0 %v5985
        %5987 = vmatprep.subr.mxu0 0.0
        %v5988 = vand.u32 %v5661, 4294901760
        %v5989 = vsub.f32 %v5661, %v5988
        %v5990 = vand.u32 %v5989, 4294901760
        %v5991 = vsub.f32 %v5989, %v5990
        %v5992 = vand.u32 %v5991, 4294901760
        %5993 = vmatpush1.msra.mxu0 %v5992
        %5994 = vmatprep.subr.mxu0 0.0
        %v5995 = vand.u32 %v5557, 4294901760
        %v5996 = vsub.f32 %v5557, %v5995
        %v5997 = vand.u32 %v5996, 4294901760
        %v5998 = vsub.f32 %v5996, %v5997
        %v5999 = vand.u32 %v5998, 4294901760
        %6000 = vmatpush1.msra.mxu0 %v5999
        %6001 = vmatprep.subr.mxu0 0.0
        %6002 = vmatpush2.msra.mxu0 0.0
        %6003 = vmatprep.subr.mxu0 0.0
        %6004 = vmatpush2.msra.mxu0 0.0
        %6005 = vmatprep.subr.mxu0 0.0
        %6006 = vmatpush2.msra.mxu0 0.0
        %6007 = vmatprep.subr.mxu0 0.0
        %6008 = vmatpush2.msra.mxu0 0.0
        %6009 = vmatprep.subr.mxu0 0.0
        %6010 = vmatpush2.msra.mxu0 0.0
        %6011 = vmatprep.subr.mxu0 0.0
        %6012 = vmatpush2.msra.mxu0 0.0
        %6013 = vmatprep.subr.mxu0 0.0
        %6014 = vmatpush2.msra.mxu0 0.0
        %6015 = vmatprep.subr.mxu0 0.0
        %6016 = vmatpush2.msra.mxu0 0.0
        %6017 = vmatprep.subr.mxu0 0.0
        %6018 = vmatpush2.msra.mxu0 0.0
        %6019 = vmatprep.subr.mxu0 0.0
        %6020 = vmatpush2.msra.mxu0 0.0
        %6021 = vmatprep.subr.mxu0 0.0
        %6022 = vmatpush2.msra.mxu0 0.0
        %6023 = vmatprep.subr.mxu0 0.0
        %6024 = vmatpush2.msra.mxu0 0.0
        %6025 = vmatprep.subr.mxu0 0.0
        %6026 = vmatpush2.msra.mxu0 0.0
        %6027 = vmatprep.subr.mxu0 0.0
        %6028 = vmatpush2.msra.mxu0 0.0
        %6029 = vmatprep.subr.mxu0 0.0
        %6030 = vmatpush2.msra.mxu0 0.0
        %6031 = vmatprep.subr.mxu0 0.0
        %6032 = vmatpush2.msra.mxu0 0.0
        %6033 = vmatprep.mubr.f32.mxu0 0.0
        %v6034 = vand.u32 %v2877, 4294901760
        %6035 = vmatmul.mubr.f32.gmra.mxu0 %v6034
        %v6036 = vpop.f32.mrf.mxu0
        %v6037 = vadd.f32 %v5946, %v6036
        %v6038 = vpop.f32.mrf.mxu0
        %6039 = vdwg.mxu0
        %6040 = vmatprep.subr.mxu0 0.0
        %6041 = vmatpush1.msra.mxu0 0.0
        %6042 = vmatprep.subr.mxu0 0.0
        %6043 = vmatpush1.msra.mxu0 0.0
        %6044 = vmatprep.subr.mxu0 0.0
        %6045 = vmatpush1.msra.mxu0 0.0
        %6046 = vmatprep.subr.mxu0 0.0
        %6047 = vmatpush1.msra.mxu0 0.0
        %6048 = vmatprep.subr.mxu0 0.0
        %6049 = vmatpush1.msra.mxu0 0.0
        %6050 = vmatprep.subr.mxu0 0.0
        %6051 = vmatpush1.msra.mxu0 0.0
        %6052 = vmatprep.subr.mxu0 0.0
        %6053 = vmatpush1.msra.mxu0 0.0
        %6054 = vmatprep.subr.mxu0 0.0
        %6055 = vmatpush1.msra.mxu0 0.0
        %6056 = vmatprep.subr.mxu0 0.0
        %6057 = vmatpush1.msra.mxu0 0.0
        %6058 = vmatprep.subr.mxu0 0.0
        %6059 = vmatpush1.msra.mxu0 0.0
        %6060 = vmatprep.subr.mxu0 0.0
        %6061 = vmatpush1.msra.mxu0 0.0
        %6062 = vmatprep.subr.mxu0 0.0
        %6063 = vmatpush1.msra.mxu0 0.0
        %6064 = vmatprep.subr.mxu0 0.0
        %v6065 = vand.u32 %v5869, 4294901760
        %v6066 = vsub.f32 %v5869, %v6065
        %6067 = vmatpush1.msra.mxu0 %v6066
        %6068 = vmatprep.subr.mxu0 0.0
        %v6069 = vand.u32 %v5765, 4294901760
        %v6070 = vsub.f32 %v5765, %v6069
        %6071 = vmatpush1.msra.mxu0 %v6070
        %6072 = vmatprep.subr.mxu0 0.0
        %v6073 = vand.u32 %v5661, 4294901760
        %v6074 = vsub.f32 %v5661, %v6073
        %6075 = vmatpush1.msra.mxu0 %v6074
        %6076 = vmatprep.subr.mxu0 0.0
        %v6077 = vand.u32 %v5557, 4294901760
        %v6078 = vsub.f32 %v5557, %v6077
        %6079 = vmatpush1.msra.mxu0 %v6078
        %6080 = vmatprep.subr.mxu0 0.0
        %6081 = vmatpush2.msra.mxu0 0.0
        %6082 = vmatprep.subr.mxu0 0.0
        %6083 = vmatpush2.msra.mxu0 0.0
        %6084 = vmatprep.subr.mxu0 0.0
        %6085 = vmatpush2.msra.mxu0 0.0
        %6086 = vmatprep.subr.mxu0 0.0
        %6087 = vmatpush2.msra.mxu0 0.0
        %6088 = vmatprep.subr.mxu0 0.0
        %6089 = vmatpush2.msra.mxu0 0.0
        %6090 = vmatprep.subr.mxu0 0.0
        %6091 = vmatpush2.msra.mxu0 0.0
        %6092 = vmatprep.subr.mxu0 0.0
        %6093 = vmatpush2.msra.mxu0 0.0
        %6094 = vmatprep.subr.mxu0 0.0
        %6095 = vmatpush2.msra.mxu0 0.0
        %6096 = vmatprep.subr.mxu0 0.0
        %6097 = vmatpush2.msra.mxu0 0.0
        %6098 = vmatprep.subr.mxu0 0.0
        %6099 = vmatpush2.msra.mxu0 0.0
        %6100 = vmatprep.subr.mxu0 0.0
        %6101 = vmatpush2.msra.mxu0 0.0
        %6102 = vmatprep.subr.mxu0 0.0
        %6103 = vmatpush2.msra.mxu0 0.0
        %6104 = vmatprep.subr.mxu0 0.0
        %6105 = vmatpush2.msra.mxu0 0.0
        %6106 = vmatprep.subr.mxu0 0.0
        %6107 = vmatpush2.msra.mxu0 0.0
        %6108 = vmatprep.subr.mxu0 0.0
        %6109 = vmatpush2.msra.mxu0 0.0
        %6110 = vmatprep.subr.mxu0 0.0
        %6111 = vmatpush2.msra.mxu0 0.0
        %6112 = vmatprep.mubr.f32.mxu0 0.0
        %v6113 = vand.u32 %v2877, 4294901760
        %v6114 = vsub.f32 %v2877, %v6113
        %6115 = vmatmul.mubr.f32.gmra.mxu0 %v6114
        %v6116 = vpop.f32.mrf.mxu0
        %v6117 = vadd.f32 %v6037, %v6116
        %v6118 = vpop.f32.mrf.mxu0
        %6119 = vdwg.mxu0
        %6120 = vmatprep.subr.mxu0 0.0
        %6121 = vmatpush1.msra.mxu0 0.0
        %6122 = vmatprep.subr.mxu0 0.0
        %6123 = vmatpush1.msra.mxu0 0.0
        %6124 = vmatprep.subr.mxu0 0.0
        %6125 = vmatpush1.msra.mxu0 0.0
        %6126 = vmatprep.subr.mxu0 0.0
        %6127 = vmatpush1.msra.mxu0 0.0
        %6128 = vmatprep.subr.mxu0 0.0
        %6129 = vmatpush1.msra.mxu0 0.0
        %6130 = vmatprep.subr.mxu0 0.0
        %6131 = vmatpush1.msra.mxu0 0.0
        %6132 = vmatprep.subr.mxu0 0.0
        %6133 = vmatpush1.msra.mxu0 0.0
        %6134 = vmatprep.subr.mxu0 0.0
        %6135 = vmatpush1.msra.mxu0 0.0
        %6136 = vmatprep.subr.mxu0 0.0
        %6137 = vmatpush1.msra.mxu0 0.0
        %6138 = vmatprep.subr.mxu0 0.0
        %6139 = vmatpush1.msra.mxu0 0.0
        %6140 = vmatprep.subr.mxu0 0.0
        %6141 = vmatpush1.msra.mxu0 0.0
        %6142 = vmatprep.subr.mxu0 0.0
        %6143 = vmatpush1.msra.mxu0 0.0
        %6144 = vmatprep.subr.mxu0 0.0
        %v6145 = vand.u32 %v5869, 4294901760
        %6146 = vmatpush1.msra.mxu0 %v6145
        %6147 = vmatprep.subr.mxu0 0.0
        %v6148 = vand.u32 %v5765, 4294901760
        %6149 = vmatpush1.msra.mxu0 %v6148
        %6150 = vmatprep.subr.mxu0 0.0
        %v6151 = vand.u32 %v5661, 4294901760
        %6152 = vmatpush1.msra.mxu0 %v6151
        %6153 = vmatprep.subr.mxu0 0.0
        %v6154 = vand.u32 %v5557, 4294901760
        %6155 = vmatpush1.msra.mxu0 %v6154
        %6156 = vmatprep.subr.mxu0 0.0
        %6157 = vmatpush2.msra.mxu0 0.0
        %6158 = vmatprep.subr.mxu0 0.0
        %6159 = vmatpush2.msra.mxu0 0.0
        %6160 = vmatprep.subr.mxu0 0.0
        %6161 = vmatpush2.msra.mxu0 0.0
        %6162 = vmatprep.subr.mxu0 0.0
        %6163 = vmatpush2.msra.mxu0 0.0
        %6164 = vmatprep.subr.mxu0 0.0
        %6165 = vmatpush2.msra.mxu0 0.0
        %6166 = vmatprep.subr.mxu0 0.0
        %6167 = vmatpush2.msra.mxu0 0.0
        %6168 = vmatprep.subr.mxu0 0.0
        %6169 = vmatpush2.msra.mxu0 0.0
        %6170 = vmatprep.subr.mxu0 0.0
        %6171 = vmatpush2.msra.mxu0 0.0
        %6172 = vmatprep.subr.mxu0 0.0
        %6173 = vmatpush2.msra.mxu0 0.0
        %6174 = vmatprep.subr.mxu0 0.0
        %6175 = vmatpush2.msra.mxu0 0.0
        %6176 = vmatprep.subr.mxu0 0.0
        %6177 = vmatpush2.msra.mxu0 0.0
        %6178 = vmatprep.subr.mxu0 0.0
        %6179 = vmatpush2.msra.mxu0 0.0
        %6180 = vmatprep.subr.mxu0 0.0
        %6181 = vmatpush2.msra.mxu0 0.0
        %6182 = vmatprep.subr.mxu0 0.0
        %6183 = vmatpush2.msra.mxu0 0.0
        %6184 = vmatprep.subr.mxu0 0.0
        %6185 = vmatpush2.msra.mxu0 0.0
        %6186 = vmatprep.subr.mxu0 0.0
        %6187 = vmatpush2.msra.mxu0 0.0
        %6188 = vmatprep.mubr.f32.mxu0 0.0
        %v6189 = vand.u32 %v2877, 4294901760
        %v6190 = vsub.f32 %v2877, %v6189
        %v6191 = vand.u32 %v6190, 4294901760
        %6192 = vmatmul.mubr.f32.gmra.mxu0 %v6191
        %v6193 = vpop.f32.mrf.mxu0
        %v6194 = vadd.f32 %v6117, %v6193
        %v6195 = vpop.f32.mrf.mxu0
        %6196 = vdwg.mxu0
        %6197 = vmatprep.subr.mxu0 0.0
        %6198 = vmatpush1.msra.mxu0 0.0
        %6199 = vmatprep.subr.mxu0 0.0
        %6200 = vmatpush1.msra.mxu0 0.0
        %6201 = vmatprep.subr.mxu0 0.0
        %6202 = vmatpush1.msra.mxu0 0.0
        %6203 = vmatprep.subr.mxu0 0.0
        %6204 = vmatpush1.msra.mxu0 0.0
        %6205 = vmatprep.subr.mxu0 0.0
        %6206 = vmatpush1.msra.mxu0 0.0
        %6207 = vmatprep.subr.mxu0 0.0
        %6208 = vmatpush1.msra.mxu0 0.0
        %6209 = vmatprep.subr.mxu0 0.0
        %6210 = vmatpush1.msra.mxu0 0.0
        %6211 = vmatprep.subr.mxu0 0.0
        %6212 = vmatpush1.msra.mxu0 0.0
        %6213 = vmatprep.subr.mxu0 0.0
        %6214 = vmatpush1.msra.mxu0 0.0
        %6215 = vmatprep.subr.mxu0 0.0
        %6216 = vmatpush1.msra.mxu0 0.0
        %6217 = vmatprep.subr.mxu0 0.0
        %6218 = vmatpush1.msra.mxu0 0.0
        %6219 = vmatprep.subr.mxu0 0.0
        %6220 = vmatpush1.msra.mxu0 0.0
        %6221 = vmatprep.subr.mxu0 0.0
        %v6222 = vand.u32 %v5869, 4294901760
        %v6223 = vsub.f32 %v5869, %v6222
        %v6224 = vand.u32 %v6223, 4294901760
        %6225 = vmatpush1.msra.mxu0 %v6224
        %6226 = vmatprep.subr.mxu0 0.0
        %v6227 = vand.u32 %v5765, 4294901760
        %v6228 = vsub.f32 %v5765, %v6227
        %v6229 = vand.u32 %v6228, 4294901760
        %6230 = vmatpush1.msra.mxu0 %v6229
        %6231 = vmatprep.subr.mxu0 0.0
        %v6232 = vand.u32 %v5661, 4294901760
        %v6233 = vsub.f32 %v5661, %v6232
        %v6234 = vand.u32 %v6233, 4294901760
        %6235 = vmatpush1.msra.mxu0 %v6234
        %6236 = vmatprep.subr.mxu0 0.0
        %v6237 = vand.u32 %v5557, 4294901760
        %v6238 = vsub.f32 %v5557, %v6237
        %v6239 = vand.u32 %v6238, 4294901760
        %6240 = vmatpush1.msra.mxu0 %v6239
        %6241 = vmatprep.subr.mxu0 0.0
        %6242 = vmatpush2.msra.mxu0 0.0
        %6243 = vmatprep.subr.mxu0 0.0
        %6244 = vmatpush2.msra.mxu0 0.0
        %6245 = vmatprep.subr.mxu0 0.0
        %6246 = vmatpush2.msra.mxu0 0.0
        %6247 = vmatprep.subr.mxu0 0.0
        %6248 = vmatpush2.msra.mxu0 0.0
        %6249 = vmatprep.subr.mxu0 0.0
        %6250 = vmatpush2.msra.mxu0 0.0
        %6251 = vmatprep.subr.mxu0 0.0
        %6252 = vmatpush2.msra.mxu0 0.0
        %6253 = vmatprep.subr.mxu0 0.0
        %6254 = vmatpush2.msra.mxu0 0.0
        %6255 = vmatprep.subr.mxu0 0.0
        %6256 = vmatpush2.msra.mxu0 0.0
        %6257 = vmatprep.subr.mxu0 0.0
        %6258 = vmatpush2.msra.mxu0 0.0
        %6259 = vmatprep.subr.mxu0 0.0
        %6260 = vmatpush2.msra.mxu0 0.0
        %6261 = vmatprep.subr.mxu0 0.0
        %6262 = vmatpush2.msra.mxu0 0.0
        %6263 = vmatprep.subr.mxu0 0.0
        %6264 = vmatpush2.msra.mxu0 0.0
        %6265 = vmatprep.subr.mxu0 0.0
        %6266 = vmatpush2.msra.mxu0 0.0
        %6267 = vmatprep.subr.mxu0 0.0
        %6268 = vmatpush2.msra.mxu0 0.0
        %6269 = vmatprep.subr.mxu0 0.0
        %6270 = vmatpush2.msra.mxu0 0.0
        %6271 = vmatprep.subr.mxu0 0.0
        %6272 = vmatpush2.msra.mxu0 0.0
        %6273 = vmatprep.mubr.f32.mxu0 0.0
        %v6274 = vand.u32 %v2877, 4294901760
        %6275 = vmatmul.mubr.f32.gmra.mxu0 %v6274
        %v6276 = vpop.f32.mrf.mxu0
        %v6277 = vadd.f32 %v6194, %v6276
        %v6278 = vpop.f32.mrf.mxu0
        %6279 = vdwg.mxu0
        %6280 = vmatprep.subr.mxu0 0.0
        %6281 = vmatpush1.msra.mxu0 0.0
        %6282 = vmatprep.subr.mxu0 0.0
        %6283 = vmatpush1.msra.mxu0 0.0
        %6284 = vmatprep.subr.mxu0 0.0
        %6285 = vmatpush1.msra.mxu0 0.0
        %6286 = vmatprep.subr.mxu0 0.0
        %6287 = vmatpush1.msra.mxu0 0.0
        %6288 = vmatprep.subr.mxu0 0.0
        %6289 = vmatpush1.msra.mxu0 0.0
        %6290 = vmatprep.subr.mxu0 0.0
        %6291 = vmatpush1.msra.mxu0 0.0
        %6292 = vmatprep.subr.mxu0 0.0
        %6293 = vmatpush1.msra.mxu0 0.0
        %6294 = vmatprep.subr.mxu0 0.0
        %6295 = vmatpush1.msra.mxu0 0.0
        %6296 = vmatprep.subr.mxu0 0.0
        %6297 = vmatpush1.msra.mxu0 0.0
        %6298 = vmatprep.subr.mxu0 0.0
        %6299 = vmatpush1.msra.mxu0 0.0
        %6300 = vmatprep.subr.mxu0 0.0
        %6301 = vmatpush1.msra.mxu0 0.0
        %6302 = vmatprep.subr.mxu0 0.0
        %6303 = vmatpush1.msra.mxu0 0.0
        %6304 = vmatprep.subr.mxu0 0.0
        %v6305 = vand.u32 %v5869, 4294901760
        %6306 = vmatpush1.msra.mxu0 %v6305
        %6307 = vmatprep.subr.mxu0 0.0
        %v6308 = vand.u32 %v5765, 4294901760
        %6309 = vmatpush1.msra.mxu0 %v6308
        %6310 = vmatprep.subr.mxu0 0.0
        %v6311 = vand.u32 %v5661, 4294901760
        %6312 = vmatpush1.msra.mxu0 %v6311
        %6313 = vmatprep.subr.mxu0 0.0
        %v6314 = vand.u32 %v5557, 4294901760
        %6315 = vmatpush1.msra.mxu0 %v6314
        %6316 = vmatprep.subr.mxu0 0.0
        %6317 = vmatpush2.msra.mxu0 0.0
        %6318 = vmatprep.subr.mxu0 0.0
        %6319 = vmatpush2.msra.mxu0 0.0
        %6320 = vmatprep.subr.mxu0 0.0
        %6321 = vmatpush2.msra.mxu0 0.0
        %6322 = vmatprep.subr.mxu0 0.0
        %6323 = vmatpush2.msra.mxu0 0.0
        %6324 = vmatprep.subr.mxu0 0.0
        %6325 = vmatpush2.msra.mxu0 0.0
        %6326 = vmatprep.subr.mxu0 0.0
        %6327 = vmatpush2.msra.mxu0 0.0
        %6328 = vmatprep.subr.mxu0 0.0
        %6329 = vmatpush2.msra.mxu0 0.0
        %6330 = vmatprep.subr.mxu0 0.0
        %6331 = vmatpush2.msra.mxu0 0.0
        %6332 = vmatprep.subr.mxu0 0.0
        %6333 = vmatpush2.msra.mxu0 0.0
        %6334 = vmatprep.subr.mxu0 0.0
        %6335 = vmatpush2.msra.mxu0 0.0
        %6336 = vmatprep.subr.mxu0 0.0
        %6337 = vmatpush2.msra.mxu0 0.0
        %6338 = vmatprep.subr.mxu0 0.0
        %6339 = vmatpush2.msra.mxu0 0.0
        %6340 = vmatprep.subr.mxu0 0.0
        %6341 = vmatpush2.msra.mxu0 0.0
        %6342 = vmatprep.subr.mxu0 0.0
        %6343 = vmatpush2.msra.mxu0 0.0
        %6344 = vmatprep.subr.mxu0 0.0
        %6345 = vmatpush2.msra.mxu0 0.0
        %6346 = vmatprep.subr.mxu0 0.0
        %6347 = vmatpush2.msra.mxu0 0.0
        %6348 = vmatprep.mubr.f32.mxu0 0.0
        %v6349 = vand.u32 %v2877, 4294901760
        %6350 = vmatmul.mubr.f32.gmra.mxu0 %v6349
        %v6351 = vpop.f32.mrf.mxu0
        %v6352 = vadd.f32 %v6277, %v6351
        %v6353 = vpop.f32.mrf.mxu0
        %6354 = vdwg.mxu0
        %s6355 = scalar_lea.vmem %s207, 4 [#allocation2]
        %6356 = vst [vmem:[%s6355] sm:$0xf] %v6352
        %s6357 = sand.u32 %s129, 1
        %s6358 = scalar_lea.sflag [#allocation3], %s6357
        %s6359 = sand.u32 %s129, 1
        %s6360 = smul.addr %s6359, 8
        %s6361 = scalar_lea.vmem [#allocation2], %s6360
        // Predicated region
        $region37: #{tpu_custom_call.1} parent=35 // pred_check
          %p6362 = pneg %p139
        $region38: #{tpu_custom_call.1} parent=35 // pred_check_branch
          %6364 = sbr.rel (%p6362) target = $region40
        $region39: #{tpu_custom_call.1} parent=35 // pred_region
          %s6365 = smul.u32 2, %s22
          %s6367 = ssub.s32 128, 128
          %6368 = vsyncadd %s6358, %s6367
          %s6369 = smul.addr %s6365, 2
          %s6370 = sadd.s32 %s23, %s6369
          %s6371 = smul.addr %s6370, 64
          %s6372 = scalar_lea.hbm %s4, %s6371
          %s6373 = sshll.u32 %s6361, 4
          %s6374 = int_to_ptr.vmem [resolvable:$true] %s6373
          %6379 = dma.vmem_to_hbm [thread:$0]  %s6374, 128, %s6372, %s6358, 64, 128, 4
        $region40: #{tpu_custom_call.1} parent=35 // pred_fallthru
          _
      $region36: #{tpu_custom_call.1} parent=5 // pred_fallthru
        _
      %p6380 = scmp.le.s32.totalorder 2, %s13
      // Predicated region
      $region41: #{tpu_custom_call.1} parent=5 // pred_check
        %p6381 = pneg %p6380
      $region42: #{tpu_custom_call.1} parent=5 // pred_check_branch
        %6383 = sbr.rel (%p6381) target = $region44
      $region43: #{tpu_custom_call.1} parent=5 // pred_region
        %s6384 = ssub.s32 %s13, 2
        // Predicated region
        $region45: #{tpu_custom_call.1} parent=43 // pred_check
          %p6385 = pneg %p145
        $region46: #{tpu_custom_call.1} parent=43 // pred_check_branch
          %6387 = sbr.rel (%p6385) target = $region48
        $region47: #{tpu_custom_call.1} parent=43 // pred_region
          %s6388 = sand.u32 %s130, 1
          %s6389 = scalar_lea.sflag [#allocation3], %s6388
          %s6390 = sand.u32 %s130, 1
          %s6391 = smul.addr %s6390, 8
          %s6392 = scalar_lea.vmem [#allocation2], %s6391
          %6393 = dma.done %s6389, 128
        $region48: #{tpu_custom_call.1} parent=43 // pred_fallthru
          _
      $region44: #{tpu_custom_call.1} parent=5 // pred_fallthru
        _
    $region6: #{tpu_custom_call.1} parent=1 // loop_footer
      %s17 = sadd.s32 1, %s13
    $region7: #{tpu_custom_call.1} parent=1 // loop_footer_branch
      %12 = sbr.rel target = $region3
    $region8: #{tpu_custom_call.1} parent=1 // loop_exit
      _
    %6394 = vsyncpa [#allocation3], 1
    %s6395 = scalar_lea.sflag [#allocation3], 1
    %6396 = vsyncpa %s6395, 1

</llo_original>
